<compile_context>
chip_gen: v5e
topology: v5e:2x2
jax: 0.10.0
libtpu: 0.0.40
codegen_flags: <defaults>
</compile_context>

<pallas_src>
import jax
import jax.numpy as jnp
from jax.experimental import pallas as pl
from jax.experimental.pallas import tpu as pltpu

H = 32        # hidden_size
L = 8         # max_length (attention span)
V_OUT = 16    # output_size (decoder vocab)


# ----------------------------- kernel ---------------------------------------

def attn_decoder_seq_kernel(
    tok_ref,                                  # (T,) int32, SMEM (scalar prefetch)
    h0_ref, enc_ref, emb_ref,                 # (1,H), (L,H), (V,H) embedding table
    w_attn_ref, b_attn_ref,                   # (2H,L), (1,L)
    w_comb_ref, b_comb_ref,                   # (2H,H), (1,H)
    w_ih_ref, w_hh_ref, b_ih_ref, b_hh_ref,   # (H,3H), (H,3H), (1,3H), (1,3H)
    w_out_ref, b_out_ref,                     # (H,V), (1,V)
    logp_ref, h_out_ref, attn_out_ref,        # (T,V), (1,H), (T,L)
):
    T = tok_ref.shape[0]
    V = emb_ref.shape[0]

    # Hoisted once (JAX does not CSE broadcast/iota inside loops).
    vocab_iota = jax.lax.broadcasted_iota(jnp.int32, (1, V), 1)
    emb_tab = emb_ref[...]                     # (V, H)
    enc = enc_ref[...]                         # (L, H)

    h = h0_ref[...]                            # (1, H) running hidden state

    for t in range(T):                         # static unroll over decode steps
        tok = tok_ref[t]                       # SMEM scalar read

        # embedding lookup as one-hot @ table (vectorized gather on the MXU)
        onehot = (vocab_iota == tok).astype(jnp.float32)            # (1, V)
        emb = jnp.dot(onehot, emb_tab,
                      preferred_element_type=jnp.float32)           # (1, H)
        # dropout = identity (eval mode)

        # attn_weights = softmax(attn(cat(embedded, hidden)))  -- one MXU push
        eh = jnp.concatenate([emb, h], axis=1)                      # (1, 2H)
        scores = jnp.dot(eh, w_attn_ref[...],
                         preferred_element_type=jnp.float32) + b_attn_ref[...]
        scores = scores - jnp.max(scores, axis=-1, keepdims=True)
        es = jnp.exp(scores)
        attn_w = es / jnp.sum(es, axis=-1, keepdims=True)           # (1, L)
        attn_out_ref[pl.ds(t, 1), :] = attn_w

        # attn_applied = bmm(attn_weights, encoder_outputs)
        ctx = jnp.dot(attn_w, enc,
                      preferred_element_type=jnp.float32)           # (1, H)

        # output = relu(attn_combine(cat(embedded, attn_applied))) -- one push
        ec = jnp.concatenate([emb, ctx], axis=1)                    # (1, 2H)
        x = jnp.maximum(
            jnp.dot(ec, w_comb_ref[...],
                    preferred_element_type=jnp.float32) + b_comb_ref[...], 0.0)

        # GRU cell, gate order [r, z, n] (torch.nn.GRU)
        gi = jnp.dot(x, w_ih_ref[...],
                     preferred_element_type=jnp.float32) + b_ih_ref[...]
        gh = jnp.dot(h, w_hh_ref[...],
                     preferred_element_type=jnp.float32) + b_hh_ref[...]
        r = jax.nn.sigmoid(gi[:, 0:H] + gh[:, 0:H])
        z = jax.nn.sigmoid(gi[:, H:2 * H] + gh[:, H:2 * H])
        n = jnp.tanh(gi[:, 2 * H:3 * H] + r * gh[:, 2 * H:3 * H])
        h = (1.0 - z) * n + z * h

        # log_softmax(out(gru_output))
        logits = jnp.dot(h, w_out_ref[...],
                         preferred_element_type=jnp.float32) + b_out_ref[...]
        m = jnp.max(logits, axis=-1, keepdims=True)
        lse = m + jnp.log(jnp.sum(jnp.exp(logits - m), axis=-1, keepdims=True))
        logp_ref[pl.ds(t, 1), :] = logits - lse

    h_out_ref[...] = h


# ----------------------------- wrapper ---------------------------------------

@jax.jit
def attn_decoder_forward(params, tokens, h0, encoder_outputs):
    """Runs the AttnDecoderRNN forward for each token in `tokens` (teacher-
    forcing style driving of the per-step module), fused into one kernel.
    Returns (log_probs (T,V), final_hidden (1,H), attn_weights (T,L))."""
    T = tokens.shape[0]

    def const(shape):
        return pl.BlockSpec(shape, lambda i, tok: (0, 0))

    grid_spec = pltpu.PrefetchScalarGridSpec(
        num_scalar_prefetch=1,
        grid=(1,),
        in_specs=[
            const((1, H)),                  # h0
            const((L, H)),                  # encoder_outputs
            const((V_OUT, H)),              # embedding table
            const((2 * H, L)), const((1, L)),          # attn
            const((2 * H, H)), const((1, H)),          # attn_combine
            const((H, 3 * H)), const((H, 3 * H)),      # gru w_ih, w_hh
            const((1, 3 * H)), const((1, 3 * H)),      # gru b_ih, b_hh
            const((H, V_OUT)), const((1, V_OUT)),      # out
        ],
        out_specs=(
            const((T, V_OUT)),
            const((1, H)),
            const((T, L)),
        ),
    )

    logp, h_final, attn = pl.pallas_call(
        attn_decoder_seq_kernel,
        out_shape=(
            jax.ShapeDtypeStruct((T, V_OUT), jnp.float32),
            jax.ShapeDtypeStruct((1, H), jnp.float32),
            jax.ShapeDtypeStruct((T, L), jnp.float32),
        ),
        grid_spec=grid_spec,
        compiler_params=pltpu.CompilerParams(
            dimension_semantics=("arbitrary",)),   # single sequential invocation
    )(tokens, h0, encoder_outputs, params["embedding"],
      params["attn_w"], params["attn_b"],
      params["comb_w"], params["comb_b"],
      params["gru_w_ih"], params["gru_w_hh"],
      params["gru_b_ih"], params["gru_b_hh"],
      params["out_w"], params["out_b"])

    return logp, h_final, attn


# ----------------------------- pure-JAX reference ----------------------------

def attn_decoder_forward_ref(params, tokens, h0, encoder_outputs):
    hp = jax.lax.Precision.HIGHEST
    h = h0
    logps, attns = [], []
    for t in range(tokens.shape[0]):
        emb = params["embedding"][tokens[t]][None, :]
        eh = jnp.concatenate([emb, h], axis=1)
        scores = jnp.dot(eh, params["attn_w"], precision=hp) + params["attn_b"]
        attn_w = jax.nn.softmax(scores, axis=-1)
        ctx = jnp.dot(attn_w, encoder_outputs, precision=hp)
        ec = jnp.concatenate([emb, ctx], axis=1)
        x = jax.nn.relu(jnp.dot(ec, params["comb_w"], precision=hp)
                        + params["comb_b"])
        gi = jnp.dot(x, params["gru_w_ih"], precision=hp) + params["gru_b_ih"]
        gh = jnp.dot(h, params["gru_w_hh"], precision=hp) + params["gru_b_hh"]
        r = jax.nn.sigmoid(gi[:, 0:H] + gh[:, 0:H])
        z = jax.nn.sigmoid(gi[:, H:2 * H] + gh[:, H:2 * H])
        n = jnp.tanh(gi[:, 2 * H:3 * H] + r * gh[:, 2 * H:3 * H])
        h = (1.0 - z) * n + z * h
        logits = jnp.dot(h, params["out_w"], precision=hp) + params["out_b"]
        logps.append(jax.nn.log_softmax(logits, axis=-1))
        attns.append(attn_w)
    return jnp.concatenate(logps, axis=0), h, jnp.concatenate(attns, axis=0)


# ----------------------------- parameters ------------------------------------

def init_params(key):
    ks = jax.random.split(key, 11)
    kh = 1.0 / float(H) ** 0.5
    k2h = 1.0 / float(2 * H) ** 0.5

    def u(k, shape, bound):
        return jax.random.uniform(k, shape, jnp.float32, -bound, bound)

    return {
        "embedding": jax.random.normal(ks[0], (V_OUT, H), jnp.float32),
        "attn_w": u(ks[1], (2 * H, L), k2h),
        "attn_b": u(ks[2], (1, L), k2h),
        "comb_w": u(ks[3], (2 * H, H), k2h),
        "comb_b": u(ks[4], (1, H), k2h),
        "gru_w_ih": u(ks[5], (H, 3 * H), kh),
        "gru_w_hh": u(ks[6], (H, 3 * H), kh),
        "gru_b_ih": u(ks[7], (1, 3 * H), kh),
        "gru_b_hh": u(ks[8], (1, 3 * H), kh),
        "out_w": u(ks[9], (H, V_OUT), kh),
        "out_b": u(ks[10], (1, V_OUT), kh),
    }


# ----------------------------- main -------------------------------------------

if __name__ == "__main__":
    key = jax.random.PRNGKey(0)
    kp, kt, ke = jax.random.split(key, 3)

    params = init_params(kp)

    T = 8                                          # decoder steps
    tokens = jax.random.randint(kt, (T,), 0, V_OUT, dtype=jnp.int32)
    h0 = jnp.zeros((1, H), jnp.float32)            # initHidden()
    encoder_outputs = 0.1 * jax.random.normal(ke, (L, H), jnp.float32)

    logp, h_final, attn = jax.block_until_ready(
        attn_decoder_forward(params, tokens, h0, encoder_outputs))

    # correctness vs pure-JAX reference
    logp_r, h_r, attn_r = attn_decoder_forward_ref(params, tokens, h0,
                                                   encoder_outputs)
    assert logp.shape == (T, V_OUT) and h_final.shape == (1, H)
    assert attn.shape == (T, L)
    assert bool(jnp.all(jnp.isfinite(logp)))
    assert bool(jnp.allclose(logp, logp_r, atol=1e-3, rtol=1e-3))
    assert bool(jnp.allclose(h_final, h_r, atol=1e-3, rtol=1e-3))
    assert bool(jnp.allclose(attn, attn_r, atol=1e-3, rtol=1e-3))

    print("KERNEL_OK")
</pallas_src>

<mosaic_0001>
module attributes {stable_mosaic.version = 11 : i64} {
  func.func @attn_decoder_seq_kernel(%arg0: i32, %arg1: memref<8xi32, #tpu.memory_space<smem>>, %arg2: memref<1x32xf32, #tpu.memory_space<vmem>>, %arg3: memref<8x32xf32, #tpu.memory_space<vmem>>, %arg4: memref<16x32xf32, #tpu.memory_space<vmem>>, %arg5: memref<64x8xf32, #tpu.memory_space<vmem>>, %arg6: memref<1x8xf32, #tpu.memory_space<vmem>>, %arg7: memref<64x32xf32, #tpu.memory_space<vmem>>, %arg8: memref<1x32xf32, #tpu.memory_space<vmem>>, %arg9: memref<32x96xf32, #tpu.memory_space<vmem>>, %arg10: memref<32x96xf32, #tpu.memory_space<vmem>>, %arg11: memref<1x96xf32, #tpu.memory_space<vmem>>, %arg12: memref<1x96xf32, #tpu.memory_space<vmem>>, %arg13: memref<32x16xf32, #tpu.memory_space<vmem>>, %arg14: memref<1x16xf32, #tpu.memory_space<vmem>>, %arg15: memref<8x16xf32, #tpu.memory_space<vmem>>, %arg16: memref<1x32xf32, #tpu.memory_space<vmem>>, %arg17: memref<8x8xf32, #tpu.memory_space<vmem>>) attributes {dimension_semantics = [#tpu.dimension_semantics<arbitrary>], iteration_bounds = array<i64: 1>, scalar_prefetch = 1 : i64, scratch_operands = 0 : i64, tpu.core_type = #tpu.core_type<tc>, window_params = [{pipeline_mode = #tpu.pipeline_mode<synchronous>, transform_indices = @transform_0, window_bounds = array<i64: 1, 32>}, {pipeline_mode = #tpu.pipeline_mode<synchronous>, transform_indices = @transform_1, window_bounds = array<i64: 8, 32>}, {pipeline_mode = #tpu.pipeline_mode<synchronous>, transform_indices = @transform_2, window_bounds = array<i64: 16, 32>}, {pipeline_mode = #tpu.pipeline_mode<synchronous>, transform_indices = @transform_3, window_bounds = array<i64: 64, 8>}, {pipeline_mode = #tpu.pipeline_mode<synchronous>, transform_indices = @transform_4, window_bounds = array<i64: 1, 8>}, {pipeline_mode = #tpu.pipeline_mode<synchronous>, transform_indices = @transform_5, window_bounds = array<i64: 64, 32>}, {pipeline_mode = #tpu.pipeline_mode<synchronous>, transform_indices = @transform_6, window_bounds = array<i64: 1, 32>}, {pipeline_mode = #tpu.pipeline_mode<synchronous>, transform_indices = @transform_7, window_bounds = array<i64: 32, 96>}, {pipeline_mode = #tpu.pipeline_mode<synchronous>, transform_indices = @transform_8, window_bounds = array<i64: 32, 96>}, {pipeline_mode = #tpu.pipeline_mode<synchronous>, transform_indices = @transform_9, window_bounds = array<i64: 1, 96>}, {pipeline_mode = #tpu.pipeline_mode<synchronous>, transform_indices = @transform_10, window_bounds = array<i64: 1, 96>}, {pipeline_mode = #tpu.pipeline_mode<synchronous>, transform_indices = @transform_11, window_bounds = array<i64: 32, 16>}, {pipeline_mode = #tpu.pipeline_mode<synchronous>, transform_indices = @transform_12, window_bounds = array<i64: 1, 16>}, {pipeline_mode = #tpu.pipeline_mode<synchronous>, transform_indices = @transform_13, window_bounds = array<i64: 8, 16>}, {pipeline_mode = #tpu.pipeline_mode<synchronous>, transform_indices = @transform_14, window_bounds = array<i64: 1, 32>}, {pipeline_mode = #tpu.pipeline_mode<synchronous>, transform_indices = @transform_15, window_bounds = array<i64: 8, 8>}]} {
    %0 = tpu.iota {dimensions = array<i32: 1>} : vector<1x16xi32>
    %c0 = arith.constant 0 : index
    %c0_0 = arith.constant 0 : index
    %1 = vector.load %arg4[%c0, %c0_0] : memref<16x32xf32, #tpu.memory_space<vmem>>, vector<16x32xf32>
    %c0_1 = arith.constant 0 : index
    %c0_2 = arith.constant 0 : index
    %2 = vector.load %arg3[%c0_1, %c0_2] : memref<8x32xf32, #tpu.memory_space<vmem>>, vector<8x32xf32>
    %c0_3 = arith.constant 0 : index
    %c0_4 = arith.constant 0 : index
    %3 = vector.load %arg2[%c0_3, %c0_4] : memref<1x32xf32, #tpu.memory_space<vmem>>, vector<1x32xf32>
    %c0_5 = arith.constant 0 : index
    %4 = memref.load %arg1[%c0_5] : memref<8xi32, #tpu.memory_space<smem>>
    %5 = vector.broadcast %4 : i32 to vector<1x16xi32>
    %6 = arith.cmpi eq, %0, %5 : vector<1x16xi32>
    %7 = arith.extui %6 : vector<1x16xi1> to vector<1x16xi32>
    %8 = arith.sitofp %7 : vector<1x16xi32> to vector<1x16xf32>
    %cst = arith.constant dense<0.000000e+00> : vector<1x32xf32>
    %9 = tpu.matmul %8, %1, %cst {dimension_numbers = #tpu.dot_dimension_numbers<[1], [0], [0], [1], [0, 0, 1, 1], [], []>} : vector<1x16xf32>, vector<16x32xf32>, vector<1x32xf32> -> vector<1x32xf32>
    %10 = tpu.concatenate %9, %3 in 1 : vector<1x32xf32>, vector<1x32xf32> -> vector<1x64xf32>
    %c0_6 = arith.constant 0 : index
    %c0_7 = arith.constant 0 : index
    %11 = vector.load %arg5[%c0_6, %c0_7] : memref<64x8xf32, #tpu.memory_space<vmem>>, vector<64x8xf32>
    %cst_8 = arith.constant dense<0.000000e+00> : vector<1x8xf32>
    %12 = tpu.matmul %10, %11, %cst_8 {dimension_numbers = #tpu.dot_dimension_numbers<[1], [0], [0], [1], [0, 0, 1, 1], [], []>} : vector<1x64xf32>, vector<64x8xf32>, vector<1x8xf32> -> vector<1x8xf32>
    %c0_9 = arith.constant 0 : index
    %c0_10 = arith.constant 0 : index
    %13 = vector.load %arg6[%c0_9, %c0_10] : memref<1x8xf32, #tpu.memory_space<vmem>>, vector<1x8xf32>
    %14 = arith.addf %12, %13 : vector<1x8xf32>
    %cst_11 = arith.constant dense<0xFF800000> : vector<1xf32>
    %15 = vector.multi_reduction <maximumf>, %14, %cst_11 [1] : vector<1x8xf32> to vector<1xf32>
    %16 = vector.shape_cast %15 : vector<1xf32> to vector<1x1xf32>
    %17 = vector.broadcast %16 : vector<1x1xf32> to vector<1x8xf32>
    %18 = arith.subf %14, %17 : vector<1x8xf32>
    %19 = math.exp %18 : vector<1x8xf32>
    %cst_12 = arith.constant dense<0.000000e+00> : vector<1xf32>
    %20 = vector.multi_reduction <add>, %19, %cst_12 [1] : vector<1x8xf32> to vector<1xf32>
    %21 = vector.shape_cast %20 : vector<1xf32> to vector<1x1xf32>
    %22 = vector.broadcast %21 : vector<1x1xf32> to vector<1x8xf32>
    %23 = arith.divf %19, %22 : vector<1x8xf32>
    %c0_13 = arith.constant 0 : index
    %c0_14 = arith.constant 0 : index
    %24 = vector.load %arg17[%c0_13, %c0_14] : memref<8x8xf32, #tpu.memory_space<vmem>>, vector<1x8xf32>
    tpu.vector_store %arg17[%c0_13, %c0_14], %23 {strides = array<i32>} : memref<8x8xf32, #tpu.memory_space<vmem>>, vector<1x8xf32>,
    %cst_15 = arith.constant dense<0.000000e+00> : vector<1x32xf32>
    %25 = tpu.matmul %23, %2, %cst_15 {dimension_numbers = #tpu.dot_dimension_numbers<[1], [0], [0], [1], [0, 0, 1, 1], [], []>} : vector<1x8xf32>, vector<8x32xf32>, vector<1x32xf32> -> vector<1x32xf32>
    %26 = tpu.concatenate %9, %25 in 1 : vector<1x32xf32>, vector<1x32xf32> -> vector<1x64xf32>
    %c0_16 = arith.constant 0 : index
    %c0_17 = arith.constant 0 : index
    %27 = vector.load %arg7[%c0_16, %c0_17] : memref<64x32xf32, #tpu.memory_space<vmem>>, vector<64x32xf32>
    %cst_18 = arith.constant dense<0.000000e+00> : vector<1x32xf32>
    %28 = tpu.matmul %26, %27, %cst_18 {dimension_numbers = #tpu.dot_dimension_numbers<[1], [0], [0], [1], [0, 0, 1, 1], [], []>} : vector<1x64xf32>, vector<64x32xf32>, vector<1x32xf32> -> vector<1x32xf32>
    %c0_19 = arith.constant 0 : index
    %c0_20 = arith.constant 0 : index
    %29 = vector.load %arg8[%c0_19, %c0_20] : memref<1x32xf32, #tpu.memory_space<vmem>>, vector<1x32xf32>
    %30 = arith.addf %28, %29 : vector<1x32xf32>
    %cst_21 = arith.constant 0.000000e+00 : f32
    %31 = vector.broadcast %cst_21 : f32 to vector<1x32xf32>
    %32 = arith.maximumf %30, %31 : vector<1x32xf32>
    %c0_22 = arith.constant 0 : index
    %c0_23 = arith.constant 0 : index
    %33 = vector.load %arg9[%c0_22, %c0_23] : memref<32x96xf32, #tpu.memory_space<vmem>>, vector<32x96xf32>
    %cst_24 = arith.constant dense<0.000000e+00> : vector<1x96xf32>
    %34 = tpu.matmul %32, %33, %cst_24 {dimension_numbers = #tpu.dot_dimension_numbers<[1], [0], [0], [1], [0, 0, 1, 1], [], []>} : vector<1x32xf32>, vector<32x96xf32>, vector<1x96xf32> -> vector<1x96xf32>
    %c0_25 = arith.constant 0 : index
    %c0_26 = arith.constant 0 : index
    %35 = vector.load %arg11[%c0_25, %c0_26] : memref<1x96xf32, #tpu.memory_space<vmem>>, vector<1x96xf32>
    %36 = arith.addf %34, %35 : vector<1x96xf32>
    %c0_27 = arith.constant 0 : index
    %c0_28 = arith.constant 0 : index
    %37 = vector.load %arg10[%c0_27, %c0_28] : memref<32x96xf32, #tpu.memory_space<vmem>>, vector<32x96xf32>
    %cst_29 = arith.constant dense<0.000000e+00> : vector<1x96xf32>
    %38 = tpu.matmul %3, %37, %cst_29 {dimension_numbers = #tpu.dot_dimension_numbers<[1], [0], [0], [1], [0, 0, 1, 1], [], []>} : vector<1x32xf32>, vector<32x96xf32>, vector<1x96xf32> -> vector<1x96xf32>
    %c0_30 = arith.constant 0 : index
    %c0_31 = arith.constant 0 : index
    %39 = vector.load %arg12[%c0_30, %c0_31] : memref<1x96xf32, #tpu.memory_space<vmem>>, vector<1x96xf32>
    %40 = arith.addf %38, %39 : vector<1x96xf32>
    %41 = vector.extract_strided_slice %36 {offsets = [0, 0], sizes = [1, 32], strides = [1, 1]} : vector<1x96xf32> to vector<1x32xf32>
    %42 = vector.extract_strided_slice %40 {offsets = [0, 0], sizes = [1, 32], strides = [1, 1]} : vector<1x96xf32> to vector<1x32xf32>
    %43 = arith.addf %41, %42 : vector<1x32xf32>
    %44 = arith.negf %43 : vector<1x32xf32>
    %45 = math.exp %44 : vector<1x32xf32>
    %cst_32 = arith.constant 1.000000e+00 : f32
    %46 = vector.broadcast %cst_32 : f32 to vector<1x32xf32>
    %47 = arith.addf %46, %45 : vector<1x32xf32>
    %48 = arith.divf %46, %47 : vector<1x32xf32>
    %49 = vector.extract_strided_slice %36 {offsets = [0, 32], sizes = [1, 32], strides = [1, 1]} : vector<1x96xf32> to vector<1x32xf32>
    %50 = vector.extract_strided_slice %40 {offsets = [0, 32], sizes = [1, 32], strides = [1, 1]} : vector<1x96xf32> to vector<1x32xf32>
    %51 = arith.addf %49, %50 : vector<1x32xf32>
    %52 = arith.negf %51 : vector<1x32xf32>
    %53 = math.exp %52 : vector<1x32xf32>
    %cst_33 = arith.constant 1.000000e+00 : f32
    %54 = vector.broadcast %cst_33 : f32 to vector<1x32xf32>
    %55 = arith.addf %54, %53 : vector<1x32xf32>
    %56 = arith.divf %54, %55 : vector<1x32xf32>
    %57 = vector.extract_strided_slice %36 {offsets = [0, 64], sizes = [1, 32], strides = [1, 1]} : vector<1x96xf32> to vector<1x32xf32>
    %58 = vector.extract_strided_slice %40 {offsets = [0, 64], sizes = [1, 32], strides = [1, 1]} : vector<1x96xf32> to vector<1x32xf32>
    %59 = arith.mulf %48, %58 : vector<1x32xf32>
    %60 = arith.addf %57, %59 : vector<1x32xf32>
    %61 = math.tanh %60 : vector<1x32xf32>
    %cst_34 = arith.constant 1.000000e+00 : f32
    %62 = vector.broadcast %cst_34 : f32 to vector<1x32xf32>
    %63 = arith.subf %62, %56 : vector<1x32xf32>
    %64 = arith.mulf %63, %61 : vector<1x32xf32>
    %65 = arith.mulf %56, %3 : vector<1x32xf32>
    %66 = arith.addf %64, %65 : vector<1x32xf32>
    %c0_35 = arith.constant 0 : index
    %c0_36 = arith.constant 0 : index
    %67 = vector.load %arg13[%c0_35, %c0_36] : memref<32x16xf32, #tpu.memory_space<vmem>>, vector<32x16xf32>
    %cst_37 = arith.constant dense<0.000000e+00> : vector<1x16xf32>
    %68 = tpu.matmul %66, %67, %cst_37 {dimension_numbers = #tpu.dot_dimension_numbers<[1], [0], [0], [1], [0, 0, 1, 1], [], []>} : vector<1x32xf32>, vector<32x16xf32>, vector<1x16xf32> -> vector<1x16xf32>
    %c0_38 = arith.constant 0 : index
    %c0_39 = arith.constant 0 : index
    %69 = vector.load %arg14[%c0_38, %c0_39] : memref<1x16xf32, #tpu.memory_space<vmem>>, vector<1x16xf32>
    %70 = arith.addf %68, %69 : vector<1x16xf32>
    %cst_40 = arith.constant dense<0xFF800000> : vector<1xf32>
    %71 = vector.multi_reduction <maximumf>, %70, %cst_40 [1] : vector<1x16xf32> to vector<1xf32>
    %72 = vector.shape_cast %71 : vector<1xf32> to vector<1x1xf32>
    %73 = vector.broadcast %72 : vector<1x1xf32> to vector<1x16xf32>
    %74 = arith.subf %70, %73 : vector<1x16xf32>
    %75 = math.exp %74 : vector<1x16xf32>
    %cst_41 = arith.constant dense<0.000000e+00> : vector<1xf32>
    %76 = vector.multi_reduction <add>, %75, %cst_41 [1] : vector<1x16xf32> to vector<1xf32>
    %77 = vector.shape_cast %76 : vector<1xf32> to vector<1x1xf32>
    %78 = math.log %77 : vector<1x1xf32>
    %79 = arith.addf %72, %78 : vector<1x1xf32>
    %80 = vector.broadcast %79 : vector<1x1xf32> to vector<1x16xf32>
    %81 = arith.subf %70, %80 : vector<1x16xf32>
    %c0_42 = arith.constant 0 : index
    %c0_43 = arith.constant 0 : index
    %82 = vector.load %arg15[%c0_42, %c0_43] : memref<8x16xf32, #tpu.memory_space<vmem>>, vector<1x16xf32>
    tpu.vector_store %arg15[%c0_42, %c0_43], %81 {strides = array<i32>} : memref<8x16xf32, #tpu.memory_space<vmem>>, vector<1x16xf32>,
    %c1 = arith.constant 1 : index
    %83 = memref.load %arg1[%c1] : memref<8xi32, #tpu.memory_space<smem>>
    %84 = vector.broadcast %83 : i32 to vector<1x16xi32>
    %85 = arith.cmpi eq, %0, %84 : vector<1x16xi32>
    %86 = arith.extui %85 : vector<1x16xi1> to vector<1x16xi32>
    %87 = arith.sitofp %86 : vector<1x16xi32> to vector<1x16xf32>
    %cst_44 = arith.constant dense<0.000000e+00> : vector<1x32xf32>
    %88 = tpu.matmul %87, %1, %cst_44 {dimension_numbers = #tpu.dot_dimension_numbers<[1], [0], [0], [1], [0, 0, 1, 1], [], []>} : vector<1x16xf32>, vector<16x32xf32>, vector<1x32xf32> -> vector<1x32xf32>
    %89 = tpu.concatenate %88, %66 in 1 : vector<1x32xf32>, vector<1x32xf32> -> vector<1x64xf32>
    %c0_45 = arith.constant 0 : index
    %c0_46 = arith.constant 0 : index
    %90 = vector.load %arg5[%c0_45, %c0_46] : memref<64x8xf32, #tpu.memory_space<vmem>>, vector<64x8xf32>
    %cst_47 = arith.constant dense<0.000000e+00> : vector<1x8xf32>
    %91 = tpu.matmul %89, %90, %cst_47 {dimension_numbers = #tpu.dot_dimension_numbers<[1], [0], [0], [1], [0, 0, 1, 1], [], []>} : vector<1x64xf32>, vector<64x8xf32>, vector<1x8xf32> -> vector<1x8xf32>
    %c0_48 = arith.constant 0 : index
    %c0_49 = arith.constant 0 : index
    %92 = vector.load %arg6[%c0_48, %c0_49] : memref<1x8xf32, #tpu.memory_space<vmem>>, vector<1x8xf32>
    %93 = arith.addf %91, %92 : vector<1x8xf32>
    %cst_50 = arith.constant dense<0xFF800000> : vector<1xf32>
    %94 = vector.multi_reduction <maximumf>, %93, %cst_50 [1] : vector<1x8xf32> to vector<1xf32>
    %95 = vector.shape_cast %94 : vector<1xf32> to vector<1x1xf32>
    %96 = vector.broadcast %95 : vector<1x1xf32> to vector<1x8xf32>
    %97 = arith.subf %93, %96 : vector<1x8xf32>
    %98 = math.exp %97 : vector<1x8xf32>
    %cst_51 = arith.constant dense<0.000000e+00> : vector<1xf32>
    %99 = vector.multi_reduction <add>, %98, %cst_51 [1] : vector<1x8xf32> to vector<1xf32>
    %100 = vector.shape_cast %99 : vector<1xf32> to vector<1x1xf32>
    %101 = vector.broadcast %100 : vector<1x1xf32> to vector<1x8xf32>
    %102 = arith.divf %98, %101 : vector<1x8xf32>
    %c1_52 = arith.constant 1 : index
    %c0_53 = arith.constant 0 : index
    %103 = vector.load %arg17[%c1_52, %c0_53] : memref<8x8xf32, #tpu.memory_space<vmem>>, vector<1x8xf32>
    tpu.vector_store %arg17[%c1_52, %c0_53], %102 {strides = array<i32>} : memref<8x8xf32, #tpu.memory_space<vmem>>, vector<1x8xf32>,
    %cst_54 = arith.constant dense<0.000000e+00> : vector<1x32xf32>
    %104 = tpu.matmul %102, %2, %cst_54 {dimension_numbers = #tpu.dot_dimension_numbers<[1], [0], [0], [1], [0, 0, 1, 1], [], []>} : vector<1x8xf32>, vector<8x32xf32>, vector<1x32xf32> -> vector<1x32xf32>
    %105 = tpu.concatenate %88, %104 in 1 : vector<1x32xf32>, vector<1x32xf32> -> vector<1x64xf32>
    %c0_55 = arith.constant 0 : index
    %c0_56 = arith.constant 0 : index
    %106 = vector.load %arg7[%c0_55, %c0_56] : memref<64x32xf32, #tpu.memory_space<vmem>>, vector<64x32xf32>
    %cst_57 = arith.constant dense<0.000000e+00> : vector<1x32xf32>
    %107 = tpu.matmul %105, %106, %cst_57 {dimension_numbers = #tpu.dot_dimension_numbers<[1], [0], [0], [1], [0, 0, 1, 1], [], []>} : vector<1x64xf32>, vector<64x32xf32>, vector<1x32xf32> -> vector<1x32xf32>
    %c0_58 = arith.constant 0 : index
    %c0_59 = arith.constant 0 : index
    %108 = vector.load %arg8[%c0_58, %c0_59] : memref<1x32xf32, #tpu.memory_space<vmem>>, vector<1x32xf32>
    %109 = arith.addf %107, %108 : vector<1x32xf32>
    %cst_60 = arith.constant 0.000000e+00 : f32
    %110 = vector.broadcast %cst_60 : f32 to vector<1x32xf32>
    %111 = arith.maximumf %109, %110 : vector<1x32xf32>
    %c0_61 = arith.constant 0 : index
    %c0_62 = arith.constant 0 : index
    %112 = vector.load %arg9[%c0_61, %c0_62] : memref<32x96xf32, #tpu.memory_space<vmem>>, vector<32x96xf32>
    %cst_63 = arith.constant dense<0.000000e+00> : vector<1x96xf32>
    %113 = tpu.matmul %111, %112, %cst_63 {dimension_numbers = #tpu.dot_dimension_numbers<[1], [0], [0], [1], [0, 0, 1, 1], [], []>} : vector<1x32xf32>, vector<32x96xf32>, vector<1x96xf32> -> vector<1x96xf32>
    %c0_64 = arith.constant 0 : index
    %c0_65 = arith.constant 0 : index
    %114 = vector.load %arg11[%c0_64, %c0_65] : memref<1x96xf32, #tpu.memory_space<vmem>>, vector<1x96xf32>
    %115 = arith.addf %113, %114 : vector<1x96xf32>
    %c0_66 = arith.constant 0 : index
    %c0_67 = arith.constant 0 : index
    %116 = vector.load %arg10[%c0_66, %c0_67] : memref<32x96xf32, #tpu.memory_space<vmem>>, vector<32x96xf32>
    %cst_68 = arith.constant dense<0.000000e+00> : vector<1x96xf32>
    %117 = tpu.matmul %66, %116, %cst_68 {dimension_numbers = #tpu.dot_dimension_numbers<[1], [0], [0], [1], [0, 0, 1, 1], [], []>} : vector<1x32xf32>, vector<32x96xf32>, vector<1x96xf32> -> vector<1x96xf32>
    %c0_69 = arith.constant 0 : index
    %c0_70 = arith.constant 0 : index
    %118 = vector.load %arg12[%c0_69, %c0_70] : memref<1x96xf32, #tpu.memory_space<vmem>>, vector<1x96xf32>
    %119 = arith.addf %117, %118 : vector<1x96xf32>
    %120 = vector.extract_strided_slice %115 {offsets = [0, 0], sizes = [1, 32], strides = [1, 1]} : vector<1x96xf32> to vector<1x32xf32>
    %121 = vector.extract_strided_slice %119 {offsets = [0, 0], sizes = [1, 32], strides = [1, 1]} : vector<1x96xf32> to vector<1x32xf32>
    %122 = arith.addf %120, %121 : vector<1x32xf32>
    %123 = arith.negf %122 : vector<1x32xf32>
    %124 = math.exp %123 : vector<1x32xf32>
    %cst_71 = arith.constant 1.000000e+00 : f32
    %125 = vector.broadcast %cst_71 : f32 to vector<1x32xf32>
    %126 = arith.addf %125, %124 : vector<1x32xf32>
    %127 = arith.divf %125, %126 : vector<1x32xf32>
    %128 = vector.extract_strided_slice %115 {offsets = [0, 32], sizes = [1, 32], strides = [1, 1]} : vector<1x96xf32> to vector<1x32xf32>
    %129 = vector.extract_strided_slice %119 {offsets = [0, 32], sizes = [1, 32], strides = [1, 1]} : vector<1x96xf32> to vector<1x32xf32>
    %130 = arith.addf %128, %129 : vector<1x32xf32>
    %131 = arith.negf %130 : vector<1x32xf32>
    %132 = math.exp %131 : vector<1x32xf32>
    %cst_72 = arith.constant 1.000000e+00 : f32
    %133 = vector.broadcast %cst_72 : f32 to vector<1x32xf32>
    %134 = arith.addf %133, %132 : vector<1x32xf32>
    %135 = arith.divf %133, %134 : vector<1x32xf32>
    %136 = vector.extract_strided_slice %115 {offsets = [0, 64], sizes = [1, 32], strides = [1, 1]} : vector<1x96xf32> to vector<1x32xf32>
    %137 = vector.extract_strided_slice %119 {offsets = [0, 64], sizes = [1, 32], strides = [1, 1]} : vector<1x96xf32> to vector<1x32xf32>
    %138 = arith.mulf %127, %137 : vector<1x32xf32>
    %139 = arith.addf %136, %138 : vector<1x32xf32>
    %140 = math.tanh %139 : vector<1x32xf32>
    %cst_73 = arith.constant 1.000000e+00 : f32
    %141 = vector.broadcast %cst_73 : f32 to vector<1x32xf32>
    %142 = arith.subf %141, %135 : vector<1x32xf32>
    %143 = arith.mulf %142, %140 : vector<1x32xf32>
    %144 = arith.mulf %135, %66 : vector<1x32xf32>
    %145 = arith.addf %143, %144 : vector<1x32xf32>
    %c0_74 = arith.constant 0 : index
    %c0_75 = arith.constant 0 : index
    %146 = vector.load %arg13[%c0_74, %c0_75] : memref<32x16xf32, #tpu.memory_space<vmem>>, vector<32x16xf32>
    %cst_76 = arith.constant dense<0.000000e+00> : vector<1x16xf32>
    %147 = tpu.matmul %145, %146, %cst_76 {dimension_numbers = #tpu.dot_dimension_numbers<[1], [0], [0], [1], [0, 0, 1, 1], [], []>} : vector<1x32xf32>, vector<32x16xf32>, vector<1x16xf32> -> vector<1x16xf32>
    %c0_77 = arith.constant 0 : index
    %c0_78 = arith.constant 0 : index
    %148 = vector.load %arg14[%c0_77, %c0_78] : memref<1x16xf32, #tpu.memory_space<vmem>>, vector<1x16xf32>
    %149 = arith.addf %147, %148 : vector<1x16xf32>
    %cst_79 = arith.constant dense<0xFF800000> : vector<1xf32>
    %150 = vector.multi_reduction <maximumf>, %149, %cst_79 [1] : vector<1x16xf32> to vector<1xf32>
    %151 = vector.shape_cast %150 : vector<1xf32> to vector<1x1xf32>
    %152 = vector.broadcast %151 : vector<1x1xf32> to vector<1x16xf32>
    %153 = arith.subf %149, %152 : vector<1x16xf32>
    %154 = math.exp %153 : vector<1x16xf32>
    %cst_80 = arith.constant dense<0.000000e+00> : vector<1xf32>
    %155 = vector.multi_reduction <add>, %154, %cst_80 [1] : vector<1x16xf32> to vector<1xf32>
    %156 = vector.shape_cast %155 : vector<1xf32> to vector<1x1xf32>
    %157 = math.log %156 : vector<1x1xf32>
    %158 = arith.addf %151, %157 : vector<1x1xf32>
    %159 = vector.broadcast %158 : vector<1x1xf32> to vector<1x16xf32>
    %160 = arith.subf %149, %159 : vector<1x16xf32>
    %c1_81 = arith.constant 1 : index
    %c0_82 = arith.constant 0 : index
    %161 = vector.load %arg15[%c1_81, %c0_82] : memref<8x16xf32, #tpu.memory_space<vmem>>, vector<1x16xf32>
    tpu.vector_store %arg15[%c1_81, %c0_82], %160 {strides = array<i32>} : memref<8x16xf32, #tpu.memory_space<vmem>>, vector<1x16xf32>,
    %c2 = arith.constant 2 : index
    %162 = memref.load %arg1[%c2] : memref<8xi32, #tpu.memory_space<smem>>
    %163 = vector.broadcast %162 : i32 to vector<1x16xi32>
    %164 = arith.cmpi eq, %0, %163 : vector<1x16xi32>
    %165 = arith.extui %164 : vector<1x16xi1> to vector<1x16xi32>
    %166 = arith.sitofp %165 : vector<1x16xi32> to vector<1x16xf32>
    %cst_83 = arith.constant dense<0.000000e+00> : vector<1x32xf32>
    %167 = tpu.matmul %166, %1, %cst_83 {dimension_numbers = #tpu.dot_dimension_numbers<[1], [0], [0], [1], [0, 0, 1, 1], [], []>} : vector<1x16xf32>, vector<16x32xf32>, vector<1x32xf32> -> vector<1x32xf32>
    %168 = tpu.concatenate %167, %145 in 1 : vector<1x32xf32>, vector<1x32xf32> -> vector<1x64xf32>
    %c0_84 = arith.constant 0 : index
    %c0_85 = arith.constant 0 : index
    %169 = vector.load %arg5[%c0_84, %c0_85] : memref<64x8xf32, #tpu.memory_space<vmem>>, vector<64x8xf32>
    %cst_86 = arith.constant dense<0.000000e+00> : vector<1x8xf32>
    %170 = tpu.matmul %168, %169, %cst_86 {dimension_numbers = #tpu.dot_dimension_numbers<[1], [0], [0], [1], [0, 0, 1, 1], [], []>} : vector<1x64xf32>, vector<64x8xf32>, vector<1x8xf32> -> vector<1x8xf32>
    %c0_87 = arith.constant 0 : index
    %c0_88 = arith.constant 0 : index
    %171 = vector.load %arg6[%c0_87, %c0_88] : memref<1x8xf32, #tpu.memory_space<vmem>>, vector<1x8xf32>
    %172 = arith.addf %170, %171 : vector<1x8xf32>
    %cst_89 = arith.constant dense<0xFF800000> : vector<1xf32>
    %173 = vector.multi_reduction <maximumf>, %172, %cst_89 [1] : vector<1x8xf32> to vector<1xf32>
    %174 = vector.shape_cast %173 : vector<1xf32> to vector<1x1xf32>
    %175 = vector.broadcast %174 : vector<1x1xf32> to vector<1x8xf32>
    %176 = arith.subf %172, %175 : vector<1x8xf32>
    %177 = math.exp %176 : vector<1x8xf32>
    %cst_90 = arith.constant dense<0.000000e+00> : vector<1xf32>
    %178 = vector.multi_reduction <add>, %177, %cst_90 [1] : vector<1x8xf32> to vector<1xf32>
    %179 = vector.shape_cast %178 : vector<1xf32> to vector<1x1xf32>
    %180 = vector.broadcast %179 : vector<1x1xf32> to vector<1x8xf32>
    %181 = arith.divf %177, %180 : vector<1x8xf32>
    %c2_91 = arith.constant 2 : index
    %c0_92 = arith.constant 0 : index
    %182 = vector.load %arg17[%c2_91, %c0_92] : memref<8x8xf32, #tpu.memory_space<vmem>>, vector<1x8xf32>
    tpu.vector_store %arg17[%c2_91, %c0_92], %181 {strides = array<i32>} : memref<8x8xf32, #tpu.memory_space<vmem>>, vector<1x8xf32>,
    %cst_93 = arith.constant dense<0.000000e+00> : vector<1x32xf32>
    %183 = tpu.matmul %181, %2, %cst_93 {dimension_numbers = #tpu.dot_dimension_numbers<[1], [0], [0], [1], [0, 0, 1, 1], [], []>} : vector<1x8xf32>, vector<8x32xf32>, vector<1x32xf32> -> vector<1x32xf32>
    %184 = tpu.concatenate %167, %183 in 1 : vector<1x32xf32>, vector<1x32xf32> -> vector<1x64xf32>
    %c0_94 = arith.constant 0 : index
    %c0_95 = arith.constant 0 : index
    %185 = vector.load %arg7[%c0_94, %c0_95] : memref<64x32xf32, #tpu.memory_space<vmem>>, vector<64x32xf32>
    %cst_96 = arith.constant dense<0.000000e+00> : vector<1x32xf32>
    %186 = tpu.matmul %184, %185, %cst_96 {dimension_numbers = #tpu.dot_dimension_numbers<[1], [0], [0], [1], [0, 0, 1, 1], [], []>} : vector<1x64xf32>, vector<64x32xf32>, vector<1x32xf32> -> vector<1x32xf32>
    %c0_97 = arith.constant 0 : index
    %c0_98 = arith.constant 0 : index
    %187 = vector.load %arg8[%c0_97, %c0_98] : memref<1x32xf32, #tpu.memory_space<vmem>>, vector<1x32xf32>
    %188 = arith.addf %186, %187 : vector<1x32xf32>
    %cst_99 = arith.constant 0.000000e+00 : f32
    %189 = vector.broadcast %cst_99 : f32 to vector<1x32xf32>
    %190 = arith.maximumf %188, %189 : vector<1x32xf32>
    %c0_100 = arith.constant 0 : index
    %c0_101 = arith.constant 0 : index
    %191 = vector.load %arg9[%c0_100, %c0_101] : memref<32x96xf32, #tpu.memory_space<vmem>>, vector<32x96xf32>
    %cst_102 = arith.constant dense<0.000000e+00> : vector<1x96xf32>
    %192 = tpu.matmul %190, %191, %cst_102 {dimension_numbers = #tpu.dot_dimension_numbers<[1], [0], [0], [1], [0, 0, 1, 1], [], []>} : vector<1x32xf32>, vector<32x96xf32>, vector<1x96xf32> -> vector<1x96xf32>
    %c0_103 = arith.constant 0 : index
    %c0_104 = arith.constant 0 : index
    %193 = vector.load %arg11[%c0_103, %c0_104] : memref<1x96xf32, #tpu.memory_space<vmem>>, vector<1x96xf32>
    %194 = arith.addf %192, %193 : vector<1x96xf32>
    %c0_105 = arith.constant 0 : index
    %c0_106 = arith.constant 0 : index
    %195 = vector.load %arg10[%c0_105, %c0_106] : memref<32x96xf32, #tpu.memory_space<vmem>>, vector<32x96xf32>
    %cst_107 = arith.constant dense<0.000000e+00> : vector<1x96xf32>
    %196 = tpu.matmul %145, %195, %cst_107 {dimension_numbers = #tpu.dot_dimension_numbers<[1], [0], [0], [1], [0, 0, 1, 1], [], []>} : vector<1x32xf32>, vector<32x96xf32>, vector<1x96xf32> -> vector<1x96xf32>
    %c0_108 = arith.constant 0 : index
    %c0_109 = arith.constant 0 : index
    %197 = vector.load %arg12[%c0_108, %c0_109] : memref<1x96xf32, #tpu.memory_space<vmem>>, vector<1x96xf32>
    %198 = arith.addf %196, %197 : vector<1x96xf32>
    %199 = vector.extract_strided_slice %194 {offsets = [0, 0], sizes = [1, 32], strides = [1, 1]} : vector<1x96xf32> to vector<1x32xf32>
    %200 = vector.extract_strided_slice %198 {offsets = [0, 0], sizes = [1, 32], strides = [1, 1]} : vector<1x96xf32> to vector<1x32xf32>
    %201 = arith.addf %199, %200 : vector<1x32xf32>
    %202 = arith.negf %201 : vector<1x32xf32>
    %203 = math.exp %202 : vector<1x32xf32>
    %cst_110 = arith.constant 1.000000e+00 : f32
    %204 = vector.broadcast %cst_110 : f32 to vector<1x32xf32>
    %205 = arith.addf %204, %203 : vector<1x32xf32>
    %206 = arith.divf %204, %205 : vector<1x32xf32>
    %207 = vector.extract_strided_slice %194 {offsets = [0, 32], sizes = [1, 32], strides = [1, 1]} : vector<1x96xf32> to vector<1x32xf32>
    %208 = vector.extract_strided_slice %198 {offsets = [0, 32], sizes = [1, 32], strides = [1, 1]} : vector<1x96xf32> to vector<1x32xf32>
    %209 = arith.addf %207, %208 : vector<1x32xf32>
    %210 = arith.negf %209 : vector<1x32xf32>
    %211 = math.exp %210 : vector<1x32xf32>
    %cst_111 = arith.constant 1.000000e+00 : f32
    %212 = vector.broadcast %cst_111 : f32 to vector<1x32xf32>
    %213 = arith.addf %212, %211 : vector<1x32xf32>
    %214 = arith.divf %212, %213 : vector<1x32xf32>
    %215 = vector.extract_strided_slice %194 {offsets = [0, 64], sizes = [1, 32], strides = [1, 1]} : vector<1x96xf32> to vector<1x32xf32>
    %216 = vector.extract_strided_slice %198 {offsets = [0, 64], sizes = [1, 32], strides = [1, 1]} : vector<1x96xf32> to vector<1x32xf32>
    %217 = arith.mulf %206, %216 : vector<1x32xf32>
    %218 = arith.addf %215, %217 : vector<1x32xf32>
    %219 = math.tanh %218 : vector<1x32xf32>
    %cst_112 = arith.constant 1.000000e+00 : f32
    %220 = vector.broadcast %cst_112 : f32 to vector<1x32xf32>
    %221 = arith.subf %220, %214 : vector<1x32xf32>
    %222 = arith.mulf %221, %219 : vector<1x32xf32>
    %223 = arith.mulf %214, %145 : vector<1x32xf32>
    %224 = arith.addf %222, %223 : vector<1x32xf32>
    %c0_113 = arith.constant 0 : index
    %c0_114 = arith.constant 0 : index
    %225 = vector.load %arg13[%c0_113, %c0_114] : memref<32x16xf32, #tpu.memory_space<vmem>>, vector<32x16xf32>
    %cst_115 = arith.constant dense<0.000000e+00> : vector<1x16xf32>
    %226 = tpu.matmul %224, %225, %cst_115 {dimension_numbers = #tpu.dot_dimension_numbers<[1], [0], [0], [1], [0, 0, 1, 1], [], []>} : vector<1x32xf32>, vector<32x16xf32>, vector<1x16xf32> -> vector<1x16xf32>
    %c0_116 = arith.constant 0 : index
    %c0_117 = arith.constant 0 : index
    %227 = vector.load %arg14[%c0_116, %c0_117] : memref<1x16xf32, #tpu.memory_space<vmem>>, vector<1x16xf32>
    %228 = arith.addf %226, %227 : vector<1x16xf32>
    %cst_118 = arith.constant dense<0xFF800000> : vector<1xf32>
    %229 = vector.multi_reduction <maximumf>, %228, %cst_118 [1] : vector<1x16xf32> to vector<1xf32>
    %230 = vector.shape_cast %229 : vector<1xf32> to vector<1x1xf32>
    %231 = vector.broadcast %230 : vector<1x1xf32> to vector<1x16xf32>
    %232 = arith.subf %228, %231 : vector<1x16xf32>
    %233 = math.exp %232 : vector<1x16xf32>
    %cst_119 = arith.constant dense<0.000000e+00> : vector<1xf32>
    %234 = vector.multi_reduction <add>, %233, %cst_119 [1] : vector<1x16xf32> to vector<1xf32>
    %235 = vector.shape_cast %234 : vector<1xf32> to vector<1x1xf32>
    %236 = math.log %235 : vector<1x1xf32>
    %237 = arith.addf %230, %236 : vector<1x1xf32>
    %238 = vector.broadcast %237 : vector<1x1xf32> to vector<1x16xf32>
    %239 = arith.subf %228, %238 : vector<1x16xf32>
    %c2_120 = arith.constant 2 : index
    %c0_121 = arith.constant 0 : index
    %240 = vector.load %arg15[%c2_120, %c0_121] : memref<8x16xf32, #tpu.memory_space<vmem>>, vector<1x16xf32>
    tpu.vector_store %arg15[%c2_120, %c0_121], %239 {strides = array<i32>} : memref<8x16xf32, #tpu.memory_space<vmem>>, vector<1x16xf32>,
    %c3 = arith.constant 3 : index
    %241 = memref.load %arg1[%c3] : memref<8xi32, #tpu.memory_space<smem>>
    %242 = vector.broadcast %241 : i32 to vector<1x16xi32>
    %243 = arith.cmpi eq, %0, %242 : vector<1x16xi32>
    %244 = arith.extui %243 : vector<1x16xi1> to vector<1x16xi32>
    %245 = arith.sitofp %244 : vector<1x16xi32> to vector<1x16xf32>
    %cst_122 = arith.constant dense<0.000000e+00> : vector<1x32xf32>
    %246 = tpu.matmul %245, %1, %cst_122 {dimension_numbers = #tpu.dot_dimension_numbers<[1], [0], [0], [1], [0, 0, 1, 1], [], []>} : vector<1x16xf32>, vector<16x32xf32>, vector<1x32xf32> -> vector<1x32xf32>
    %247 = tpu.concatenate %246, %224 in 1 : vector<1x32xf32>, vector<1x32xf32> -> vector<1x64xf32>
    %c0_123 = arith.constant 0 : index
    %c0_124 = arith.constant 0 : index
    %248 = vector.load %arg5[%c0_123, %c0_124] : memref<64x8xf32, #tpu.memory_space<vmem>>, vector<64x8xf32>
    %cst_125 = arith.constant dense<0.000000e+00> : vector<1x8xf32>
    %249 = tpu.matmul %247, %248, %cst_125 {dimension_numbers = #tpu.dot_dimension_numbers<[1], [0], [0], [1], [0, 0, 1, 1], [], []>} : vector<1x64xf32>, vector<64x8xf32>, vector<1x8xf32> -> vector<1x8xf32>
    %c0_126 = arith.constant 0 : index
    %c0_127 = arith.constant 0 : index
    %250 = vector.load %arg6[%c0_126, %c0_127] : memref<1x8xf32, #tpu.memory_space<vmem>>, vector<1x8xf32>
    %251 = arith.addf %249, %250 : vector<1x8xf32>
    %cst_128 = arith.constant dense<0xFF800000> : vector<1xf32>
    %252 = vector.multi_reduction <maximumf>, %251, %cst_128 [1] : vector<1x8xf32> to vector<1xf32>
    %253 = vector.shape_cast %252 : vector<1xf32> to vector<1x1xf32>
    %254 = vector.broadcast %253 : vector<1x1xf32> to vector<1x8xf32>
    %255 = arith.subf %251, %254 : vector<1x8xf32>
    %256 = math.exp %255 : vector<1x8xf32>
    %cst_129 = arith.constant dense<0.000000e+00> : vector<1xf32>
    %257 = vector.multi_reduction <add>, %256, %cst_129 [1] : vector<1x8xf32> to vector<1xf32>
    %258 = vector.shape_cast %257 : vector<1xf32> to vector<1x1xf32>
    %259 = vector.broadcast %258 : vector<1x1xf32> to vector<1x8xf32>
    %260 = arith.divf %256, %259 : vector<1x8xf32>
    %c3_130 = arith.constant 3 : index
    %c0_131 = arith.constant 0 : index
    %261 = vector.load %arg17[%c3_130, %c0_131] : memref<8x8xf32, #tpu.memory_space<vmem>>, vector<1x8xf32>
    tpu.vector_store %arg17[%c3_130, %c0_131], %260 {strides = array<i32>} : memref<8x8xf32, #tpu.memory_space<vmem>>, vector<1x8xf32>,
    %cst_132 = arith.constant dense<0.000000e+00> : vector<1x32xf32>
    %262 = tpu.matmul %260, %2, %cst_132 {dimension_numbers = #tpu.dot_dimension_numbers<[1], [0], [0], [1], [0, 0, 1, 1], [], []>} : vector<1x8xf32>, vector<8x32xf32>, vector<1x32xf32> -> vector<1x32xf32>
    %263 = tpu.concatenate %246, %262 in 1 : vector<1x32xf32>, vector<1x32xf32> -> vector<1x64xf32>
    %c0_133 = arith.constant 0 : index
    %c0_134 = arith.constant 0 : index
    %264 = vector.load %arg7[%c0_133, %c0_134] : memref<64x32xf32, #tpu.memory_space<vmem>>, vector<64x32xf32>
    %cst_135 = arith.constant dense<0.000000e+00> : vector<1x32xf32>
    %265 = tpu.matmul %263, %264, %cst_135 {dimension_numbers = #tpu.dot_dimension_numbers<[1], [0], [0], [1], [0, 0, 1, 1], [], []>} : vector<1x64xf32>, vector<64x32xf32>, vector<1x32xf32> -> vector<1x32xf32>
    %c0_136 = arith.constant 0 : index
    %c0_137 = arith.constant 0 : index
    %266 = vector.load %arg8[%c0_136, %c0_137] : memref<1x32xf32, #tpu.memory_space<vmem>>, vector<1x32xf32>
    %267 = arith.addf %265, %266 : vector<1x32xf32>
    %cst_138 = arith.constant 0.000000e+00 : f32
    %268 = vector.broadcast %cst_138 : f32 to vector<1x32xf32>
    %269 = arith.maximumf %267, %268 : vector<1x32xf32>
    %c0_139 = arith.constant 0 : index
    %c0_140 = arith.constant 0 : index
    %270 = vector.load %arg9[%c0_139, %c0_140] : memref<32x96xf32, #tpu.memory_space<vmem>>, vector<32x96xf32>
    %cst_141 = arith.constant dense<0.000000e+00> : vector<1x96xf32>
    %271 = tpu.matmul %269, %270, %cst_141 {dimension_numbers = #tpu.dot_dimension_numbers<[1], [0], [0], [1], [0, 0, 1, 1], [], []>} : vector<1x32xf32>, vector<32x96xf32>, vector<1x96xf32> -> vector<1x96xf32>
    %c0_142 = arith.constant 0 : index
    %c0_143 = arith.constant 0 : index
    %272 = vector.load %arg11[%c0_142, %c0_143] : memref<1x96xf32, #tpu.memory_space<vmem>>, vector<1x96xf32>
    %273 = arith.addf %271, %272 : vector<1x96xf32>
    %c0_144 = arith.constant 0 : index
    %c0_145 = arith.constant 0 : index
    %274 = vector.load %arg10[%c0_144, %c0_145] : memref<32x96xf32, #tpu.memory_space<vmem>>, vector<32x96xf32>
    %cst_146 = arith.constant dense<0.000000e+00> : vector<1x96xf32>
    %275 = tpu.matmul %224, %274, %cst_146 {dimension_numbers = #tpu.dot_dimension_numbers<[1], [0], [0], [1], [0, 0, 1, 1], [], []>} : vector<1x32xf32>, vector<32x96xf32>, vector<1x96xf32> -> vector<1x96xf32>
    %c0_147 = arith.constant 0 : index
    %c0_148 = arith.constant 0 : index
    %276 = vector.load %arg12[%c0_147, %c0_148] : memref<1x96xf32, #tpu.memory_space<vmem>>, vector<1x96xf32>
    %277 = arith.addf %275, %276 : vector<1x96xf32>
    %278 = vector.extract_strided_slice %273 {offsets = [0, 0], sizes = [1, 32], strides = [1, 1]} : vector<1x96xf32> to vector<1x32xf32>
    %279 = vector.extract_strided_slice %277 {offsets = [0, 0], sizes = [1, 32], strides = [1, 1]} : vector<1x96xf32> to vector<1x32xf32>
    %280 = arith.addf %278, %279 : vector<1x32xf32>
    %281 = arith.negf %280 : vector<1x32xf32>
    %282 = math.exp %281 : vector<1x32xf32>
    %cst_149 = arith.constant 1.000000e+00 : f32
    %283 = vector.broadcast %cst_149 : f32 to vector<1x32xf32>
    %284 = arith.addf %283, %282 : vector<1x32xf32>
    %285 = arith.divf %283, %284 : vector<1x32xf32>
    %286 = vector.extract_strided_slice %273 {offsets = [0, 32], sizes = [1, 32], strides = [1, 1]} : vector<1x96xf32> to vector<1x32xf32>
    %287 = vector.extract_strided_slice %277 {offsets = [0, 32], sizes = [1, 32], strides = [1, 1]} : vector<1x96xf32> to vector<1x32xf32>
    %288 = arith.addf %286, %287 : vector<1x32xf32>
    %289 = arith.negf %288 : vector<1x32xf32>
    %290 = math.exp %289 : vector<1x32xf32>
    %cst_150 = arith.constant 1.000000e+00 : f32
    %291 = vector.broadcast %cst_150 : f32 to vector<1x32xf32>
    %292 = arith.addf %291, %290 : vector<1x32xf32>
    %293 = arith.divf %291, %292 : vector<1x32xf32>
    %294 = vector.extract_strided_slice %273 {offsets = [0, 64], sizes = [1, 32], strides = [1, 1]} : vector<1x96xf32> to vector<1x32xf32>
    %295 = vector.extract_strided_slice %277 {offsets = [0, 64], sizes = [1, 32], strides = [1, 1]} : vector<1x96xf32> to vector<1x32xf32>
    %296 = arith.mulf %285, %295 : vector<1x32xf32>
    %297 = arith.addf %294, %296 : vector<1x32xf32>
    %298 = math.tanh %297 : vector<1x32xf32>
    %cst_151 = arith.constant 1.000000e+00 : f32
    %299 = vector.broadcast %cst_151 : f32 to vector<1x32xf32>
    %300 = arith.subf %299, %293 : vector<1x32xf32>
    %301 = arith.mulf %300, %298 : vector<1x32xf32>
    %302 = arith.mulf %293, %224 : vector<1x32xf32>
    %303 = arith.addf %301, %302 : vector<1x32xf32>
    %c0_152 = arith.constant 0 : index
    %c0_153 = arith.constant 0 : index
    %304 = vector.load %arg13[%c0_152, %c0_153] : memref<32x16xf32, #tpu.memory_space<vmem>>, vector<32x16xf32>
    %cst_154 = arith.constant dense<0.000000e+00> : vector<1x16xf32>
    %305 = tpu.matmul %303, %304, %cst_154 {dimension_numbers = #tpu.dot_dimension_numbers<[1], [0], [0], [1], [0, 0, 1, 1], [], []>} : vector<1x32xf32>, vector<32x16xf32>, vector<1x16xf32> -> vector<1x16xf32>
    %c0_155 = arith.constant 0 : index
    %c0_156 = arith.constant 0 : index
    %306 = vector.load %arg14[%c0_155, %c0_156] : memref<1x16xf32, #tpu.memory_space<vmem>>, vector<1x16xf32>
    %307 = arith.addf %305, %306 : vector<1x16xf32>
    %cst_157 = arith.constant dense<0xFF800000> : vector<1xf32>
    %308 = vector.multi_reduction <maximumf>, %307, %cst_157 [1] : vector<1x16xf32> to vector<1xf32>
    %309 = vector.shape_cast %308 : vector<1xf32> to vector<1x1xf32>
    %310 = vector.broadcast %309 : vector<1x1xf32> to vector<1x16xf32>
    %311 = arith.subf %307, %310 : vector<1x16xf32>
    %312 = math.exp %311 : vector<1x16xf32>
    %cst_158 = arith.constant dense<0.000000e+00> : vector<1xf32>
    %313 = vector.multi_reduction <add>, %312, %cst_158 [1] : vector<1x16xf32> to vector<1xf32>
    %314 = vector.shape_cast %313 : vector<1xf32> to vector<1x1xf32>
    %315 = math.log %314 : vector<1x1xf32>
    %316 = arith.addf %309, %315 : vector<1x1xf32>
    %317 = vector.broadcast %316 : vector<1x1xf32> to vector<1x16xf32>
    %318 = arith.subf %307, %317 : vector<1x16xf32>
    %c3_159 = arith.constant 3 : index
    %c0_160 = arith.constant 0 : index
    %319 = vector.load %arg15[%c3_159, %c0_160] : memref<8x16xf32, #tpu.memory_space<vmem>>, vector<1x16xf32>
    tpu.vector_store %arg15[%c3_159, %c0_160], %318 {strides = array<i32>} : memref<8x16xf32, #tpu.memory_space<vmem>>, vector<1x16xf32>,
    %c4 = arith.constant 4 : index
    %320 = memref.load %arg1[%c4] : memref<8xi32, #tpu.memory_space<smem>>
    %321 = vector.broadcast %320 : i32 to vector<1x16xi32>
    %322 = arith.cmpi eq, %0, %321 : vector<1x16xi32>
    %323 = arith.extui %322 : vector<1x16xi1> to vector<1x16xi32>
    %324 = arith.sitofp %323 : vector<1x16xi32> to vector<1x16xf32>
    %cst_161 = arith.constant dense<0.000000e+00> : vector<1x32xf32>
    %325 = tpu.matmul %324, %1, %cst_161 {dimension_numbers = #tpu.dot_dimension_numbers<[1], [0], [0], [1], [0, 0, 1, 1], [], []>} : vector<1x16xf32>, vector<16x32xf32>, vector<1x32xf32> -> vector<1x32xf32>
    %326 = tpu.concatenate %325, %303 in 1 : vector<1x32xf32>, vector<1x32xf32> -> vector<1x64xf32>
    %c0_162 = arith.constant 0 : index
    %c0_163 = arith.constant 0 : index
    %327 = vector.load %arg5[%c0_162, %c0_163] : memref<64x8xf32, #tpu.memory_space<vmem>>, vector<64x8xf32>
    %cst_164 = arith.constant dense<0.000000e+00> : vector<1x8xf32>
    %328 = tpu.matmul %326, %327, %cst_164 {dimension_numbers = #tpu.dot_dimension_numbers<[1], [0], [0], [1], [0, 0, 1, 1], [], []>} : vector<1x64xf32>, vector<64x8xf32>, vector<1x8xf32> -> vector<1x8xf32>
    %c0_165 = arith.constant 0 : index
    %c0_166 = arith.constant 0 : index
    %329 = vector.load %arg6[%c0_165, %c0_166] : memref<1x8xf32, #tpu.memory_space<vmem>>, vector<1x8xf32>
    %330 = arith.addf %328, %329 : vector<1x8xf32>
    %cst_167 = arith.constant dense<0xFF800000> : vector<1xf32>
    %331 = vector.multi_reduction <maximumf>, %330, %cst_167 [1] : vector<1x8xf32> to vector<1xf32>
    %332 = vector.shape_cast %331 : vector<1xf32> to vector<1x1xf32>
    %333 = vector.broadcast %332 : vector<1x1xf32> to vector<1x8xf32>
    %334 = arith.subf %330, %333 : vector<1x8xf32>
    %335 = math.exp %334 : vector<1x8xf32>
    %cst_168 = arith.constant dense<0.000000e+00> : vector<1xf32>
    %336 = vector.multi_reduction <add>, %335, %cst_168 [1] : vector<1x8xf32> to vector<1xf32>
    %337 = vector.shape_cast %336 : vector<1xf32> to vector<1x1xf32>
    %338 = vector.broadcast %337 : vector<1x1xf32> to vector<1x8xf32>
    %339 = arith.divf %335, %338 : vector<1x8xf32>
    %c4_169 = arith.constant 4 : index
    %c0_170 = arith.constant 0 : index
    %340 = vector.load %arg17[%c4_169, %c0_170] : memref<8x8xf32, #tpu.memory_space<vmem>>, vector<1x8xf32>
    tpu.vector_store %arg17[%c4_169, %c0_170], %339 {strides = array<i32>} : memref<8x8xf32, #tpu.memory_space<vmem>>, vector<1x8xf32>,
    %cst_171 = arith.constant dense<0.000000e+00> : vector<1x32xf32>
    %341 = tpu.matmul %339, %2, %cst_171 {dimension_numbers = #tpu.dot_dimension_numbers<[1], [0], [0], [1], [0, 0, 1, 1], [], []>} : vector<1x8xf32>, vector<8x32xf32>, vector<1x32xf32> -> vector<1x32xf32>
    %342 = tpu.concatenate %325, %341 in 1 : vector<1x32xf32>, vector<1x32xf32> -> vector<1x64xf32>
    %c0_172 = arith.constant 0 : index
    %c0_173 = arith.constant 0 : index
    %343 = vector.load %arg7[%c0_172, %c0_173] : memref<64x32xf32, #tpu.memory_space<vmem>>, vector<64x32xf32>
    %cst_174 = arith.constant dense<0.000000e+00> : vector<1x32xf32>
    %344 = tpu.matmul %342, %343, %cst_174 {dimension_numbers = #tpu.dot_dimension_numbers<[1], [0], [0], [1], [0, 0, 1, 1], [], []>} : vector<1x64xf32>, vector<64x32xf32>, vector<1x32xf32> -> vector<1x32xf32>
    %c0_175 = arith.constant 0 : index
    %c0_176 = arith.constant 0 : index
    %345 = vector.load %arg8[%c0_175, %c0_176] : memref<1x32xf32, #tpu.memory_space<vmem>>, vector<1x32xf32>
    %346 = arith.addf %344, %345 : vector<1x32xf32>
    %cst_177 = arith.constant 0.000000e+00 : f32
    %347 = vector.broadcast %cst_177 : f32 to vector<1x32xf32>
    %348 = arith.maximumf %346, %347 : vector<1x32xf32>
    %c0_178 = arith.constant 0 : index
    %c0_179 = arith.constant 0 : index
    %349 = vector.load %arg9[%c0_178, %c0_179] : memref<32x96xf32, #tpu.memory_space<vmem>>, vector<32x96xf32>
    %cst_180 = arith.constant dense<0.000000e+00> : vector<1x96xf32>
    %350 = tpu.matmul %348, %349, %cst_180 {dimension_numbers = #tpu.dot_dimension_numbers<[1], [0], [0], [1], [0, 0, 1, 1], [], []>} : vector<1x32xf32>, vector<32x96xf32>, vector<1x96xf32> -> vector<1x96xf32>
    %c0_181 = arith.constant 0 : index
    %c0_182 = arith.constant 0 : index
    %351 = vector.load %arg11[%c0_181, %c0_182] : memref<1x96xf32, #tpu.memory_space<vmem>>, vector<1x96xf32>
    %352 = arith.addf %350, %351 : vector<1x96xf32>
    %c0_183 = arith.constant 0 : index
    %c0_184 = arith.constant 0 : index
    %353 = vector.load %arg10[%c0_183, %c0_184] : memref<32x96xf32, #tpu.memory_space<vmem>>, vector<32x96xf32>
    %cst_185 = arith.constant dense<0.000000e+00> : vector<1x96xf32>
    %354 = tpu.matmul %303, %353, %cst_185 {dimension_numbers = #tpu.dot_dimension_numbers<[1], [0], [0], [1], [0, 0, 1, 1], [], []>} : vector<1x32xf32>, vector<32x96xf32>, vector<1x96xf32> -> vector<1x96xf32>
    %c0_186 = arith.constant 0 : index
    %c0_187 = arith.constant 0 : index
    %355 = vector.load %arg12[%c0_186, %c0_187] : memref<1x96xf32, #tpu.memory_space<vmem>>, vector<1x96xf32>
    %356 = arith.addf %354, %355 : vector<1x96xf32>
    %357 = vector.extract_strided_slice %352 {offsets = [0, 0], sizes = [1, 32], strides = [1, 1]} : vector<1x96xf32> to vector<1x32xf32>
    %358 = vector.extract_strided_slice %356 {offsets = [0, 0], sizes = [1, 32], strides = [1, 1]} : vector<1x96xf32> to vector<1x32xf32>
    %359 = arith.addf %357, %358 : vector<1x32xf32>
    %360 = arith.negf %359 : vector<1x32xf32>
    %361 = math.exp %360 : vector<1x32xf32>
    %cst_188 = arith.constant 1.000000e+00 : f32
    %362 = vector.broadcast %cst_188 : f32 to vector<1x32xf32>
    %363 = arith.addf %362, %361 : vector<1x32xf32>
    %364 = arith.divf %362, %363 : vector<1x32xf32>
    %365 = vector.extract_strided_slice %352 {offsets = [0, 32], sizes = [1, 32], strides = [1, 1]} : vector<1x96xf32> to vector<1x32xf32>
    %366 = vector.extract_strided_slice %356 {offsets = [0, 32], sizes = [1, 32], strides = [1, 1]} : vector<1x96xf32> to vector<1x32xf32>
    %367 = arith.addf %365, %366 : vector<1x32xf32>
    %368 = arith.negf %367 : vector<1x32xf32>
    %369 = math.exp %368 : vector<1x32xf32>
    %cst_189 = arith.constant 1.000000e+00 : f32
    %370 = vector.broadcast %cst_189 : f32 to vector<1x32xf32>
    %371 = arith.addf %370, %369 : vector<1x32xf32>
    %372 = arith.divf %370, %371 : vector<1x32xf32>
    %373 = vector.extract_strided_slice %352 {offsets = [0, 64], sizes = [1, 32], strides = [1, 1]} : vector<1x96xf32> to vector<1x32xf32>
    %374 = vector.extract_strided_slice %356 {offsets = [0, 64], sizes = [1, 32], strides = [1, 1]} : vector<1x96xf32> to vector<1x32xf32>
    %375 = arith.mulf %364, %374 : vector<1x32xf32>
    %376 = arith.addf %373, %375 : vector<1x32xf32>
    %377 = math.tanh %376 : vector<1x32xf32>
    %cst_190 = arith.constant 1.000000e+00 : f32
    %378 = vector.broadcast %cst_190 : f32 to vector<1x32xf32>
    %379 = arith.subf %378, %372 : vector<1x32xf32>
    %380 = arith.mulf %379, %377 : vector<1x32xf32>
    %381 = arith.mulf %372, %303 : vector<1x32xf32>
    %382 = arith.addf %380, %381 : vector<1x32xf32>
    %c0_191 = arith.constant 0 : index
    %c0_192 = arith.constant 0 : index
    %383 = vector.load %arg13[%c0_191, %c0_192] : memref<32x16xf32, #tpu.memory_space<vmem>>, vector<32x16xf32>
    %cst_193 = arith.constant dense<0.000000e+00> : vector<1x16xf32>
    %384 = tpu.matmul %382, %383, %cst_193 {dimension_numbers = #tpu.dot_dimension_numbers<[1], [0], [0], [1], [0, 0, 1, 1], [], []>} : vector<1x32xf32>, vector<32x16xf32>, vector<1x16xf32> -> vector<1x16xf32>
    %c0_194 = arith.constant 0 : index
    %c0_195 = arith.constant 0 : index
    %385 = vector.load %arg14[%c0_194, %c0_195] : memref<1x16xf32, #tpu.memory_space<vmem>>, vector<1x16xf32>
    %386 = arith.addf %384, %385 : vector<1x16xf32>
    %cst_196 = arith.constant dense<0xFF800000> : vector<1xf32>
    %387 = vector.multi_reduction <maximumf>, %386, %cst_196 [1] : vector<1x16xf32> to vector<1xf32>
    %388 = vector.shape_cast %387 : vector<1xf32> to vector<1x1xf32>
    %389 = vector.broadcast %388 : vector<1x1xf32> to vector<1x16xf32>
    %390 = arith.subf %386, %389 : vector<1x16xf32>
    %391 = math.exp %390 : vector<1x16xf32>
    %cst_197 = arith.constant dense<0.000000e+00> : vector<1xf32>
    %392 = vector.multi_reduction <add>, %391, %cst_197 [1] : vector<1x16xf32> to vector<1xf32>
    %393 = vector.shape_cast %392 : vector<1xf32> to vector<1x1xf32>
    %394 = math.log %393 : vector<1x1xf32>
    %395 = arith.addf %388, %394 : vector<1x1xf32>
    %396 = vector.broadcast %395 : vector<1x1xf32> to vector<1x16xf32>
    %397 = arith.subf %386, %396 : vector<1x16xf32>
    %c4_198 = arith.constant 4 : index
    %c0_199 = arith.constant 0 : index
    %398 = vector.load %arg15[%c4_198, %c0_199] : memref<8x16xf32, #tpu.memory_space<vmem>>, vector<1x16xf32>
    tpu.vector_store %arg15[%c4_198, %c0_199], %397 {strides = array<i32>} : memref<8x16xf32, #tpu.memory_space<vmem>>, vector<1x16xf32>,
    %c5 = arith.constant 5 : index
    %399 = memref.load %arg1[%c5] : memref<8xi32, #tpu.memory_space<smem>>
    %400 = vector.broadcast %399 : i32 to vector<1x16xi32>
    %401 = arith.cmpi eq, %0, %400 : vector<1x16xi32>
    %402 = arith.extui %401 : vector<1x16xi1> to vector<1x16xi32>
    %403 = arith.sitofp %402 : vector<1x16xi32> to vector<1x16xf32>
    %cst_200 = arith.constant dense<0.000000e+00> : vector<1x32xf32>
    %404 = tpu.matmul %403, %1, %cst_200 {dimension_numbers = #tpu.dot_dimension_numbers<[1], [0], [0], [1], [0, 0, 1, 1], [], []>} : vector<1x16xf32>, vector<16x32xf32>, vector<1x32xf32> -> vector<1x32xf32>
    %405 = tpu.concatenate %404, %382 in 1 : vector<1x32xf32>, vector<1x32xf32> -> vector<1x64xf32>
    %c0_201 = arith.constant 0 : index
    %c0_202 = arith.constant 0 : index
    %406 = vector.load %arg5[%c0_201, %c0_202] : memref<64x8xf32, #tpu.memory_space<vmem>>, vector<64x8xf32>
    %cst_203 = arith.constant dense<0.000000e+00> : vector<1x8xf32>
    %407 = tpu.matmul %405, %406, %cst_203 {dimension_numbers = #tpu.dot_dimension_numbers<[1], [0], [0], [1], [0, 0, 1, 1], [], []>} : vector<1x64xf32>, vector<64x8xf32>, vector<1x8xf32> -> vector<1x8xf32>
    %c0_204 = arith.constant 0 : index
    %c0_205 = arith.constant 0 : index
    %408 = vector.load %arg6[%c0_204, %c0_205] : memref<1x8xf32, #tpu.memory_space<vmem>>, vector<1x8xf32>
    %409 = arith.addf %407, %408 : vector<1x8xf32>
    %cst_206 = arith.constant dense<0xFF800000> : vector<1xf32>
    %410 = vector.multi_reduction <maximumf>, %409, %cst_206 [1] : vector<1x8xf32> to vector<1xf32>
    %411 = vector.shape_cast %410 : vector<1xf32> to vector<1x1xf32>
    %412 = vector.broadcast %411 : vector<1x1xf32> to vector<1x8xf32>
    %413 = arith.subf %409, %412 : vector<1x8xf32>
    %414 = math.exp %413 : vector<1x8xf32>
    %cst_207 = arith.constant dense<0.000000e+00> : vector<1xf32>
    %415 = vector.multi_reduction <add>, %414, %cst_207 [1] : vector<1x8xf32> to vector<1xf32>
    %416 = vector.shape_cast %415 : vector<1xf32> to vector<1x1xf32>
    %417 = vector.broadcast %416 : vector<1x1xf32> to vector<1x8xf32>
    %418 = arith.divf %414, %417 : vector<1x8xf32>
    %c5_208 = arith.constant 5 : index
    %c0_209 = arith.constant 0 : index
    %419 = vector.load %arg17[%c5_208, %c0_209] : memref<8x8xf32, #tpu.memory_space<vmem>>, vector<1x8xf32>
    tpu.vector_store %arg17[%c5_208, %c0_209], %418 {strides = array<i32>} : memref<8x8xf32, #tpu.memory_space<vmem>>, vector<1x8xf32>,
    %cst_210 = arith.constant dense<0.000000e+00> : vector<1x32xf32>
    %420 = tpu.matmul %418, %2, %cst_210 {dimension_numbers = #tpu.dot_dimension_numbers<[1], [0], [0], [1], [0, 0, 1, 1], [], []>} : vector<1x8xf32>, vector<8x32xf32>, vector<1x32xf32> -> vector<1x32xf32>
    %421 = tpu.concatenate %404, %420 in 1 : vector<1x32xf32>, vector<1x32xf32> -> vector<1x64xf32>
    %c0_211 = arith.constant 0 : index
    %c0_212 = arith.constant 0 : index
    %422 = vector.load %arg7[%c0_211, %c0_212] : memref<64x32xf32, #tpu.memory_space<vmem>>, vector<64x32xf32>
    %cst_213 = arith.constant dense<0.000000e+00> : vector<1x32xf32>
    %423 = tpu.matmul %421, %422, %cst_213 {dimension_numbers = #tpu.dot_dimension_numbers<[1], [0], [0], [1], [0, 0, 1, 1], [], []>} : vector<1x64xf32>, vector<64x32xf32>, vector<1x32xf32> -> vector<1x32xf32>
    %c0_214 = arith.constant 0 : index
    %c0_215 = arith.constant 0 : index
    %424 = vector.load %arg8[%c0_214, %c0_215] : memref<1x32xf32, #tpu.memory_space<vmem>>, vector<1x32xf32>
    %425 = arith.addf %423, %424 : vector<1x32xf32>
    %cst_216 = arith.constant 0.000000e+00 : f32
    %426 = vector.broadcast %cst_216 : f32 to vector<1x32xf32>
    %427 = arith.maximumf %425, %426 : vector<1x32xf32>
    %c0_217 = arith.constant 0 : index
    %c0_218 = arith.constant 0 : index
    %428 = vector.load %arg9[%c0_217, %c0_218] : memref<32x96xf32, #tpu.memory_space<vmem>>, vector<32x96xf32>
    %cst_219 = arith.constant dense<0.000000e+00> : vector<1x96xf32>
    %429 = tpu.matmul %427, %428, %cst_219 {dimension_numbers = #tpu.dot_dimension_numbers<[1], [0], [0], [1], [0, 0, 1, 1], [], []>} : vector<1x32xf32>, vector<32x96xf32>, vector<1x96xf32> -> vector<1x96xf32>
    %c0_220 = arith.constant 0 : index
    %c0_221 = arith.constant 0 : index
    %430 = vector.load %arg11[%c0_220, %c0_221] : memref<1x96xf32, #tpu.memory_space<vmem>>, vector<1x96xf32>
    %431 = arith.addf %429, %430 : vector<1x96xf32>
    %c0_222 = arith.constant 0 : index
    %c0_223 = arith.constant 0 : index
    %432 = vector.load %arg10[%c0_222, %c0_223] : memref<32x96xf32, #tpu.memory_space<vmem>>, vector<32x96xf32>
    %cst_224 = arith.constant dense<0.000000e+00> : vector<1x96xf32>
    %433 = tpu.matmul %382, %432, %cst_224 {dimension_numbers = #tpu.dot_dimension_numbers<[1], [0], [0], [1], [0, 0, 1, 1], [], []>} : vector<1x32xf32>, vector<32x96xf32>, vector<1x96xf32> -> vector<1x96xf32>
    %c0_225 = arith.constant 0 : index
    %c0_226 = arith.constant 0 : index
    %434 = vector.load %arg12[%c0_225, %c0_226] : memref<1x96xf32, #tpu.memory_space<vmem>>, vector<1x96xf32>
    %435 = arith.addf %433, %434 : vector<1x96xf32>
    %436 = vector.extract_strided_slice %431 {offsets = [0, 0], sizes = [1, 32], strides = [1, 1]} : vector<1x96xf32> to vector<1x32xf32>
    %437 = vector.extract_strided_slice %435 {offsets = [0, 0], sizes = [1, 32], strides = [1, 1]} : vector<1x96xf32> to vector<1x32xf32>
    %438 = arith.addf %436, %437 : vector<1x32xf32>
    %439 = arith.negf %438 : vector<1x32xf32>
    %440 = math.exp %439 : vector<1x32xf32>
    %cst_227 = arith.constant 1.000000e+00 : f32
    %441 = vector.broadcast %cst_227 : f32 to vector<1x32xf32>
    %442 = arith.addf %441, %440 : vector<1x32xf32>
    %443 = arith.divf %441, %442 : vector<1x32xf32>
    %444 = vector.extract_strided_slice %431 {offsets = [0, 32], sizes = [1, 32], strides = [1, 1]} : vector<1x96xf32> to vector<1x32xf32>
    %445 = vector.extract_strided_slice %435 {offsets = [0, 32], sizes = [1, 32], strides = [1, 1]} : vector<1x96xf32> to vector<1x32xf32>
    %446 = arith.addf %444, %445 : vector<1x32xf32>
    %447 = arith.negf %446 : vector<1x32xf32>
    %448 = math.exp %447 : vector<1x32xf32>
    %cst_228 = arith.constant 1.000000e+00 : f32
    %449 = vector.broadcast %cst_228 : f32 to vector<1x32xf32>
    %450 = arith.addf %449, %448 : vector<1x32xf32>
    %451 = arith.divf %449, %450 : vector<1x32xf32>
    %452 = vector.extract_strided_slice %431 {offsets = [0, 64], sizes = [1, 32], strides = [1, 1]} : vector<1x96xf32> to vector<1x32xf32>
    %453 = vector.extract_strided_slice %435 {offsets = [0, 64], sizes = [1, 32], strides = [1, 1]} : vector<1x96xf32> to vector<1x32xf32>
    %454 = arith.mulf %443, %453 : vector<1x32xf32>
    %455 = arith.addf %452, %454 : vector<1x32xf32>
    %456 = math.tanh %455 : vector<1x32xf32>
    %cst_229 = arith.constant 1.000000e+00 : f32
    %457 = vector.broadcast %cst_229 : f32 to vector<1x32xf32>
    %458 = arith.subf %457, %451 : vector<1x32xf32>
    %459 = arith.mulf %458, %456 : vector<1x32xf32>
    %460 = arith.mulf %451, %382 : vector<1x32xf32>
    %461 = arith.addf %459, %460 : vector<1x32xf32>
    %c0_230 = arith.constant 0 : index
    %c0_231 = arith.constant 0 : index
    %462 = vector.load %arg13[%c0_230, %c0_231] : memref<32x16xf32, #tpu.memory_space<vmem>>, vector<32x16xf32>
    %cst_232 = arith.constant dense<0.000000e+00> : vector<1x16xf32>
    %463 = tpu.matmul %461, %462, %cst_232 {dimension_numbers = #tpu.dot_dimension_numbers<[1], [0], [0], [1], [0, 0, 1, 1], [], []>} : vector<1x32xf32>, vector<32x16xf32>, vector<1x16xf32> -> vector<1x16xf32>
    %c0_233 = arith.constant 0 : index
    %c0_234 = arith.constant 0 : index
    %464 = vector.load %arg14[%c0_233, %c0_234] : memref<1x16xf32, #tpu.memory_space<vmem>>, vector<1x16xf32>
    %465 = arith.addf %463, %464 : vector<1x16xf32>
    %cst_235 = arith.constant dense<0xFF800000> : vector<1xf32>
    %466 = vector.multi_reduction <maximumf>, %465, %cst_235 [1] : vector<1x16xf32> to vector<1xf32>
    %467 = vector.shape_cast %466 : vector<1xf32> to vector<1x1xf32>
    %468 = vector.broadcast %467 : vector<1x1xf32> to vector<1x16xf32>
    %469 = arith.subf %465, %468 : vector<1x16xf32>
    %470 = math.exp %469 : vector<1x16xf32>
    %cst_236 = arith.constant dense<0.000000e+00> : vector<1xf32>
    %471 = vector.multi_reduction <add>, %470, %cst_236 [1] : vector<1x16xf32> to vector<1xf32>
    %472 = vector.shape_cast %471 : vector<1xf32> to vector<1x1xf32>
    %473 = math.log %472 : vector<1x1xf32>
    %474 = arith.addf %467, %473 : vector<1x1xf32>
    %475 = vector.broadcast %474 : vector<1x1xf32> to vector<1x16xf32>
    %476 = arith.subf %465, %475 : vector<1x16xf32>
    %c5_237 = arith.constant 5 : index
    %c0_238 = arith.constant 0 : index
    %477 = vector.load %arg15[%c5_237, %c0_238] : memref<8x16xf32, #tpu.memory_space<vmem>>, vector<1x16xf32>
    tpu.vector_store %arg15[%c5_237, %c0_238], %476 {strides = array<i32>} : memref<8x16xf32, #tpu.memory_space<vmem>>, vector<1x16xf32>,
    %c6 = arith.constant 6 : index
    %478 = memref.load %arg1[%c6] : memref<8xi32, #tpu.memory_space<smem>>
    %479 = vector.broadcast %478 : i32 to vector<1x16xi32>
    %480 = arith.cmpi eq, %0, %479 : vector<1x16xi32>
    %481 = arith.extui %480 : vector<1x16xi1> to vector<1x16xi32>
    %482 = arith.sitofp %481 : vector<1x16xi32> to vector<1x16xf32>
    %cst_239 = arith.constant dense<0.000000e+00> : vector<1x32xf32>
    %483 = tpu.matmul %482, %1, %cst_239 {dimension_numbers = #tpu.dot_dimension_numbers<[1], [0], [0], [1], [0, 0, 1, 1], [], []>} : vector<1x16xf32>, vector<16x32xf32>, vector<1x32xf32> -> vector<1x32xf32>
    %484 = tpu.concatenate %483, %461 in 1 : vector<1x32xf32>, vector<1x32xf32> -> vector<1x64xf32>
    %c0_240 = arith.constant 0 : index
    %c0_241 = arith.constant 0 : index
    %485 = vector.load %arg5[%c0_240, %c0_241] : memref<64x8xf32, #tpu.memory_space<vmem>>, vector<64x8xf32>
    %cst_242 = arith.constant dense<0.000000e+00> : vector<1x8xf32>
    %486 = tpu.matmul %484, %485, %cst_242 {dimension_numbers = #tpu.dot_dimension_numbers<[1], [0], [0], [1], [0, 0, 1, 1], [], []>} : vector<1x64xf32>, vector<64x8xf32>, vector<1x8xf32> -> vector<1x8xf32>
    %c0_243 = arith.constant 0 : index
    %c0_244 = arith.constant 0 : index
    %487 = vector.load %arg6[%c0_243, %c0_244] : memref<1x8xf32, #tpu.memory_space<vmem>>, vector<1x8xf32>
    %488 = arith.addf %486, %487 : vector<1x8xf32>
    %cst_245 = arith.constant dense<0xFF800000> : vector<1xf32>
    %489 = vector.multi_reduction <maximumf>, %488, %cst_245 [1] : vector<1x8xf32> to vector<1xf32>
    %490 = vector.shape_cast %489 : vector<1xf32> to vector<1x1xf32>
    %491 = vector.broadcast %490 : vector<1x1xf32> to vector<1x8xf32>
    %492 = arith.subf %488, %491 : vector<1x8xf32>
    %493 = math.exp %492 : vector<1x8xf32>
    %cst_246 = arith.constant dense<0.000000e+00> : vector<1xf32>
    %494 = vector.multi_reduction <add>, %493, %cst_246 [1] : vector<1x8xf32> to vector<1xf32>
    %495 = vector.shape_cast %494 : vector<1xf32> to vector<1x1xf32>
    %496 = vector.broadcast %495 : vector<1x1xf32> to vector<1x8xf32>
    %497 = arith.divf %493, %496 : vector<1x8xf32>
    %c6_247 = arith.constant 6 : index
    %c0_248 = arith.constant 0 : index
    %498 = vector.load %arg17[%c6_247, %c0_248] : memref<8x8xf32, #tpu.memory_space<vmem>>, vector<1x8xf32>
    tpu.vector_store %arg17[%c6_247, %c0_248], %497 {strides = array<i32>} : memref<8x8xf32, #tpu.memory_space<vmem>>, vector<1x8xf32>,
    %cst_249 = arith.constant dense<0.000000e+00> : vector<1x32xf32>
    %499 = tpu.matmul %497, %2, %cst_249 {dimension_numbers = #tpu.dot_dimension_numbers<[1], [0], [0], [1], [0, 0, 1, 1], [], []>} : vector<1x8xf32>, vector<8x32xf32>, vector<1x32xf32> -> vector<1x32xf32>
    %500 = tpu.concatenate %483, %499 in 1 : vector<1x32xf32>, vector<1x32xf32> -> vector<1x64xf32>
    %c0_250 = arith.constant 0 : index
    %c0_251 = arith.constant 0 : index
    %501 = vector.load %arg7[%c0_250, %c0_251] : memref<64x32xf32, #tpu.memory_space<vmem>>, vector<64x32xf32>
    %cst_252 = arith.constant dense<0.000000e+00> : vector<1x32xf32>
    %502 = tpu.matmul %500, %501, %cst_252 {dimension_numbers = #tpu.dot_dimension_numbers<[1], [0], [0], [1], [0, 0, 1, 1], [], []>} : vector<1x64xf32>, vector<64x32xf32>, vector<1x32xf32> -> vector<1x32xf32>
    %c0_253 = arith.constant 0 : index
    %c0_254 = arith.constant 0 : index
    %503 = vector.load %arg8[%c0_253, %c0_254] : memref<1x32xf32, #tpu.memory_space<vmem>>, vector<1x32xf32>
    %504 = arith.addf %502, %503 : vector<1x32xf32>
    %cst_255 = arith.constant 0.000000e+00 : f32
    %505 = vector.broadcast %cst_255 : f32 to vector<1x32xf32>
    %506 = arith.maximumf %504, %505 : vector<1x32xf32>
    %c0_256 = arith.constant 0 : index
    %c0_257 = arith.constant 0 : index
    %507 = vector.load %arg9[%c0_256, %c0_257] : memref<32x96xf32, #tpu.memory_space<vmem>>, vector<32x96xf32>
    %cst_258 = arith.constant dense<0.000000e+00> : vector<1x96xf32>
    %508 = tpu.matmul %506, %507, %cst_258 {dimension_numbers = #tpu.dot_dimension_numbers<[1], [0], [0], [1], [0, 0, 1, 1], [], []>} : vector<1x32xf32>, vector<32x96xf32>, vector<1x96xf32> -> vector<1x96xf32>
    %c0_259 = arith.constant 0 : index
    %c0_260 = arith.constant 0 : index
    %509 = vector.load %arg11[%c0_259, %c0_260] : memref<1x96xf32, #tpu.memory_space<vmem>>, vector<1x96xf32>
    %510 = arith.addf %508, %509 : vector<1x96xf32>
    %c0_261 = arith.constant 0 : index
    %c0_262 = arith.constant 0 : index
    %511 = vector.load %arg10[%c0_261, %c0_262] : memref<32x96xf32, #tpu.memory_space<vmem>>, vector<32x96xf32>
    %cst_263 = arith.constant dense<0.000000e+00> : vector<1x96xf32>
    %512 = tpu.matmul %461, %511, %cst_263 {dimension_numbers = #tpu.dot_dimension_numbers<[1], [0], [0], [1], [0, 0, 1, 1], [], []>} : vector<1x32xf32>, vector<32x96xf32>, vector<1x96xf32> -> vector<1x96xf32>
    %c0_264 = arith.constant 0 : index
    %c0_265 = arith.constant 0 : index
    %513 = vector.load %arg12[%c0_264, %c0_265] : memref<1x96xf32, #tpu.memory_space<vmem>>, vector<1x96xf32>
    %514 = arith.addf %512, %513 : vector<1x96xf32>
    %515 = vector.extract_strided_slice %510 {offsets = [0, 0], sizes = [1, 32], strides = [1, 1]} : vector<1x96xf32> to vector<1x32xf32>
    %516 = vector.extract_strided_slice %514 {offsets = [0, 0], sizes = [1, 32], strides = [1, 1]} : vector<1x96xf32> to vector<1x32xf32>
    %517 = arith.addf %515, %516 : vector<1x32xf32>
    %518 = arith.negf %517 : vector<1x32xf32>
    %519 = math.exp %518 : vector<1x32xf32>
    %cst_266 = arith.constant 1.000000e+00 : f32
    %520 = vector.broadcast %cst_266 : f32 to vector<1x32xf32>
    %521 = arith.addf %520, %519 : vector<1x32xf32>
    %522 = arith.divf %520, %521 : vector<1x32xf32>
    %523 = vector.extract_strided_slice %510 {offsets = [0, 32], sizes = [1, 32], strides = [1, 1]} : vector<1x96xf32> to vector<1x32xf32>
    %524 = vector.extract_strided_slice %514 {offsets = [0, 32], sizes = [1, 32], strides = [1, 1]} : vector<1x96xf32> to vector<1x32xf32>
    %525 = arith.addf %523, %524 : vector<1x32xf32>
    %526 = arith.negf %525 : vector<1x32xf32>
    %527 = math.exp %526 : vector<1x32xf32>
    %cst_267 = arith.constant 1.000000e+00 : f32
    %528 = vector.broadcast %cst_267 : f32 to vector<1x32xf32>
    %529 = arith.addf %528, %527 : vector<1x32xf32>
    %530 = arith.divf %528, %529 : vector<1x32xf32>
    %531 = vector.extract_strided_slice %510 {offsets = [0, 64], sizes = [1, 32], strides = [1, 1]} : vector<1x96xf32> to vector<1x32xf32>
    %532 = vector.extract_strided_slice %514 {offsets = [0, 64], sizes = [1, 32], strides = [1, 1]} : vector<1x96xf32> to vector<1x32xf32>
    %533 = arith.mulf %522, %532 : vector<1x32xf32>
    %534 = arith.addf %531, %533 : vector<1x32xf32>
    %535 = math.tanh %534 : vector<1x32xf32>
    %cst_268 = arith.constant 1.000000e+00 : f32
    %536 = vector.broadcast %cst_268 : f32 to vector<1x32xf32>
    %537 = arith.subf %536, %530 : vector<1x32xf32>
    %538 = arith.mulf %537, %535 : vector<1x32xf32>
    %539 = arith.mulf %530, %461 : vector<1x32xf32>
    %540 = arith.addf %538, %539 : vector<1x32xf32>
    %c0_269 = arith.constant 0 : index
    %c0_270 = arith.constant 0 : index
    %541 = vector.load %arg13[%c0_269, %c0_270] : memref<32x16xf32, #tpu.memory_space<vmem>>, vector<32x16xf32>
    %cst_271 = arith.constant dense<0.000000e+00> : vector<1x16xf32>
    %542 = tpu.matmul %540, %541, %cst_271 {dimension_numbers = #tpu.dot_dimension_numbers<[1], [0], [0], [1], [0, 0, 1, 1], [], []>} : vector<1x32xf32>, vector<32x16xf32>, vector<1x16xf32> -> vector<1x16xf32>
    %c0_272 = arith.constant 0 : index
    %c0_273 = arith.constant 0 : index
    %543 = vector.load %arg14[%c0_272, %c0_273] : memref<1x16xf32, #tpu.memory_space<vmem>>, vector<1x16xf32>
    %544 = arith.addf %542, %543 : vector<1x16xf32>
    %cst_274 = arith.constant dense<0xFF800000> : vector<1xf32>
    %545 = vector.multi_reduction <maximumf>, %544, %cst_274 [1] : vector<1x16xf32> to vector<1xf32>
    %546 = vector.shape_cast %545 : vector<1xf32> to vector<1x1xf32>
    %547 = vector.broadcast %546 : vector<1x1xf32> to vector<1x16xf32>
    %548 = arith.subf %544, %547 : vector<1x16xf32>
    %549 = math.exp %548 : vector<1x16xf32>
    %cst_275 = arith.constant dense<0.000000e+00> : vector<1xf32>
    %550 = vector.multi_reduction <add>, %549, %cst_275 [1] : vector<1x16xf32> to vector<1xf32>
    %551 = vector.shape_cast %550 : vector<1xf32> to vector<1x1xf32>
    %552 = math.log %551 : vector<1x1xf32>
    %553 = arith.addf %546, %552 : vector<1x1xf32>
    %554 = vector.broadcast %553 : vector<1x1xf32> to vector<1x16xf32>
    %555 = arith.subf %544, %554 : vector<1x16xf32>
    %c6_276 = arith.constant 6 : index
    %c0_277 = arith.constant 0 : index
    %556 = vector.load %arg15[%c6_276, %c0_277] : memref<8x16xf32, #tpu.memory_space<vmem>>, vector<1x16xf32>
    tpu.vector_store %arg15[%c6_276, %c0_277], %555 {strides = array<i32>} : memref<8x16xf32, #tpu.memory_space<vmem>>, vector<1x16xf32>,
    %c7 = arith.constant 7 : index
    %557 = memref.load %arg1[%c7] : memref<8xi32, #tpu.memory_space<smem>>
    %558 = vector.broadcast %557 : i32 to vector<1x16xi32>
    %559 = arith.cmpi eq, %0, %558 : vector<1x16xi32>
    %560 = arith.extui %559 : vector<1x16xi1> to vector<1x16xi32>
    %561 = arith.sitofp %560 : vector<1x16xi32> to vector<1x16xf32>
    %cst_278 = arith.constant dense<0.000000e+00> : vector<1x32xf32>
    %562 = tpu.matmul %561, %1, %cst_278 {dimension_numbers = #tpu.dot_dimension_numbers<[1], [0], [0], [1], [0, 0, 1, 1], [], []>} : vector<1x16xf32>, vector<16x32xf32>, vector<1x32xf32> -> vector<1x32xf32>
    %563 = tpu.concatenate %562, %540 in 1 : vector<1x32xf32>, vector<1x32xf32> -> vector<1x64xf32>
    %c0_279 = arith.constant 0 : index
    %c0_280 = arith.constant 0 : index
    %564 = vector.load %arg5[%c0_279, %c0_280] : memref<64x8xf32, #tpu.memory_space<vmem>>, vector<64x8xf32>
    %cst_281 = arith.constant dense<0.000000e+00> : vector<1x8xf32>
    %565 = tpu.matmul %563, %564, %cst_281 {dimension_numbers = #tpu.dot_dimension_numbers<[1], [0], [0], [1], [0, 0, 1, 1], [], []>} : vector<1x64xf32>, vector<64x8xf32>, vector<1x8xf32> -> vector<1x8xf32>
    %c0_282 = arith.constant 0 : index
    %c0_283 = arith.constant 0 : index
    %566 = vector.load %arg6[%c0_282, %c0_283] : memref<1x8xf32, #tpu.memory_space<vmem>>, vector<1x8xf32>
    %567 = arith.addf %565, %566 : vector<1x8xf32>
    %cst_284 = arith.constant dense<0xFF800000> : vector<1xf32>
    %568 = vector.multi_reduction <maximumf>, %567, %cst_284 [1] : vector<1x8xf32> to vector<1xf32>
    %569 = vector.shape_cast %568 : vector<1xf32> to vector<1x1xf32>
    %570 = vector.broadcast %569 : vector<1x1xf32> to vector<1x8xf32>
    %571 = arith.subf %567, %570 : vector<1x8xf32>
    %572 = math.exp %571 : vector<1x8xf32>
    %cst_285 = arith.constant dense<0.000000e+00> : vector<1xf32>
    %573 = vector.multi_reduction <add>, %572, %cst_285 [1] : vector<1x8xf32> to vector<1xf32>
    %574 = vector.shape_cast %573 : vector<1xf32> to vector<1x1xf32>
    %575 = vector.broadcast %574 : vector<1x1xf32> to vector<1x8xf32>
    %576 = arith.divf %572, %575 : vector<1x8xf32>
    %c7_286 = arith.constant 7 : index
    %c0_287 = arith.constant 0 : index
    %577 = vector.load %arg17[%c7_286, %c0_287] : memref<8x8xf32, #tpu.memory_space<vmem>>, vector<1x8xf32>
    tpu.vector_store %arg17[%c7_286, %c0_287], %576 {strides = array<i32>} : memref<8x8xf32, #tpu.memory_space<vmem>>, vector<1x8xf32>,
    %cst_288 = arith.constant dense<0.000000e+00> : vector<1x32xf32>
    %578 = tpu.matmul %576, %2, %cst_288 {dimension_numbers = #tpu.dot_dimension_numbers<[1], [0], [0], [1], [0, 0, 1, 1], [], []>} : vector<1x8xf32>, vector<8x32xf32>, vector<1x32xf32> -> vector<1x32xf32>
    %579 = tpu.concatenate %562, %578 in 1 : vector<1x32xf32>, vector<1x32xf32> -> vector<1x64xf32>
    %c0_289 = arith.constant 0 : index
    %c0_290 = arith.constant 0 : index
    %580 = vector.load %arg7[%c0_289, %c0_290] : memref<64x32xf32, #tpu.memory_space<vmem>>, vector<64x32xf32>
    %cst_291 = arith.constant dense<0.000000e+00> : vector<1x32xf32>
    %581 = tpu.matmul %579, %580, %cst_291 {dimension_numbers = #tpu.dot_dimension_numbers<[1], [0], [0], [1], [0, 0, 1, 1], [], []>} : vector<1x64xf32>, vector<64x32xf32>, vector<1x32xf32> -> vector<1x32xf32>
    %c0_292 = arith.constant 0 : index
    %c0_293 = arith.constant 0 : index
    %582 = vector.load %arg8[%c0_292, %c0_293] : memref<1x32xf32, #tpu.memory_space<vmem>>, vector<1x32xf32>
    %583 = arith.addf %581, %582 : vector<1x32xf32>
    %cst_294 = arith.constant 0.000000e+00 : f32
    %584 = vector.broadcast %cst_294 : f32 to vector<1x32xf32>
    %585 = arith.maximumf %583, %584 : vector<1x32xf32>
    %c0_295 = arith.constant 0 : index
    %c0_296 = arith.constant 0 : index
    %586 = vector.load %arg9[%c0_295, %c0_296] : memref<32x96xf32, #tpu.memory_space<vmem>>, vector<32x96xf32>
    %cst_297 = arith.constant dense<0.000000e+00> : vector<1x96xf32>
    %587 = tpu.matmul %585, %586, %cst_297 {dimension_numbers = #tpu.dot_dimension_numbers<[1], [0], [0], [1], [0, 0, 1, 1], [], []>} : vector<1x32xf32>, vector<32x96xf32>, vector<1x96xf32> -> vector<1x96xf32>
    %c0_298 = arith.constant 0 : index
    %c0_299 = arith.constant 0 : index
    %588 = vector.load %arg11[%c0_298, %c0_299] : memref<1x96xf32, #tpu.memory_space<vmem>>, vector<1x96xf32>
    %589 = arith.addf %587, %588 : vector<1x96xf32>
    %c0_300 = arith.constant 0 : index
    %c0_301 = arith.constant 0 : index
    %590 = vector.load %arg10[%c0_300, %c0_301] : memref<32x96xf32, #tpu.memory_space<vmem>>, vector<32x96xf32>
    %cst_302 = arith.constant dense<0.000000e+00> : vector<1x96xf32>
    %591 = tpu.matmul %540, %590, %cst_302 {dimension_numbers = #tpu.dot_dimension_numbers<[1], [0], [0], [1], [0, 0, 1, 1], [], []>} : vector<1x32xf32>, vector<32x96xf32>, vector<1x96xf32> -> vector<1x96xf32>
    %c0_303 = arith.constant 0 : index
    %c0_304 = arith.constant 0 : index
    %592 = vector.load %arg12[%c0_303, %c0_304] : memref<1x96xf32, #tpu.memory_space<vmem>>, vector<1x96xf32>
    %593 = arith.addf %591, %592 : vector<1x96xf32>
    %594 = vector.extract_strided_slice %589 {offsets = [0, 0], sizes = [1, 32], strides = [1, 1]} : vector<1x96xf32> to vector<1x32xf32>
    %595 = vector.extract_strided_slice %593 {offsets = [0, 0], sizes = [1, 32], strides = [1, 1]} : vector<1x96xf32> to vector<1x32xf32>
    %596 = arith.addf %594, %595 : vector<1x32xf32>
    %597 = arith.negf %596 : vector<1x32xf32>
    %598 = math.exp %597 : vector<1x32xf32>
    %cst_305 = arith.constant 1.000000e+00 : f32
    %599 = vector.broadcast %cst_305 : f32 to vector<1x32xf32>
    %600 = arith.addf %599, %598 : vector<1x32xf32>
    %601 = arith.divf %599, %600 : vector<1x32xf32>
    %602 = vector.extract_strided_slice %589 {offsets = [0, 32], sizes = [1, 32], strides = [1, 1]} : vector<1x96xf32> to vector<1x32xf32>
    %603 = vector.extract_strided_slice %593 {offsets = [0, 32], sizes = [1, 32], strides = [1, 1]} : vector<1x96xf32> to vector<1x32xf32>
    %604 = arith.addf %602, %603 : vector<1x32xf32>
    %605 = arith.negf %604 : vector<1x32xf32>
    %606 = math.exp %605 : vector<1x32xf32>
    %cst_306 = arith.constant 1.000000e+00 : f32
    %607 = vector.broadcast %cst_306 : f32 to vector<1x32xf32>
    %608 = arith.addf %607, %606 : vector<1x32xf32>
    %609 = arith.divf %607, %608 : vector<1x32xf32>
    %610 = vector.extract_strided_slice %589 {offsets = [0, 64], sizes = [1, 32], strides = [1, 1]} : vector<1x96xf32> to vector<1x32xf32>
    %611 = vector.extract_strided_slice %593 {offsets = [0, 64], sizes = [1, 32], strides = [1, 1]} : vector<1x96xf32> to vector<1x32xf32>
    %612 = arith.mulf %601, %611 : vector<1x32xf32>
    %613 = arith.addf %610, %612 : vector<1x32xf32>
    %614 = math.tanh %613 : vector<1x32xf32>
    %cst_307 = arith.constant 1.000000e+00 : f32
    %615 = vector.broadcast %cst_307 : f32 to vector<1x32xf32>
    %616 = arith.subf %615, %609 : vector<1x32xf32>
    %617 = arith.mulf %616, %614 : vector<1x32xf32>
    %618 = arith.mulf %609, %540 : vector<1x32xf32>
    %619 = arith.addf %617, %618 : vector<1x32xf32>
    %c0_308 = arith.constant 0 : index
    %c0_309 = arith.constant 0 : index
    %620 = vector.load %arg13[%c0_308, %c0_309] : memref<32x16xf32, #tpu.memory_space<vmem>>, vector<32x16xf32>
    %cst_310 = arith.constant dense<0.000000e+00> : vector<1x16xf32>
    %621 = tpu.matmul %619, %620, %cst_310 {dimension_numbers = #tpu.dot_dimension_numbers<[1], [0], [0], [1], [0, 0, 1, 1], [], []>} : vector<1x32xf32>, vector<32x16xf32>, vector<1x16xf32> -> vector<1x16xf32>
    %c0_311 = arith.constant 0 : index
    %c0_312 = arith.constant 0 : index
    %622 = vector.load %arg14[%c0_311, %c0_312] : memref<1x16xf32, #tpu.memory_space<vmem>>, vector<1x16xf32>
    %623 = arith.addf %621, %622 : vector<1x16xf32>
    %cst_313 = arith.constant dense<0xFF800000> : vector<1xf32>
    %624 = vector.multi_reduction <maximumf>, %623, %cst_313 [1] : vector<1x16xf32> to vector<1xf32>
    %625 = vector.shape_cast %624 : vector<1xf32> to vector<1x1xf32>
    %626 = vector.broadcast %625 : vector<1x1xf32> to vector<1x16xf32>
    %627 = arith.subf %623, %626 : vector<1x16xf32>
    %628 = math.exp %627 : vector<1x16xf32>
    %cst_314 = arith.constant dense<0.000000e+00> : vector<1xf32>
    %629 = vector.multi_reduction <add>, %628, %cst_314 [1] : vector<1x16xf32> to vector<1xf32>
    %630 = vector.shape_cast %629 : vector<1xf32> to vector<1x1xf32>
    %631 = math.log %630 : vector<1x1xf32>
    %632 = arith.addf %625, %631 : vector<1x1xf32>
    %633 = vector.broadcast %632 : vector<1x1xf32> to vector<1x16xf32>
    %634 = arith.subf %623, %633 : vector<1x16xf32>
    %c7_315 = arith.constant 7 : index
    %c0_316 = arith.constant 0 : index
    %635 = vector.load %arg15[%c7_315, %c0_316] : memref<8x16xf32, #tpu.memory_space<vmem>>, vector<1x16xf32>
    tpu.vector_store %arg15[%c7_315, %c0_316], %634 {strides = array<i32>} : memref<8x16xf32, #tpu.memory_space<vmem>>, vector<1x16xf32>,
    %c0_317 = arith.constant 0 : index
    %c0_318 = arith.constant 0 : index
    %636 = vector.load %arg16[%c0_317, %c0_318] : memref<1x32xf32, #tpu.memory_space<vmem>>, vector<1x32xf32>
    tpu.vector_store %arg16[%c0_317, %c0_318], %619 {strides = array<i32>} : memref<1x32xf32, #tpu.memory_space<vmem>>, vector<1x32xf32>,
    return
  }
  func.func @transform_0(%arg0: i32, %arg1: memref<8xi32, #tpu.memory_space<smem>>) -> (i32, i32) {
    %c0_i32 = arith.constant 0 : i32
    %c0_i32_0 = arith.constant 0 : i32
    %c0_i32_1 = arith.constant 0 : i32
    return %c0_i32, %c0_i32_0 : i32, i32
  }
  func.func @transform_1(%arg0: i32, %arg1: memref<8xi32, #tpu.memory_space<smem>>) -> (i32, i32) {
    %c0_i32 = arith.constant 0 : i32
    %c0_i32_0 = arith.constant 0 : i32
    %c0_i32_1 = arith.constant 0 : i32
    return %c0_i32, %c0_i32_0 : i32, i32
  }
  func.func @transform_2(%arg0: i32, %arg1: memref<8xi32, #tpu.memory_space<smem>>) -> (i32, i32) {
    %c0_i32 = arith.constant 0 : i32
    %c0_i32_0 = arith.constant 0 : i32
    %c0_i32_1 = arith.constant 0 : i32
    return %c0_i32, %c0_i32_0 : i32, i32
  }
  func.func @transform_3(%arg0: i32, %arg1: memref<8xi32, #tpu.memory_space<smem>>) -> (i32, i32) {
    %c0_i32 = arith.constant 0 : i32
    %c0_i32_0 = arith.constant 0 : i32
    %c0_i32_1 = arith.constant 0 : i32
    return %c0_i32, %c0_i32_0 : i32, i32
  }
  func.func @transform_4(%arg0: i32, %arg1: memref<8xi32, #tpu.memory_space<smem>>) -> (i32, i32) {
    %c0_i32 = arith.constant 0 : i32
    %c0_i32_0 = arith.constant 0 : i32
    %c0_i32_1 = arith.constant 0 : i32
    return %c0_i32, %c0_i32_0 : i32, i32
  }
  func.func @transform_5(%arg0: i32, %arg1: memref<8xi32, #tpu.memory_space<smem>>) -> (i32, i32) {
    %c0_i32 = arith.constant 0 : i32
    %c0_i32_0 = arith.constant 0 : i32
    %c0_i32_1 = arith.constant 0 : i32
    return %c0_i32, %c0_i32_0 : i32, i32
  }
  func.func @transform_6(%arg0: i32, %arg1: memref<8xi32, #tpu.memory_space<smem>>) -> (i32, i32) {
    %c0_i32 = arith.constant 0 : i32
    %c0_i32_0 = arith.constant 0 : i32
    %c0_i32_1 = arith.constant 0 : i32
    return %c0_i32, %c0_i32_0 : i32, i32
  }
  func.func @transform_7(%arg0: i32, %arg1: memref<8xi32, #tpu.memory_space<smem>>) -> (i32, i32) {
    %c0_i32 = arith.constant 0 : i32
    %c0_i32_0 = arith.constant 0 : i32
    %c0_i32_1 = arith.constant 0 : i32
    return %c0_i32, %c0_i32_0 : i32, i32
  }
  func.func @transform_8(%arg0: i32, %arg1: memref<8xi32, #tpu.memory_space<smem>>) -> (i32, i32) {
    %c0_i32 = arith.constant 0 : i32
    %c0_i32_0 = arith.constant 0 : i32
    %c0_i32_1 = arith.constant 0 : i32
    return %c0_i32, %c0_i32_0 : i32, i32
  }
  func.func @transform_9(%arg0: i32, %arg1: memref<8xi32, #tpu.memory_space<smem>>) -> (i32, i32) {
    %c0_i32 = arith.constant 0 : i32
    %c0_i32_0 = arith.constant 0 : i32
    %c0_i32_1 = arith.constant 0 : i32
    return %c0_i32, %c0_i32_0 : i32, i32
  }
  func.func @transform_10(%arg0: i32, %arg1: memref<8xi32, #tpu.memory_space<smem>>) -> (i32, i32) {
    %c0_i32 = arith.constant 0 : i32
    %c0_i32_0 = arith.constant 0 : i32
    %c0_i32_1 = arith.constant 0 : i32
    return %c0_i32, %c0_i32_0 : i32, i32
  }
  func.func @transform_11(%arg0: i32, %arg1: memref<8xi32, #tpu.memory_space<smem>>) -> (i32, i32) {
    %c0_i32 = arith.constant 0 : i32
    %c0_i32_0 = arith.constant 0 : i32
    %c0_i32_1 = arith.constant 0 : i32
    return %c0_i32, %c0_i32_0 : i32, i32
  }
  func.func @transform_12(%arg0: i32, %arg1: memref<8xi32, #tpu.memory_space<smem>>) -> (i32, i32) {
    %c0_i32 = arith.constant 0 : i32
    %c0_i32_0 = arith.constant 0 : i32
    %c0_i32_1 = arith.constant 0 : i32
    return %c0_i32, %c0_i32_0 : i32, i32
  }
  func.func @transform_13(%arg0: i32, %arg1: memref<8xi32, #tpu.memory_space<smem>>) -> (i32, i32) {
    %c0_i32 = arith.constant 0 : i32
    %c0_i32_0 = arith.constant 0 : i32
    %c0_i32_1 = arith.constant 0 : i32
    return %c0_i32, %c0_i32_0 : i32, i32
  }
  func.func @transform_14(%arg0: i32, %arg1: memref<8xi32, #tpu.memory_space<smem>>) -> (i32, i32) {
    %c0_i32 = arith.constant 0 : i32
    %c0_i32_0 = arith.constant 0 : i32
    %c0_i32_1 = arith.constant 0 : i32
    return %c0_i32, %c0_i32_0 : i32, i32
  }
  func.func @transform_15(%arg0: i32, %arg1: memref<8xi32, #tpu.memory_space<smem>>) -> (i32, i32) {
    %c0_i32 = arith.constant 0 : i32
    %c0_i32_0 = arith.constant 0 : i32
    %c0_i32_1 = arith.constant 0 : i32
    return %c0_i32, %c0_i32_0 : i32, i32
  }
}

</mosaic_0001>

<llo_original>
// kernel: attn_decoder_forward.1
$region0: #{attn_decoder_forward.1}
  #allocation0 [shape = 'u32[]', space=smem, size = 0x4, offset = 0x4, fixed_abs, tag = 'smem constant byte address 0x4 - core index']
  #allocation1 [shape = 'u32[72,128]{1,0:T(1,128)}', space=vmem, size = 0x9000, scoped, tag = 'internal scratch']
  #allocation2 [shape = 's32[1]{0}', space=sflag, size = 0x4, scoped, tag = 'scoped memory for attn_decoder_forward.1']
  #allocation3 [shape = 'u8[512]{0}', space=smem, size = 0x200, scoped, tag = 'prefetched SMEM operand 0']
  %s0 = inlined_call_operand.vmem [shape: s32[8], index: 0, kind: input, shape index: {}]
  %s1 = inlined_call_operand.vmem [shape: f32[1,32], index: 1, kind: input, shape index: {}]
  %s2 = inlined_call_operand.vmem [shape: f32[8,32], index: 2, kind: input, shape index: {}]
  %s3 = inlined_call_operand.vmem [shape: f32[16,32], index: 3, kind: input, shape index: {}]
  %s4 = inlined_call_operand.vmem [shape: f32[64,8], index: 4, kind: input, shape index: {}]
  %s5 = inlined_call_operand.vmem [shape: f32[1,8], index: 5, kind: input, shape index: {}]
  %s6 = inlined_call_operand.vmem [shape: f32[64,32], index: 6, kind: input, shape index: {}]
  %s7 = inlined_call_operand.vmem [shape: f32[1,32], index: 7, kind: input, shape index: {}]
  %s8 = inlined_call_operand.vmem [shape: f32[32,96], index: 8, kind: input, shape index: {}]
  %s9 = inlined_call_operand.vmem [shape: f32[32,96], index: 9, kind: input, shape index: {}]
  %s10 = inlined_call_operand.vmem [shape: f32[1,96], index: 10, kind: input, shape index: {}]
  %s11 = inlined_call_operand.vmem [shape: f32[1,96], index: 11, kind: input, shape index: {}]
  %s12 = inlined_call_operand.vmem [shape: f32[32,16], index: 12, kind: input, shape index: {}]
  %s13 = inlined_call_operand.vmem [shape: f32[1,16], index: 13, kind: input, shape index: {}]
  %s14 = inlined_call_operand.hbm [shape: f32[8,16], index: 14, kind: output, shape index: {0}]
  %s15 = inlined_call_operand.hbm [shape: f32[1,32], index: 15, kind: output, shape index: {1}]
  %s16 = inlined_call_operand.hbm [shape: f32[8,8], index: 16, kind: output, shape index: {2}]
  %17 = xla_tuple %s14, %s15, %s16
  %s18 = sld [smem:[#allocation0]]
  $region78: #{attn_decoder_forward.1} parent=0
    _
  %s20 = ssub.s32 1, %s18
  %s21 = scalar_select 0, %s20, %s18
  %s23 = sshll.u32 %s0, 4
  %s24 = int_to_ptr.vmem [resolvable:$true] %s23
  %26 = dma.vmem_to_smem %s24, 16, [#allocation3], [#allocation2]
  %28 = dma.done [#allocation2], 16
  %29 = sfence
  $region1: #{attn_decoder_forward.1} parent=0
    #allocation4 [shape = 'u8[4096]{0}', space=vmem, size = 0x1000, scoped, tag = 'output window, operand 0, single buffered']
    #allocation5 [shape = 's32[1]{0}', space=sflag, size = 0x4, scoped, tag = 'scoped memory for attn_decoder_forward.1']
    #allocation6 [shape = 'u8[512]{0}', space=vmem, size = 0x400, scoped, tag = 'output window, operand 1, single buffered']
    #allocation7 [shape = 's32[1]{0}', space=sflag, size = 0x4, scoped, tag = 'scoped memory for attn_decoder_forward.1']
    #allocation8 [shape = 'u8[4096]{0}', space=vmem, size = 0x1000, scoped, tag = 'output window, operand 2, single buffered']
    %30 = vsyncpa [#allocation5], 0
    %31 = vsyncpa [#allocation7], 0
    // Predicated region
    $region2: #{attn_decoder_forward.1} parent=1 // pred_check
      _
    $region3: #{attn_decoder_forward.1} parent=1 // pred_check_branch
      %33 = sbr.rel (0) target = $region5
    $region4: #{attn_decoder_forward.1} parent=1 // pred_region
      _
    $region5: #{attn_decoder_forward.1} parent=1 // pred_fallthru
      _
    // Predicated region
    $region6: #{attn_decoder_forward.1} parent=1 // pred_check
      _
    $region7: #{attn_decoder_forward.1} parent=1 // pred_check_branch
      %35 = sbr.rel (0) target = $region9
    $region8: #{attn_decoder_forward.1} parent=1 // pred_region
      _
    $region9: #{attn_decoder_forward.1} parent=1 // pred_fallthru
      _
    // Predicated region
    $region10: #{attn_decoder_forward.1} parent=1 // pred_check
      _
    $region11: #{attn_decoder_forward.1} parent=1 // pred_check_branch
      %37 = sbr.rel (0) target = $region13
    $region12: #{attn_decoder_forward.1} parent=1 // pred_region
      _
    $region13: #{attn_decoder_forward.1} parent=1 // pred_fallthru
      _
    // Predicated region
    $region14: #{attn_decoder_forward.1} parent=1 // pred_check
      _
    $region15: #{attn_decoder_forward.1} parent=1 // pred_check_branch
      %39 = sbr.rel (0) target = $region17
    $region16: #{attn_decoder_forward.1} parent=1 // pred_region
      _
    $region17: #{attn_decoder_forward.1} parent=1 // pred_fallthru
      _
    // Predicated region
    $region18: #{attn_decoder_forward.1} parent=1 // pred_check
      _
    $region19: #{attn_decoder_forward.1} parent=1 // pred_check_branch
      %41 = sbr.rel (0) target = $region21
    $region20: #{attn_decoder_forward.1} parent=1 // pred_region
      _
    $region21: #{attn_decoder_forward.1} parent=1 // pred_fallthru
      _
    // Predicated region
    $region22: #{attn_decoder_forward.1} parent=1 // pred_check
      _
    $region23: #{attn_decoder_forward.1} parent=1 // pred_check_branch
      %43 = sbr.rel (0) target = $region25
    $region24: #{attn_decoder_forward.1} parent=1 // pred_region
      _
    $region25: #{attn_decoder_forward.1} parent=1 // pred_fallthru
      _
    // Predicated region
    $region26: #{attn_decoder_forward.1} parent=1 // pred_check
      _
    $region27: #{attn_decoder_forward.1} parent=1 // pred_check_branch
      %45 = sbr.rel (0) target = $region29
    $region28: #{attn_decoder_forward.1} parent=1 // pred_region
      _
    $region29: #{attn_decoder_forward.1} parent=1 // pred_fallthru
      _
    // Predicated region
    $region30: #{attn_decoder_forward.1} parent=1 // pred_check
      _
    $region31: #{attn_decoder_forward.1} parent=1 // pred_check_branch
      %47 = sbr.rel (0) target = $region33
    $region32: #{attn_decoder_forward.1} parent=1 // pred_region
      _
    $region33: #{attn_decoder_forward.1} parent=1 // pred_fallthru
      _
    // Predicated region
    $region34: #{attn_decoder_forward.1} parent=1 // pred_check
      _
    $region35: #{attn_decoder_forward.1} parent=1 // pred_check_branch
      %49 = sbr.rel (0) target = $region37
    $region36: #{attn_decoder_forward.1} parent=1 // pred_region
      _
    $region37: #{attn_decoder_forward.1} parent=1 // pred_fallthru
      _
    // Predicated region
    $region38: #{attn_decoder_forward.1} parent=1 // pred_check
      _
    $region39: #{attn_decoder_forward.1} parent=1 // pred_check_branch
      %51 = sbr.rel (0) target = $region41
    $region40: #{attn_decoder_forward.1} parent=1 // pred_region
      _
    $region41: #{attn_decoder_forward.1} parent=1 // pred_fallthru
      _
    // Predicated region
    $region42: #{attn_decoder_forward.1} parent=1 // pred_check
      _
    $region43: #{attn_decoder_forward.1} parent=1 // pred_check_branch
      %53 = sbr.rel (0) target = $region45
    $region44: #{attn_decoder_forward.1} parent=1 // pred_region
      _
    $region45: #{attn_decoder_forward.1} parent=1 // pred_fallthru
      _
    // Predicated region
    $region46: #{attn_decoder_forward.1} parent=1 // pred_check
      _
    $region47: #{attn_decoder_forward.1} parent=1 // pred_check_branch
      %55 = sbr.rel (0) target = $region49
    $region48: #{attn_decoder_forward.1} parent=1 // pred_region
      _
    $region49: #{attn_decoder_forward.1} parent=1 // pred_fallthru
      _
    // Predicated region
    $region50: #{attn_decoder_forward.1} parent=1 // pred_check
      _
    $region51: #{attn_decoder_forward.1} parent=1 // pred_check_branch
      %57 = sbr.rel (0) target = $region53
    $region52: #{attn_decoder_forward.1} parent=1 // pred_region
      _
    $region53: #{attn_decoder_forward.1} parent=1 // pred_fallthru
      _
    %v58 = vlaneseq
    %v59 = vand.u32 %v58, 127
    %v60 = vld [vmem:[%s3] sm:$0xff]
    %v61 = vld [vmem:[%s3 + $0x8] sm:$0xff]
    %v62 = vld [vmem:[%s2] sm:$0xff]
    %v63 = vld [vmem:[%s1] sm:$0x1]
    %s64 = sld [smem:[#allocation3]]
    %v65 = vstv %s64
    %vm66 = vcmp.eq.s32.totalorder %v59, %v65
    %v67 = vsel %vm66, 1, 0
    %v68 = vcvt.s32.f32 %v67
    %vm69 = vcmask 130048
    %v71 = vsel %vm69, %v68, 0
    %73 = vmatpush.msra.mxu0 0.0
    %74 = vmatpush.msra.mxu0 0.0
    %75 = vmatpush.msra.mxu0 0.0
    %76 = vmatpush.msra.mxu0 0.0
    %77 = vmatpush.msra.mxu0 0.0
    %78 = vmatpush.msra.mxu0 0.0
    %79 = vmatpush.msra.mxu0 0.0
    %80 = vmatpush.msra.mxu0 0.0
    %81 = vmatpush.msra.mxu0 0.0
    %82 = vmatpush.msra.mxu0 0.0
    %83 = vmatpush.msra.mxu0 0.0
    %84 = vmatpush.msra.mxu0 0.0
    %85 = vmatpush.msra.mxu0 0.0
    %86 = vmatpush.msra.mxu0 0.0
    %87 = vmatpush.msra.mxu0 %v61
    %88 = vmatpush.msra.mxu0 %v60
    %89 = vmatmul.f32.gmra.mxu0 %v71
    %v90 = vpop.f32.mrf.mxu0
    %v91 = vadd.f32 0.0, %v90
    %92 = vdwg.mxu0
    %v94 = vperm.slane %v63, 0
    %95 = vrot.lane.b32.xlu0 %v94, 32
    %v96 = vpop.permute.xlu0 %95
    %vm98 = vcmask 261120
    %v99 = vsel %vm98, %v91, %v96
    %v100 = vld [vmem:[%s4] sm:$0xff]
    %v101 = vld [vmem:[%s4 + $0x8] sm:$0xff]
    %v102 = vld [vmem:[%s4 + $0x10] sm:$0xff]
    %v103 = vld [vmem:[%s4 + $0x18] sm:$0xff]
    %v104 = vld [vmem:[%s4 + $0x20] sm:$0xff]
    %v105 = vld [vmem:[%s4 + $0x28] sm:$0xff]
    %v106 = vld [vmem:[%s4 + $0x30] sm:$0xff]
    %v107 = vld [vmem:[%s4 + $0x38] sm:$0xff]
    %v108 = vld [vmem:[%s5] sm:$0x1]
    %vm109 = vcmask 523264
    %v111 = vsel %vm109, %v99, 0
    %113 = vmatpush.msra.mxu0 0.0
    %114 = vmatpush.msra.mxu0 0.0
    %115 = vmatpush.msra.mxu0 0.0
    %116 = vmatpush.msra.mxu0 0.0
    %117 = vmatpush.msra.mxu0 0.0
    %118 = vmatpush.msra.mxu0 0.0
    %119 = vmatpush.msra.mxu0 0.0
    %120 = vmatpush.msra.mxu0 0.0
    %121 = vmatpush.msra.mxu0 %v107
    %122 = vmatpush.msra.mxu0 %v106
    %123 = vmatpush.msra.mxu0 %v105
    %124 = vmatpush.msra.mxu0 %v104
    %125 = vmatpush.msra.mxu0 %v103
    %126 = vmatpush.msra.mxu0 %v102
    %127 = vmatpush.msra.mxu0 %v101
    %128 = vmatpush.msra.mxu0 %v100
    %129 = vmatmul.f32.gmra.mxu0 %v111
    %v130 = vpop.f32.mrf.mxu0
    %v131 = vadd.f32 %v108, %v130
    %132 = vdwg.mxu0
    %vm133 = vcmask 57344
    %v134 = vsel %vm133, %v131, -inf
    %135 = vmax.xlane.f32.xlu0 %v134
    %v136 = vpop.xlane.xlu0 %135
    %v137 = vsub.f32 %v131, %v136
    %v138 = vmul.f32 %v137, 1.442695
    %v139 = vpow.pop %v138
    %v140 = vsel %vm133, %v139, 0.0
    %141 = vadd.xlane.f32.xlu0 %v140
    %v142 = vpop.xlane.xlu0 %141
    %v143 = vrcp.pop %v142
    %v144 = vmul.f32 %v142, %v143
    %v145 = vsub.f32 1.0, %v144
    %v146 = vmul.f32 %v143, %v145
    %v147 = vadd.f32 %v143, %v146
    %vm148 = vweird.f32 %v142
    %vm149 = vweird.f32 %v143
    %vm150 = vmor %vm148, %vm149
    %v151 = vsel %vm150, %v143, %v147
    %v152 = vand.u32 2147483647, %v142
    %vm153 = vcmp.eq.f32.partialorder %v152, 8.507059e+37
    %v154 = vand.u32 %v142, 2147483648
    %v155 = vor.u32 1.1754944e-38, %v154
    %v156 = vsel %vm153, %v155, %v151
    %v157 = vmul.f32 %v139, %v156
    %158 = vst.msk [vmem:[#allocation8] sm:$0x1] %vm133, %v157
    %vm159 = vcmask 64512
    %v161 = vsel %vm159, %v157, 0
    %163 = vmatpush.msra.mxu0 0.0
    %164 = vmatpush.msra.mxu0 0.0
    %165 = vmatpush.msra.mxu0 0.0
    %166 = vmatpush.msra.mxu0 0.0
    %167 = vmatpush.msra.mxu0 0.0
    %168 = vmatpush.msra.mxu0 0.0
    %169 = vmatpush.msra.mxu0 0.0
    %170 = vmatpush.msra.mxu0 0.0
    %171 = vmatpush.msra.mxu0 0.0
    %172 = vmatpush.msra.mxu0 0.0
    %173 = vmatpush.msra.mxu0 0.0
    %174 = vmatpush.msra.mxu0 0.0
    %175 = vmatpush.msra.mxu0 0.0
    %176 = vmatpush.msra.mxu0 0.0
    %177 = vmatpush.msra.mxu0 0.0
    %178 = vmatpush.msra.mxu0 %v62
    %179 = vmatmul.f32.gmra.mxu0 %v161
    %v180 = vpop.f32.mrf.mxu0
    %v181 = vadd.f32 0.0, %v180
    %182 = vdwg.mxu0
    %184 = vrot.lane.b32.xlu0 %v181, 32
    %v185 = vpop.permute.xlu0 %184
    %v187 = vsel %vm98, %v91, %v185
    %v188 = vld [vmem:[%s6] sm:$0xff]
    %v189 = vld [vmem:[%s6 + $0x8] sm:$0xff]
    %v190 = vld [vmem:[%s6 + $0x10] sm:$0xff]
    %v191 = vld [vmem:[%s6 + $0x18] sm:$0xff]
    %v192 = vld [vmem:[%s6 + $0x20] sm:$0xff]
    %v193 = vld [vmem:[%s6 + $0x28] sm:$0xff]
    %v194 = vld [vmem:[%s6 + $0x30] sm:$0xff]
    %v195 = vld [vmem:[%s6 + $0x38] sm:$0xff]
    %v196 = vld [vmem:[%s7] sm:$0x1]
    %v198 = vsel %vm109, %v187, 0
    %200 = vmatpush.msra.mxu0 0.0
    %201 = vmatpush.msra.mxu0 0.0
    %202 = vmatpush.msra.mxu0 0.0
    %203 = vmatpush.msra.mxu0 0.0
    %204 = vmatpush.msra.mxu0 0.0
    %205 = vmatpush.msra.mxu0 0.0
    %206 = vmatpush.msra.mxu0 0.0
    %207 = vmatpush.msra.mxu0 0.0
    %208 = vmatpush.msra.mxu0 %v195
    %209 = vmatpush.msra.mxu0 %v194
    %210 = vmatpush.msra.mxu0 %v193
    %211 = vmatpush.msra.mxu0 %v192
    %212 = vmatpush.msra.mxu0 %v191
    %213 = vmatpush.msra.mxu0 %v190
    %214 = vmatpush.msra.mxu0 %v189
    %215 = vmatpush.msra.mxu0 %v188
    %216 = vmatmul.f32.gmra.mxu0 %v198
    %v217 = vpop.f32.mrf.mxu0
    %v218 = vadd.f32 %v196, %v217
    %219 = vdwg.mxu0
    %v220 = vmax.f32 %v218, 0.0
    %v221 = vld [vmem:[%s8] sm:$0xff]
    %v222 = vld [vmem:[%s8 + $0x8] sm:$0xff]
    %v223 = vld [vmem:[%s8 + $0x10] sm:$0xff]
    %v224 = vld [vmem:[%s8 + $0x18] sm:$0xff]
    %v225 = vld [vmem:[%s10] sm:$0x1]
    %v227 = vsel %vm98, %v220, 0
    %229 = vmatpush.msra.mxu0 0.0
    %230 = vmatpush.msra.mxu0 0.0
    %231 = vmatpush.msra.mxu0 0.0
    %232 = vmatpush.msra.mxu0 0.0
    %233 = vmatpush.msra.mxu0 0.0
    %234 = vmatpush.msra.mxu0 0.0
    %235 = vmatpush.msra.mxu0 0.0
    %236 = vmatpush.msra.mxu0 0.0
    %237 = vmatpush.msra.mxu0 0.0
    %238 = vmatpush.msra.mxu0 0.0
    %239 = vmatpush.msra.mxu0 0.0
    %240 = vmatpush.msra.mxu0 0.0
    %241 = vmatpush.msra.mxu0 %v224
    %242 = vmatpush.msra.mxu0 %v223
    %243 = vmatpush.msra.mxu0 %v222
    %244 = vmatpush.msra.mxu0 %v221
    %245 = vmatmul.f32.gmra.mxu0 %v227
    %v246 = vpop.f32.mrf.mxu0
    %v247 = vadd.f32 %v225, %v246
    %248 = vdwg.mxu0
    %v249 = vld [vmem:[%s9] sm:$0xff]
    %v250 = vld [vmem:[%s9 + $0x8] sm:$0xff]
    %v251 = vld [vmem:[%s9 + $0x10] sm:$0xff]
    %v252 = vld [vmem:[%s9 + $0x18] sm:$0xff]
    %v253 = vld [vmem:[%s11] sm:$0x1]
    %v254 = vsel %vm98, %v63, 0
    %256 = vmatpush.msra.mxu0 0.0
    %257 = vmatpush.msra.mxu0 0.0
    %258 = vmatpush.msra.mxu0 0.0
    %259 = vmatpush.msra.mxu0 0.0
    %260 = vmatpush.msra.mxu0 0.0
    %261 = vmatpush.msra.mxu0 0.0
    %262 = vmatpush.msra.mxu0 0.0
    %263 = vmatpush.msra.mxu0 0.0
    %264 = vmatpush.msra.mxu0 0.0
    %265 = vmatpush.msra.mxu0 0.0
    %266 = vmatpush.msra.mxu0 0.0
    %267 = vmatpush.msra.mxu0 0.0
    %268 = vmatpush.msra.mxu0 %v252
    %269 = vmatpush.msra.mxu0 %v251
    %270 = vmatpush.msra.mxu0 %v250
    %271 = vmatpush.msra.mxu0 %v249
    %272 = vmatmul.f32.gmra.mxu0 %v254
    %v273 = vpop.f32.mrf.mxu0
    %v274 = vadd.f32 %v253, %v273
    %275 = vdwg.mxu0
    %v276 = vadd.f32 %v247, %v274
    %v277 = vxor.u32 %v276, 2147483648
    %v278 = vmul.f32 %v277, 1.442695
    %v279 = vpow.pop %v278
    %v280 = vadd.f32 %v279, 1.0
    %v281 = vrcp.pop %v280
    %v282 = vmul.f32 %v280, %v281
    %v283 = vsub.f32 1.0, %v282
    %v284 = vmul.f32 %v281, %v283
    %v285 = vadd.f32 %v281, %v284
    %vm286 = vweird.f32 %v280
    %vm287 = vweird.f32 %v281
    %vm288 = vmor %vm286, %vm287
    %v289 = vsel %vm288, %v281, %v285
    %v290 = vand.u32 2147483647, %v280
    %vm291 = vcmp.eq.f32.partialorder %v290, 8.507059e+37
    %v292 = vand.u32 %v280, 2147483648
    %v293 = vor.u32 1.1754944e-38, %v292
    %v294 = vsel %vm291, %v293, %v289
    %v295 = vmul.f32 1.0, %v294
    %297 = vrot.lane.b32.xlu0 %v274, 64
    %v298 = vpop.permute.xlu0 %297
    %v300 = vmul.f32 %v295, %v298
    %302 = vrot.lane.b32.xlu0 %v300, 64
    %v303 = vpop.permute.xlu0 %302
    %v305 = vadd.f32 %v247, %v303
    %v306 = vtanh.pop %v305
    %v307 = vsub.f32 1.0, %v295
    %309 = vrot.lane.b32.xlu0 %v306, 96
    %v310 = vpop.permute.xlu0 %309
    %v312 = vmul.f32 %v307, %v310
    %v313 = vmul.f32 %v295, %v96
    %v314 = vadd.f32 %v312, %v313
    %v315 = vld [vmem:[%s12] sm:$0xff]
    %v316 = vld [vmem:[%s12 + $0x8] sm:$0xff]
    %v317 = vld [vmem:[%s12 + $0x10] sm:$0xff]
    %v318 = vld [vmem:[%s12 + $0x18] sm:$0xff]
    %v319 = vld [vmem:[%s13] sm:$0x1]
    %321 = vrot.lane.b32.xlu0 %v314, 96
    %v322 = vpop.permute.xlu0 %321
    %v323 = vsel %vm98, %v322, 0
    %325 = vmatpush.msra.mxu0 0.0
    %326 = vmatpush.msra.mxu0 0.0
    %327 = vmatpush.msra.mxu0 0.0
    %328 = vmatpush.msra.mxu0 0.0
    %329 = vmatpush.msra.mxu0 0.0
    %330 = vmatpush.msra.mxu0 0.0
    %331 = vmatpush.msra.mxu0 0.0
    %332 = vmatpush.msra.mxu0 0.0
    %333 = vmatpush.msra.mxu0 0.0
    %334 = vmatpush.msra.mxu0 0.0
    %335 = vmatpush.msra.mxu0 0.0
    %336 = vmatpush.msra.mxu0 0.0
    %337 = vmatpush.msra.mxu0 %v318
    %338 = vmatpush.msra.mxu0 %v317
    %339 = vmatpush.msra.mxu0 %v316
    %340 = vmatpush.msra.mxu0 %v315
    %341 = vmatmul.f32.gmra.mxu0 %v323
    %v342 = vpop.f32.mrf.mxu0
    %v343 = vadd.f32 %v319, %v342
    %344 = vdwg.mxu0
    %vm345 = vcmask 122880
    %v346 = vsel %vm345, %v343, -inf
    %347 = vmax.xlane.f32.xlu0 %v346
    %v348 = vpop.xlane.xlu0 %347
    %v349 = vsub.f32 %v343, %v348
    %v350 = vmul.f32 %v349, 1.442695
    %v351 = vpow.pop %v350
    %v352 = vsel %vm345, %v351, 0.0
    %353 = vadd.xlane.f32.xlu0 %v352
    %v354 = vpop.xlane.xlu0 %353
    %v355 = vlog2.pop %v354
    %v356 = vmul.f32 %v355, 0.6931472
    %v357 = vadd.f32 %v348, %v356
    %v358 = vsub.f32 %v343, %v357
    %359 = vst.msk [vmem:[#allocation4] sm:$0x1] %vm345, %v358
    %s360 = sld [smem:[#allocation3 + $0x1]]
    %v361 = vstv %s360
    %vm362 = vcmp.eq.s32.totalorder %v59, %v361
    %v363 = vsel %vm362, 1, 0
    %v364 = vcvt.s32.f32 %v363
    %v366 = vsel %vm69, %v364, 0
    %368 = vmatpush.msra.mxu0 0.0
    %369 = vmatpush.msra.mxu0 0.0
    %370 = vmatpush.msra.mxu0 0.0
    %371 = vmatpush.msra.mxu0 0.0
    %372 = vmatpush.msra.mxu0 0.0
    %373 = vmatpush.msra.mxu0 0.0
    %374 = vmatpush.msra.mxu0 0.0
    %375 = vmatpush.msra.mxu0 0.0
    %376 = vmatpush.msra.mxu0 0.0
    %377 = vmatpush.msra.mxu0 0.0
    %378 = vmatpush.msra.mxu0 0.0
    %379 = vmatpush.msra.mxu0 0.0
    %380 = vmatpush.msra.mxu0 0.0
    %381 = vmatpush.msra.mxu0 0.0
    %382 = vmatpush.msra.mxu0 %v61
    %383 = vmatpush.msra.mxu0 %v60
    %384 = vmatmul.f32.gmra.mxu0 %v366
    %v385 = vpop.f32.mrf.mxu0
    %v386 = vadd.f32 0.0, %v385
    %387 = vdwg.mxu0
    %v388 = vsel %vm98, %v386, %v314
    %v389 = vld [vmem:[%s4] sm:$0xff]
    %v390 = vld [vmem:[%s4 + $0x8] sm:$0xff]
    %v391 = vld [vmem:[%s4 + $0x10] sm:$0xff]
    %v392 = vld [vmem:[%s4 + $0x18] sm:$0xff]
    %v393 = vld [vmem:[%s4 + $0x20] sm:$0xff]
    %v394 = vld [vmem:[%s4 + $0x28] sm:$0xff]
    %v395 = vld [vmem:[%s4 + $0x30] sm:$0xff]
    %v396 = vld [vmem:[%s4 + $0x38] sm:$0xff]
    %v397 = vld [vmem:[%s5] sm:$0x1]
    %v399 = vsel %vm109, %v388, 0
    %401 = vmatpush.msra.mxu0 0.0
    %402 = vmatpush.msra.mxu0 0.0
    %403 = vmatpush.msra.mxu0 0.0
    %404 = vmatpush.msra.mxu0 0.0
    %405 = vmatpush.msra.mxu0 0.0
    %406 = vmatpush.msra.mxu0 0.0
    %407 = vmatpush.msra.mxu0 0.0
    %408 = vmatpush.msra.mxu0 0.0
    %409 = vmatpush.msra.mxu0 %v396
    %410 = vmatpush.msra.mxu0 %v395
    %411 = vmatpush.msra.mxu0 %v394
    %412 = vmatpush.msra.mxu0 %v393
    %413 = vmatpush.msra.mxu0 %v392
    %414 = vmatpush.msra.mxu0 %v391
    %415 = vmatpush.msra.mxu0 %v390
    %416 = vmatpush.msra.mxu0 %v389
    %417 = vmatmul.f32.gmra.mxu0 %v399
    %v418 = vpop.f32.mrf.mxu0
    %v419 = vadd.f32 %v397, %v418
    %420 = vdwg.mxu0
    %v421 = vsel %vm133, %v419, -inf
    %422 = vmax.xlane.f32.xlu0 %v421
    %v423 = vpop.xlane.xlu0 %422
    %v424 = vsub.f32 %v419, %v423
    %v425 = vmul.f32 %v424, 1.442695
    %v426 = vpow.pop %v425
    %v427 = vsel %vm133, %v426, 0.0
    %428 = vadd.xlane.f32.xlu0 %v427
    %v429 = vpop.xlane.xlu0 %428
    %v430 = vrcp.pop %v429
    %v431 = vmul.f32 %v429, %v430
    %v432 = vsub.f32 1.0, %v431
    %v433 = vmul.f32 %v430, %v432
    %v434 = vadd.f32 %v430, %v433
    %vm435 = vweird.f32 %v429
    %vm436 = vweird.f32 %v430
    %vm437 = vmor %vm435, %vm436
    %v438 = vsel %vm437, %v430, %v434
    %v439 = vand.u32 2147483647, %v429
    %vm440 = vcmp.eq.f32.partialorder %v439, 8.507059e+37
    %v441 = vand.u32 %v429, 2147483648
    %v442 = vor.u32 1.1754944e-38, %v441
    %v443 = vsel %vm440, %v442, %v438
    %v444 = vmul.f32 %v426, %v443
    %445 = vst.msk [vmem:[#allocation8 + $0x1] sm:$0x1] %vm133, %v444
    %v447 = vsel %vm159, %v444, 0
    %449 = vmatpush.msra.mxu0 0.0
    %450 = vmatpush.msra.mxu0 0.0
    %451 = vmatpush.msra.mxu0 0.0
    %452 = vmatpush.msra.mxu0 0.0
    %453 = vmatpush.msra.mxu0 0.0
    %454 = vmatpush.msra.mxu0 0.0
    %455 = vmatpush.msra.mxu0 0.0
    %456 = vmatpush.msra.mxu0 0.0
    %457 = vmatpush.msra.mxu0 0.0
    %458 = vmatpush.msra.mxu0 0.0
    %459 = vmatpush.msra.mxu0 0.0
    %460 = vmatpush.msra.mxu0 0.0
    %461 = vmatpush.msra.mxu0 0.0
    %462 = vmatpush.msra.mxu0 0.0
    %463 = vmatpush.msra.mxu0 0.0
    %464 = vmatpush.msra.mxu0 %v62
    %465 = vmatmul.f32.gmra.mxu0 %v447
    %v466 = vpop.f32.mrf.mxu0
    %v467 = vadd.f32 0.0, %v466
    %468 = vdwg.mxu0
    %470 = vrot.lane.b32.xlu0 %v467, 32
    %v471 = vpop.permute.xlu0 %470
    %v473 = vsel %vm98, %v386, %v471
    %v474 = vld [vmem:[%s6] sm:$0xff]
    %v475 = vld [vmem:[%s6 + $0x8] sm:$0xff]
    %v476 = vld [vmem:[%s6 + $0x10] sm:$0xff]
    %v477 = vld [vmem:[%s6 + $0x18] sm:$0xff]
    %v478 = vld [vmem:[%s6 + $0x20] sm:$0xff]
    %v479 = vld [vmem:[%s6 + $0x28] sm:$0xff]
    %v480 = vld [vmem:[%s6 + $0x30] sm:$0xff]
    %v481 = vld [vmem:[%s6 + $0x38] sm:$0xff]
    %v482 = vld [vmem:[%s7] sm:$0x1]
    %v484 = vsel %vm109, %v473, 0
    %486 = vmatpush.msra.mxu0 0.0
    %487 = vmatpush.msra.mxu0 0.0
    %488 = vmatpush.msra.mxu0 0.0
    %489 = vmatpush.msra.mxu0 0.0
    %490 = vmatpush.msra.mxu0 0.0
    %491 = vmatpush.msra.mxu0 0.0
    %492 = vmatpush.msra.mxu0 0.0
    %493 = vmatpush.msra.mxu0 0.0
    %494 = vmatpush.msra.mxu0 %v481
    %495 = vmatpush.msra.mxu0 %v480
    %496 = vmatpush.msra.mxu0 %v479
    %497 = vmatpush.msra.mxu0 %v478
    %498 = vmatpush.msra.mxu0 %v477
    %499 = vmatpush.msra.mxu0 %v476
    %500 = vmatpush.msra.mxu0 %v475
    %501 = vmatpush.msra.mxu0 %v474
    %502 = vmatmul.f32.gmra.mxu0 %v484
    %v503 = vpop.f32.mrf.mxu0
    %v504 = vadd.f32 %v482, %v503
    %505 = vdwg.mxu0
    %v506 = vmax.f32 %v504, 0.0
    %v507 = vld [vmem:[%s8] sm:$0xff]
    %v508 = vld [vmem:[%s8 + $0x8] sm:$0xff]
    %v509 = vld [vmem:[%s8 + $0x10] sm:$0xff]
    %v510 = vld [vmem:[%s8 + $0x18] sm:$0xff]
    %v511 = vld [vmem:[%s10] sm:$0x1]
    %v513 = vsel %vm98, %v506, 0
    %515 = vmatpush.msra.mxu0 0.0
    %516 = vmatpush.msra.mxu0 0.0
    %517 = vmatpush.msra.mxu0 0.0
    %518 = vmatpush.msra.mxu0 0.0
    %519 = vmatpush.msra.mxu0 0.0
    %520 = vmatpush.msra.mxu0 0.0
    %521 = vmatpush.msra.mxu0 0.0
    %522 = vmatpush.msra.mxu0 0.0
    %523 = vmatpush.msra.mxu0 0.0
    %524 = vmatpush.msra.mxu0 0.0
    %525 = vmatpush.msra.mxu0 0.0
    %526 = vmatpush.msra.mxu0 0.0
    %527 = vmatpush.msra.mxu0 %v510
    %528 = vmatpush.msra.mxu0 %v509
    %529 = vmatpush.msra.mxu0 %v508
    %530 = vmatpush.msra.mxu0 %v507
    %531 = vmatmul.f32.gmra.mxu0 %v513
    %v532 = vpop.f32.mrf.mxu0
    %v533 = vadd.f32 %v511, %v532
    %534 = vdwg.mxu0
    %v535 = vld [vmem:[%s9] sm:$0xff]
    %v536 = vld [vmem:[%s9 + $0x8] sm:$0xff]
    %v537 = vld [vmem:[%s9 + $0x10] sm:$0xff]
    %v538 = vld [vmem:[%s9 + $0x18] sm:$0xff]
    %v539 = vld [vmem:[%s11] sm:$0x1]
    %540 = vmatpush.msra.mxu0 0.0
    %541 = vmatpush.msra.mxu0 0.0
    %542 = vmatpush.msra.mxu0 0.0
    %543 = vmatpush.msra.mxu0 0.0
    %544 = vmatpush.msra.mxu0 0.0
    %545 = vmatpush.msra.mxu0 0.0
    %546 = vmatpush.msra.mxu0 0.0
    %547 = vmatpush.msra.mxu0 0.0
    %548 = vmatpush.msra.mxu0 0.0
    %549 = vmatpush.msra.mxu0 0.0
    %550 = vmatpush.msra.mxu0 0.0
    %551 = vmatpush.msra.mxu0 0.0
    %552 = vmatpush.msra.mxu0 %v538
    %553 = vmatpush.msra.mxu0 %v537
    %554 = vmatpush.msra.mxu0 %v536
    %555 = vmatpush.msra.mxu0 %v535
    %556 = vmatmul.f32.gmra.mxu0 %v323
    %v557 = vpop.f32.mrf.mxu0
    %v558 = vadd.f32 %v539, %v557
    %559 = vdwg.mxu0
    %v560 = vadd.f32 %v533, %v558
    %v561 = vxor.u32 %v560, 2147483648
    %v562 = vmul.f32 %v561, 1.442695
    %v563 = vpow.pop %v562
    %v564 = vadd.f32 %v563, 1.0
    %v565 = vrcp.pop %v564
    %v566 = vmul.f32 %v564, %v565
    %v567 = vsub.f32 1.0, %v566
    %v568 = vmul.f32 %v565, %v567
    %v569 = vadd.f32 %v565, %v568
    %vm570 = vweird.f32 %v564
    %vm571 = vweird.f32 %v565
    %vm572 = vmor %vm570, %vm571
    %v573 = vsel %vm572, %v565, %v569
    %v574 = vand.u32 2147483647, %v564
    %vm575 = vcmp.eq.f32.partialorder %v574, 8.507059e+37
    %v576 = vand.u32 %v564, 2147483648
    %v577 = vor.u32 1.1754944e-38, %v576
    %v578 = vsel %vm575, %v577, %v573
    %v579 = vmul.f32 1.0, %v578
    %581 = vrot.lane.b32.xlu0 %v558, 64
    %v582 = vpop.permute.xlu0 %581
    %v584 = vmul.f32 %v579, %v582
    %586 = vrot.lane.b32.xlu0 %v584, 64
    %v587 = vpop.permute.xlu0 %586
    %v589 = vadd.f32 %v533, %v587
    %v590 = vtanh.pop %v589
    %v591 = vsub.f32 1.0, %v579
    %593 = vrot.lane.b32.xlu0 %v590, 96
    %v594 = vpop.permute.xlu0 %593
    %v596 = vmul.f32 %v591, %v594
    %v597 = vmul.f32 %v579, %v314
    %v598 = vadd.f32 %v596, %v597
    %v599 = vld [vmem:[%s12] sm:$0xff]
    %v600 = vld [vmem:[%s12 + $0x8] sm:$0xff]
    %v601 = vld [vmem:[%s12 + $0x10] sm:$0xff]
    %v602 = vld [vmem:[%s12 + $0x18] sm:$0xff]
    %v603 = vld [vmem:[%s13] sm:$0x1]
    %605 = vrot.lane.b32.xlu0 %v598, 96
    %v606 = vpop.permute.xlu0 %605
    %v607 = vsel %vm98, %v606, 0
    %609 = vmatpush.msra.mxu0 0.0
    %610 = vmatpush.msra.mxu0 0.0
    %611 = vmatpush.msra.mxu0 0.0
    %612 = vmatpush.msra.mxu0 0.0
    %613 = vmatpush.msra.mxu0 0.0
    %614 = vmatpush.msra.mxu0 0.0
    %615 = vmatpush.msra.mxu0 0.0
    %616 = vmatpush.msra.mxu0 0.0
    %617 = vmatpush.msra.mxu0 0.0
    %618 = vmatpush.msra.mxu0 0.0
    %619 = vmatpush.msra.mxu0 0.0
    %620 = vmatpush.msra.mxu0 0.0
    %621 = vmatpush.msra.mxu0 %v602
    %622 = vmatpush.msra.mxu0 %v601
    %623 = vmatpush.msra.mxu0 %v600
    %624 = vmatpush.msra.mxu0 %v599
    %625 = vmatmul.f32.gmra.mxu0 %v607
    %v626 = vpop.f32.mrf.mxu0
    %v627 = vadd.f32 %v603, %v626
    %628 = vdwg.mxu0
    %v629 = vsel %vm345, %v627, -inf
    %630 = vmax.xlane.f32.xlu0 %v629
    %v631 = vpop.xlane.xlu0 %630
    %v632 = vsub.f32 %v627, %v631
    %v633 = vmul.f32 %v632, 1.442695
    %v634 = vpow.pop %v633
    %v635 = vsel %vm345, %v634, 0.0
    %636 = vadd.xlane.f32.xlu0 %v635
    %v637 = vpop.xlane.xlu0 %636
    %v638 = vlog2.pop %v637
    %v639 = vmul.f32 %v638, 0.6931472
    %v640 = vadd.f32 %v631, %v639
    %v641 = vsub.f32 %v627, %v640
    %642 = vst.msk [vmem:[#allocation4 + $0x1] sm:$0x1] %vm345, %v641
    %s643 = sld [smem:[#allocation3 + $0x2]]
    %v644 = vstv %s643
    %vm645 = vcmp.eq.s32.totalorder %v59, %v644
    %v646 = vsel %vm645, 1, 0
    %v647 = vcvt.s32.f32 %v646
    %v649 = vsel %vm69, %v647, 0
    %651 = vmatpush.msra.mxu0 0.0
    %652 = vmatpush.msra.mxu0 0.0
    %653 = vmatpush.msra.mxu0 0.0
    %654 = vmatpush.msra.mxu0 0.0
    %655 = vmatpush.msra.mxu0 0.0
    %656 = vmatpush.msra.mxu0 0.0
    %657 = vmatpush.msra.mxu0 0.0
    %658 = vmatpush.msra.mxu0 0.0
    %659 = vmatpush.msra.mxu0 0.0
    %660 = vmatpush.msra.mxu0 0.0
    %661 = vmatpush.msra.mxu0 0.0
    %662 = vmatpush.msra.mxu0 0.0
    %663 = vmatpush.msra.mxu0 0.0
    %664 = vmatpush.msra.mxu0 0.0
    %665 = vmatpush.msra.mxu0 %v61
    %666 = vmatpush.msra.mxu0 %v60
    %667 = vmatmul.f32.gmra.mxu0 %v649
    %v668 = vpop.f32.mrf.mxu0
    %v669 = vadd.f32 0.0, %v668
    %670 = vdwg.mxu0
    %v671 = vsel %vm98, %v669, %v598
    %v672 = vld [vmem:[%s4] sm:$0xff]
    %v673 = vld [vmem:[%s4 + $0x8] sm:$0xff]
    %v674 = vld [vmem:[%s4 + $0x10] sm:$0xff]
    %v675 = vld [vmem:[%s4 + $0x18] sm:$0xff]
    %v676 = vld [vmem:[%s4 + $0x20] sm:$0xff]
    %v677 = vld [vmem:[%s4 + $0x28] sm:$0xff]
    %v678 = vld [vmem:[%s4 + $0x30] sm:$0xff]
    %v679 = vld [vmem:[%s4 + $0x38] sm:$0xff]
    %v680 = vld [vmem:[%s5] sm:$0x1]
    %v682 = vsel %vm109, %v671, 0
    %684 = vmatpush.msra.mxu0 0.0
    %685 = vmatpush.msra.mxu0 0.0
    %686 = vmatpush.msra.mxu0 0.0
    %687 = vmatpush.msra.mxu0 0.0
    %688 = vmatpush.msra.mxu0 0.0
    %689 = vmatpush.msra.mxu0 0.0
    %690 = vmatpush.msra.mxu0 0.0
    %691 = vmatpush.msra.mxu0 0.0
    %692 = vmatpush.msra.mxu0 %v679
    %693 = vmatpush.msra.mxu0 %v678
    %694 = vmatpush.msra.mxu0 %v677
    %695 = vmatpush.msra.mxu0 %v676
    %696 = vmatpush.msra.mxu0 %v675
    %697 = vmatpush.msra.mxu0 %v674
    %698 = vmatpush.msra.mxu0 %v673
    %699 = vmatpush.msra.mxu0 %v672
    %700 = vmatmul.f32.gmra.mxu0 %v682
    %v701 = vpop.f32.mrf.mxu0
    %v702 = vadd.f32 %v680, %v701
    %703 = vdwg.mxu0
    %v704 = vsel %vm133, %v702, -inf
    %705 = vmax.xlane.f32.xlu0 %v704
    %v706 = vpop.xlane.xlu0 %705
    %v707 = vsub.f32 %v702, %v706
    %v708 = vmul.f32 %v707, 1.442695
    %v709 = vpow.pop %v708
    %v710 = vsel %vm133, %v709, 0.0
    %711 = vadd.xlane.f32.xlu0 %v710
    %v712 = vpop.xlane.xlu0 %711
    %v713 = vrcp.pop %v712
    %v714 = vmul.f32 %v712, %v713
    %v715 = vsub.f32 1.0, %v714
    %v716 = vmul.f32 %v713, %v715
    %v717 = vadd.f32 %v713, %v716
    %vm718 = vweird.f32 %v712
    %vm719 = vweird.f32 %v713
    %vm720 = vmor %vm718, %vm719
    %v721 = vsel %vm720, %v713, %v717
    %v722 = vand.u32 2147483647, %v712
    %vm723 = vcmp.eq.f32.partialorder %v722, 8.507059e+37
    %v724 = vand.u32 %v712, 2147483648
    %v725 = vor.u32 1.1754944e-38, %v724
    %v726 = vsel %vm723, %v725, %v721
    %v727 = vmul.f32 %v709, %v726
    %728 = vst.msk [vmem:[#allocation8 + $0x2] sm:$0x1] %vm133, %v727
    %v730 = vsel %vm159, %v727, 0
    %732 = vmatpush.msra.mxu0 0.0
    %733 = vmatpush.msra.mxu0 0.0
    %734 = vmatpush.msra.mxu0 0.0
    %735 = vmatpush.msra.mxu0 0.0
    %736 = vmatpush.msra.mxu0 0.0
    %737 = vmatpush.msra.mxu0 0.0
    %738 = vmatpush.msra.mxu0 0.0
    %739 = vmatpush.msra.mxu0 0.0
    %740 = vmatpush.msra.mxu0 0.0
    %741 = vmatpush.msra.mxu0 0.0
    %742 = vmatpush.msra.mxu0 0.0
    %743 = vmatpush.msra.mxu0 0.0
    %744 = vmatpush.msra.mxu0 0.0
    %745 = vmatpush.msra.mxu0 0.0
    %746 = vmatpush.msra.mxu0 0.0
    %747 = vmatpush.msra.mxu0 %v62
    %748 = vmatmul.f32.gmra.mxu0 %v730
    %v749 = vpop.f32.mrf.mxu0
    %v750 = vadd.f32 0.0, %v749
    %751 = vdwg.mxu0
    %753 = vrot.lane.b32.xlu0 %v750, 32
    %v754 = vpop.permute.xlu0 %753
    %v756 = vsel %vm98, %v669, %v754
    %v757 = vld [vmem:[%s6] sm:$0xff]
    %v758 = vld [vmem:[%s6 + $0x8] sm:$0xff]
    %v759 = vld [vmem:[%s6 + $0x10] sm:$0xff]
    %v760 = vld [vmem:[%s6 + $0x18] sm:$0xff]
    %v761 = vld [vmem:[%s6 + $0x20] sm:$0xff]
    %v762 = vld [vmem:[%s6 + $0x28] sm:$0xff]
    %v763 = vld [vmem:[%s6 + $0x30] sm:$0xff]
    %v764 = vld [vmem:[%s6 + $0x38] sm:$0xff]
    %v765 = vld [vmem:[%s7] sm:$0x1]
    %v767 = vsel %vm109, %v756, 0
    %769 = vmatpush.msra.mxu0 0.0
    %770 = vmatpush.msra.mxu0 0.0
    %771 = vmatpush.msra.mxu0 0.0
    %772 = vmatpush.msra.mxu0 0.0
    %773 = vmatpush.msra.mxu0 0.0
    %774 = vmatpush.msra.mxu0 0.0
    %775 = vmatpush.msra.mxu0 0.0
    %776 = vmatpush.msra.mxu0 0.0
    %777 = vmatpush.msra.mxu0 %v764
    %778 = vmatpush.msra.mxu0 %v763
    %779 = vmatpush.msra.mxu0 %v762
    %780 = vmatpush.msra.mxu0 %v761
    %781 = vmatpush.msra.mxu0 %v760
    %782 = vmatpush.msra.mxu0 %v759
    %783 = vmatpush.msra.mxu0 %v758
    %784 = vmatpush.msra.mxu0 %v757
    %785 = vmatmul.f32.gmra.mxu0 %v767
    %v786 = vpop.f32.mrf.mxu0
    %v787 = vadd.f32 %v765, %v786
    %788 = vdwg.mxu0
    %v789 = vmax.f32 %v787, 0.0
    %v790 = vld [vmem:[%s8] sm:$0xff]
    %v791 = vld [vmem:[%s8 + $0x8] sm:$0xff]
    %v792 = vld [vmem:[%s8 + $0x10] sm:$0xff]
    %v793 = vld [vmem:[%s8 + $0x18] sm:$0xff]
    %v794 = vld [vmem:[%s10] sm:$0x1]
    %v796 = vsel %vm98, %v789, 0
    %798 = vmatpush.msra.mxu0 0.0
    %799 = vmatpush.msra.mxu0 0.0
    %800 = vmatpush.msra.mxu0 0.0
    %801 = vmatpush.msra.mxu0 0.0
    %802 = vmatpush.msra.mxu0 0.0
    %803 = vmatpush.msra.mxu0 0.0
    %804 = vmatpush.msra.mxu0 0.0
    %805 = vmatpush.msra.mxu0 0.0
    %806 = vmatpush.msra.mxu0 0.0
    %807 = vmatpush.msra.mxu0 0.0
    %808 = vmatpush.msra.mxu0 0.0
    %809 = vmatpush.msra.mxu0 0.0
    %810 = vmatpush.msra.mxu0 %v793
    %811 = vmatpush.msra.mxu0 %v792
    %812 = vmatpush.msra.mxu0 %v791
    %813 = vmatpush.msra.mxu0 %v790
    %814 = vmatmul.f32.gmra.mxu0 %v796
    %v815 = vpop.f32.mrf.mxu0
    %v816 = vadd.f32 %v794, %v815
    %817 = vdwg.mxu0
    %v818 = vld [vmem:[%s9] sm:$0xff]
    %v819 = vld [vmem:[%s9 + $0x8] sm:$0xff]
    %v820 = vld [vmem:[%s9 + $0x10] sm:$0xff]
    %v821 = vld [vmem:[%s9 + $0x18] sm:$0xff]
    %v822 = vld [vmem:[%s11] sm:$0x1]
    %823 = vmatpush.msra.mxu0 0.0
    %824 = vmatpush.msra.mxu0 0.0
    %825 = vmatpush.msra.mxu0 0.0
    %826 = vmatpush.msra.mxu0 0.0
    %827 = vmatpush.msra.mxu0 0.0
    %828 = vmatpush.msra.mxu0 0.0
    %829 = vmatpush.msra.mxu0 0.0
    %830 = vmatpush.msra.mxu0 0.0
    %831 = vmatpush.msra.mxu0 0.0
    %832 = vmatpush.msra.mxu0 0.0
    %833 = vmatpush.msra.mxu0 0.0
    %834 = vmatpush.msra.mxu0 0.0
    %835 = vmatpush.msra.mxu0 %v821
    %836 = vmatpush.msra.mxu0 %v820
    %837 = vmatpush.msra.mxu0 %v819
    %838 = vmatpush.msra.mxu0 %v818
    %839 = vmatmul.f32.gmra.mxu0 %v607
    %v840 = vpop.f32.mrf.mxu0
    %v841 = vadd.f32 %v822, %v840
    %842 = vdwg.mxu0
    %v843 = vadd.f32 %v816, %v841
    %v844 = vxor.u32 %v843, 2147483648
    %v845 = vmul.f32 %v844, 1.442695
    %v846 = vpow.pop %v845
    %v847 = vadd.f32 %v846, 1.0
    %v848 = vrcp.pop %v847
    %v849 = vmul.f32 %v847, %v848
    %v850 = vsub.f32 1.0, %v849
    %v851 = vmul.f32 %v848, %v850
    %v852 = vadd.f32 %v848, %v851
    %vm853 = vweird.f32 %v847
    %vm854 = vweird.f32 %v848
    %vm855 = vmor %vm853, %vm854
    %v856 = vsel %vm855, %v848, %v852
    %v857 = vand.u32 2147483647, %v847
    %vm858 = vcmp.eq.f32.partialorder %v857, 8.507059e+37
    %v859 = vand.u32 %v847, 2147483648
    %v860 = vor.u32 1.1754944e-38, %v859
    %v861 = vsel %vm858, %v860, %v856
    %v862 = vmul.f32 1.0, %v861
    %864 = vrot.lane.b32.xlu0 %v841, 64
    %v865 = vpop.permute.xlu0 %864
    %v867 = vmul.f32 %v862, %v865
    %869 = vrot.lane.b32.xlu0 %v867, 64
    %v870 = vpop.permute.xlu0 %869
    %v872 = vadd.f32 %v816, %v870
    %v873 = vtanh.pop %v872
    %v874 = vsub.f32 1.0, %v862
    %876 = vrot.lane.b32.xlu0 %v873, 96
    %v877 = vpop.permute.xlu0 %876
    %v879 = vmul.f32 %v874, %v877
    %v880 = vmul.f32 %v862, %v598
    %v881 = vadd.f32 %v879, %v880
    %v882 = vld [vmem:[%s12] sm:$0xff]
    %v883 = vld [vmem:[%s12 + $0x8] sm:$0xff]
    %v884 = vld [vmem:[%s12 + $0x10] sm:$0xff]
    %v885 = vld [vmem:[%s12 + $0x18] sm:$0xff]
    %v886 = vld [vmem:[%s13] sm:$0x1]
    %888 = vrot.lane.b32.xlu0 %v881, 96
    %v889 = vpop.permute.xlu0 %888
    %v890 = vsel %vm98, %v889, 0
    %892 = vmatpush.msra.mxu0 0.0
    %893 = vmatpush.msra.mxu0 0.0
    %894 = vmatpush.msra.mxu0 0.0
    %895 = vmatpush.msra.mxu0 0.0
    %896 = vmatpush.msra.mxu0 0.0
    %897 = vmatpush.msra.mxu0 0.0
    %898 = vmatpush.msra.mxu0 0.0
    %899 = vmatpush.msra.mxu0 0.0
    %900 = vmatpush.msra.mxu0 0.0
    %901 = vmatpush.msra.mxu0 0.0
    %902 = vmatpush.msra.mxu0 0.0
    %903 = vmatpush.msra.mxu0 0.0
    %904 = vmatpush.msra.mxu0 %v885
    %905 = vmatpush.msra.mxu0 %v884
    %906 = vmatpush.msra.mxu0 %v883
    %907 = vmatpush.msra.mxu0 %v882
    %908 = vmatmul.f32.gmra.mxu0 %v890
    %v909 = vpop.f32.mrf.mxu0
    %v910 = vadd.f32 %v886, %v909
    %911 = vdwg.mxu0
    %v912 = vsel %vm345, %v910, -inf
    %913 = vmax.xlane.f32.xlu0 %v912
    %v914 = vpop.xlane.xlu0 %913
    %v915 = vsub.f32 %v910, %v914
    %v916 = vmul.f32 %v915, 1.442695
    %v917 = vpow.pop %v916
    %v918 = vsel %vm345, %v917, 0.0
    %919 = vadd.xlane.f32.xlu0 %v918
    %v920 = vpop.xlane.xlu0 %919
    %v921 = vlog2.pop %v920
    %v922 = vmul.f32 %v921, 0.6931472
    %v923 = vadd.f32 %v914, %v922
    %v924 = vsub.f32 %v910, %v923
    %925 = vst.msk [vmem:[#allocation4 + $0x2] sm:$0x1] %vm345, %v924
    %s926 = sld [smem:[#allocation3 + $0x3]]
    %v927 = vstv %s926
    %vm928 = vcmp.eq.s32.totalorder %v59, %v927
    %v929 = vsel %vm928, 1, 0
    %v930 = vcvt.s32.f32 %v929
    %v932 = vsel %vm69, %v930, 0
    %934 = vmatpush.msra.mxu0 0.0
    %935 = vmatpush.msra.mxu0 0.0
    %936 = vmatpush.msra.mxu0 0.0
    %937 = vmatpush.msra.mxu0 0.0
    %938 = vmatpush.msra.mxu0 0.0
    %939 = vmatpush.msra.mxu0 0.0
    %940 = vmatpush.msra.mxu0 0.0
    %941 = vmatpush.msra.mxu0 0.0
    %942 = vmatpush.msra.mxu0 0.0
    %943 = vmatpush.msra.mxu0 0.0
    %944 = vmatpush.msra.mxu0 0.0
    %945 = vmatpush.msra.mxu0 0.0
    %946 = vmatpush.msra.mxu0 0.0
    %947 = vmatpush.msra.mxu0 0.0
    %948 = vmatpush.msra.mxu0 %v61
    %949 = vmatpush.msra.mxu0 %v60
    %950 = vmatmul.f32.gmra.mxu0 %v932
    %v951 = vpop.f32.mrf.mxu0
    %v952 = vadd.f32 0.0, %v951
    %953 = vdwg.mxu0
    %v954 = vsel %vm98, %v952, %v881
    %v955 = vld [vmem:[%s4] sm:$0xff]
    %v956 = vld [vmem:[%s4 + $0x8] sm:$0xff]
    %v957 = vld [vmem:[%s4 + $0x10] sm:$0xff]
    %v958 = vld [vmem:[%s4 + $0x18] sm:$0xff]
    %v959 = vld [vmem:[%s4 + $0x20] sm:$0xff]
    %v960 = vld [vmem:[%s4 + $0x28] sm:$0xff]
    %v961 = vld [vmem:[%s4 + $0x30] sm:$0xff]
    %v962 = vld [vmem:[%s4 + $0x38] sm:$0xff]
    %v963 = vld [vmem:[%s5] sm:$0x1]
    %v965 = vsel %vm109, %v954, 0
    %967 = vmatpush.msra.mxu0 0.0
    %968 = vmatpush.msra.mxu0 0.0
    %969 = vmatpush.msra.mxu0 0.0
    %970 = vmatpush.msra.mxu0 0.0
    %971 = vmatpush.msra.mxu0 0.0
    %972 = vmatpush.msra.mxu0 0.0
    %973 = vmatpush.msra.mxu0 0.0
    %974 = vmatpush.msra.mxu0 0.0
    %975 = vmatpush.msra.mxu0 %v962
    %976 = vmatpush.msra.mxu0 %v961
    %977 = vmatpush.msra.mxu0 %v960
    %978 = vmatpush.msra.mxu0 %v959
    %979 = vmatpush.msra.mxu0 %v958
    %980 = vmatpush.msra.mxu0 %v957
    %981 = vmatpush.msra.mxu0 %v956
    %982 = vmatpush.msra.mxu0 %v955
    %983 = vmatmul.f32.gmra.mxu0 %v965
    %v984 = vpop.f32.mrf.mxu0
    %v985 = vadd.f32 %v963, %v984
    %986 = vdwg.mxu0
    %v987 = vsel %vm133, %v985, -inf
    %988 = vmax.xlane.f32.xlu0 %v987
    %v989 = vpop.xlane.xlu0 %988
    %v990 = vsub.f32 %v985, %v989
    %v991 = vmul.f32 %v990, 1.442695
    %v992 = vpow.pop %v991
    %v993 = vsel %vm133, %v992, 0.0
    %994 = vadd.xlane.f32.xlu0 %v993
    %v995 = vpop.xlane.xlu0 %994
    %v996 = vrcp.pop %v995
    %v997 = vmul.f32 %v995, %v996
    %v998 = vsub.f32 1.0, %v997
    %v999 = vmul.f32 %v996, %v998
    %v1000 = vadd.f32 %v996, %v999
    %vm1001 = vweird.f32 %v995
    %vm1002 = vweird.f32 %v996
    %vm1003 = vmor %vm1001, %vm1002
    %v1004 = vsel %vm1003, %v996, %v1000
    %v1005 = vand.u32 2147483647, %v995
    %vm1006 = vcmp.eq.f32.partialorder %v1005, 8.507059e+37
    %v1007 = vand.u32 %v995, 2147483648
    %v1008 = vor.u32 1.1754944e-38, %v1007
    %v1009 = vsel %vm1006, %v1008, %v1004
    %v1010 = vmul.f32 %v992, %v1009
    %1011 = vst.msk [vmem:[#allocation8 + $0x3] sm:$0x1] %vm133, %v1010
    %v1013 = vsel %vm159, %v1010, 0
    %1015 = vmatpush.msra.mxu0 0.0
    %1016 = vmatpush.msra.mxu0 0.0
    %1017 = vmatpush.msra.mxu0 0.0
    %1018 = vmatpush.msra.mxu0 0.0
    %1019 = vmatpush.msra.mxu0 0.0
    %1020 = vmatpush.msra.mxu0 0.0
    %1021 = vmatpush.msra.mxu0 0.0
    %1022 = vmatpush.msra.mxu0 0.0
    %1023 = vmatpush.msra.mxu0 0.0
    %1024 = vmatpush.msra.mxu0 0.0
    %1025 = vmatpush.msra.mxu0 0.0
    %1026 = vmatpush.msra.mxu0 0.0
    %1027 = vmatpush.msra.mxu0 0.0
    %1028 = vmatpush.msra.mxu0 0.0
    %1029 = vmatpush.msra.mxu0 0.0
    %1030 = vmatpush.msra.mxu0 %v62
    %1031 = vmatmul.f32.gmra.mxu0 %v1013
    %v1032 = vpop.f32.mrf.mxu0
    %v1033 = vadd.f32 0.0, %v1032
    %1034 = vdwg.mxu0
    %1036 = vrot.lane.b32.xlu0 %v1033, 32
    %v1037 = vpop.permute.xlu0 %1036
    %v1039 = vsel %vm98, %v952, %v1037
    %v1040 = vld [vmem:[%s6] sm:$0xff]
    %v1041 = vld [vmem:[%s6 + $0x8] sm:$0xff]
    %v1042 = vld [vmem:[%s6 + $0x10] sm:$0xff]
    %v1043 = vld [vmem:[%s6 + $0x18] sm:$0xff]
    %v1044 = vld [vmem:[%s6 + $0x20] sm:$0xff]
    %v1045 = vld [vmem:[%s6 + $0x28] sm:$0xff]
    %v1046 = vld [vmem:[%s6 + $0x30] sm:$0xff]
    %v1047 = vld [vmem:[%s6 + $0x38] sm:$0xff]
    %v1048 = vld [vmem:[%s7] sm:$0x1]
    %v1050 = vsel %vm109, %v1039, 0
    %1052 = vmatpush.msra.mxu0 0.0
    %1053 = vmatpush.msra.mxu0 0.0
    %1054 = vmatpush.msra.mxu0 0.0
    %1055 = vmatpush.msra.mxu0 0.0
    %1056 = vmatpush.msra.mxu0 0.0
    %1057 = vmatpush.msra.mxu0 0.0
    %1058 = vmatpush.msra.mxu0 0.0
    %1059 = vmatpush.msra.mxu0 0.0
    %1060 = vmatpush.msra.mxu0 %v1047
    %1061 = vmatpush.msra.mxu0 %v1046
    %1062 = vmatpush.msra.mxu0 %v1045
    %1063 = vmatpush.msra.mxu0 %v1044
    %1064 = vmatpush.msra.mxu0 %v1043
    %1065 = vmatpush.msra.mxu0 %v1042
    %1066 = vmatpush.msra.mxu0 %v1041
    %1067 = vmatpush.msra.mxu0 %v1040
    %1068 = vmatmul.f32.gmra.mxu0 %v1050
    %v1069 = vpop.f32.mrf.mxu0
    %v1070 = vadd.f32 %v1048, %v1069
    %1071 = vdwg.mxu0
    %v1072 = vmax.f32 %v1070, 0.0
    %v1073 = vld [vmem:[%s8] sm:$0xff]
    %v1074 = vld [vmem:[%s8 + $0x8] sm:$0xff]
    %v1075 = vld [vmem:[%s8 + $0x10] sm:$0xff]
    %v1076 = vld [vmem:[%s8 + $0x18] sm:$0xff]
    %v1077 = vld [vmem:[%s10] sm:$0x1]
    %v1079 = vsel %vm98, %v1072, 0
    %1081 = vmatpush.msra.mxu0 0.0
    %1082 = vmatpush.msra.mxu0 0.0
    %1083 = vmatpush.msra.mxu0 0.0
    %1084 = vmatpush.msra.mxu0 0.0
    %1085 = vmatpush.msra.mxu0 0.0
    %1086 = vmatpush.msra.mxu0 0.0
    %1087 = vmatpush.msra.mxu0 0.0
    %1088 = vmatpush.msra.mxu0 0.0
    %1089 = vmatpush.msra.mxu0 0.0
    %1090 = vmatpush.msra.mxu0 0.0
    %1091 = vmatpush.msra.mxu0 0.0
    %1092 = vmatpush.msra.mxu0 0.0
    %1093 = vmatpush.msra.mxu0 %v1076
    %1094 = vmatpush.msra.mxu0 %v1075
    %1095 = vmatpush.msra.mxu0 %v1074
    %1096 = vmatpush.msra.mxu0 %v1073
    %1097 = vmatmul.f32.gmra.mxu0 %v1079
    %v1098 = vpop.f32.mrf.mxu0
    %v1099 = vadd.f32 %v1077, %v1098
    %1100 = vdwg.mxu0
    %v1101 = vld [vmem:[%s9] sm:$0xff]
    %v1102 = vld [vmem:[%s9 + $0x8] sm:$0xff]
    %v1103 = vld [vmem:[%s9 + $0x10] sm:$0xff]
    %v1104 = vld [vmem:[%s9 + $0x18] sm:$0xff]
    %v1105 = vld [vmem:[%s11] sm:$0x1]
    %1106 = vmatpush.msra.mxu0 0.0
    %1107 = vmatpush.msra.mxu0 0.0
    %1108 = vmatpush.msra.mxu0 0.0
    %1109 = vmatpush.msra.mxu0 0.0
    %1110 = vmatpush.msra.mxu0 0.0
    %1111 = vmatpush.msra.mxu0 0.0
    %1112 = vmatpush.msra.mxu0 0.0
    %1113 = vmatpush.msra.mxu0 0.0
    %1114 = vmatpush.msra.mxu0 0.0
    %1115 = vmatpush.msra.mxu0 0.0
    %1116 = vmatpush.msra.mxu0 0.0
    %1117 = vmatpush.msra.mxu0 0.0
    %1118 = vmatpush.msra.mxu0 %v1104
    %1119 = vmatpush.msra.mxu0 %v1103
    %1120 = vmatpush.msra.mxu0 %v1102
    %1121 = vmatpush.msra.mxu0 %v1101
    %1122 = vmatmul.f32.gmra.mxu0 %v890
    %v1123 = vpop.f32.mrf.mxu0
    %v1124 = vadd.f32 %v1105, %v1123
    %1125 = vdwg.mxu0
    %v1126 = vadd.f32 %v1099, %v1124
    %v1127 = vxor.u32 %v1126, 2147483648
    %v1128 = vmul.f32 %v1127, 1.442695
    %v1129 = vpow.pop %v1128
    %v1130 = vadd.f32 %v1129, 1.0
    %v1131 = vrcp.pop %v1130
    %v1132 = vmul.f32 %v1130, %v1131
    %v1133 = vsub.f32 1.0, %v1132
    %v1134 = vmul.f32 %v1131, %v1133
    %v1135 = vadd.f32 %v1131, %v1134
    %vm1136 = vweird.f32 %v1130
    %vm1137 = vweird.f32 %v1131
    %vm1138 = vmor %vm1136, %vm1137
    %v1139 = vsel %vm1138, %v1131, %v1135
    %v1140 = vand.u32 2147483647, %v1130
    %vm1141 = vcmp.eq.f32.partialorder %v1140, 8.507059e+37
    %v1142 = vand.u32 %v1130, 2147483648
    %v1143 = vor.u32 1.1754944e-38, %v1142
    %v1144 = vsel %vm1141, %v1143, %v1139
    %v1145 = vmul.f32 1.0, %v1144
    %1147 = vrot.lane.b32.xlu0 %v1124, 64
    %v1148 = vpop.permute.xlu0 %1147
    %v1150 = vmul.f32 %v1145, %v1148
    %1152 = vrot.lane.b32.xlu0 %v1150, 64
    %v1153 = vpop.permute.xlu0 %1152
    %v1155 = vadd.f32 %v1099, %v1153
    %v1156 = vtanh.pop %v1155
    %v1157 = vsub.f32 1.0, %v1145
    %1159 = vrot.lane.b32.xlu0 %v1156, 96
    %v1160 = vpop.permute.xlu0 %1159
    %v1162 = vmul.f32 %v1157, %v1160
    %v1163 = vmul.f32 %v1145, %v881
    %v1164 = vadd.f32 %v1162, %v1163
    %v1165 = vld [vmem:[%s12] sm:$0xff]
    %v1166 = vld [vmem:[%s12 + $0x8] sm:$0xff]
    %v1167 = vld [vmem:[%s12 + $0x10] sm:$0xff]
    %v1168 = vld [vmem:[%s12 + $0x18] sm:$0xff]
    %v1169 = vld [vmem:[%s13] sm:$0x1]
    %1171 = vrot.lane.b32.xlu0 %v1164, 96
    %v1172 = vpop.permute.xlu0 %1171
    %v1173 = vsel %vm98, %v1172, 0
    %1175 = vmatpush.msra.mxu0 0.0
    %1176 = vmatpush.msra.mxu0 0.0
    %1177 = vmatpush.msra.mxu0 0.0
    %1178 = vmatpush.msra.mxu0 0.0
    %1179 = vmatpush.msra.mxu0 0.0
    %1180 = vmatpush.msra.mxu0 0.0
    %1181 = vmatpush.msra.mxu0 0.0
    %1182 = vmatpush.msra.mxu0 0.0
    %1183 = vmatpush.msra.mxu0 0.0
    %1184 = vmatpush.msra.mxu0 0.0
    %1185 = vmatpush.msra.mxu0 0.0
    %1186 = vmatpush.msra.mxu0 0.0
    %1187 = vmatpush.msra.mxu0 %v1168
    %1188 = vmatpush.msra.mxu0 %v1167
    %1189 = vmatpush.msra.mxu0 %v1166
    %1190 = vmatpush.msra.mxu0 %v1165
    %1191 = vmatmul.f32.gmra.mxu0 %v1173
    %v1192 = vpop.f32.mrf.mxu0
    %v1193 = vadd.f32 %v1169, %v1192
    %1194 = vdwg.mxu0
    %v1195 = vsel %vm345, %v1193, -inf
    %1196 = vmax.xlane.f32.xlu0 %v1195
    %v1197 = vpop.xlane.xlu0 %1196
    %v1198 = vsub.f32 %v1193, %v1197
    %v1199 = vmul.f32 %v1198, 1.442695
    %v1200 = vpow.pop %v1199
    %v1201 = vsel %vm345, %v1200, 0.0
    %1202 = vadd.xlane.f32.xlu0 %v1201
    %v1203 = vpop.xlane.xlu0 %1202
    %v1204 = vlog2.pop %v1203
    %v1205 = vmul.f32 %v1204, 0.6931472
    %v1206 = vadd.f32 %v1197, %v1205
    %v1207 = vsub.f32 %v1193, %v1206
    %1208 = vst.msk [vmem:[#allocation4 + $0x3] sm:$0x1] %vm345, %v1207
    %s1209 = sld [smem:[#allocation3 + $0x4]]
    %v1210 = vstv %s1209
    %vm1211 = vcmp.eq.s32.totalorder %v59, %v1210
    %v1212 = vsel %vm1211, 1, 0
    %v1213 = vcvt.s32.f32 %v1212
    %v1215 = vsel %vm69, %v1213, 0
    %1217 = vmatpush.msra.mxu0 0.0
    %1218 = vmatpush.msra.mxu0 0.0
    %1219 = vmatpush.msra.mxu0 0.0
    %1220 = vmatpush.msra.mxu0 0.0
    %1221 = vmatpush.msra.mxu0 0.0
    %1222 = vmatpush.msra.mxu0 0.0
    %1223 = vmatpush.msra.mxu0 0.0
    %1224 = vmatpush.msra.mxu0 0.0
    %1225 = vmatpush.msra.mxu0 0.0
    %1226 = vmatpush.msra.mxu0 0.0
    %1227 = vmatpush.msra.mxu0 0.0
    %1228 = vmatpush.msra.mxu0 0.0
    %1229 = vmatpush.msra.mxu0 0.0
    %1230 = vmatpush.msra.mxu0 0.0
    %1231 = vmatpush.msra.mxu0 %v61
    %1232 = vmatpush.msra.mxu0 %v60
    %1233 = vmatmul.f32.gmra.mxu0 %v1215
    %v1234 = vpop.f32.mrf.mxu0
    %v1235 = vadd.f32 0.0, %v1234
    %1236 = vdwg.mxu0
    %v1237 = vsel %vm98, %v1235, %v1164
    %v1238 = vld [vmem:[%s4] sm:$0xff]
    %v1239 = vld [vmem:[%s4 + $0x8] sm:$0xff]
    %v1240 = vld [vmem:[%s4 + $0x10] sm:$0xff]
    %v1241 = vld [vmem:[%s4 + $0x18] sm:$0xff]
    %v1242 = vld [vmem:[%s4 + $0x20] sm:$0xff]
    %v1243 = vld [vmem:[%s4 + $0x28] sm:$0xff]
    %v1244 = vld [vmem:[%s4 + $0x30] sm:$0xff]
    %v1245 = vld [vmem:[%s4 + $0x38] sm:$0xff]
    %v1246 = vld [vmem:[%s5] sm:$0x1]
    %v1248 = vsel %vm109, %v1237, 0
    %1250 = vmatpush.msra.mxu0 0.0
    %1251 = vmatpush.msra.mxu0 0.0
    %1252 = vmatpush.msra.mxu0 0.0
    %1253 = vmatpush.msra.mxu0 0.0
    %1254 = vmatpush.msra.mxu0 0.0
    %1255 = vmatpush.msra.mxu0 0.0
    %1256 = vmatpush.msra.mxu0 0.0
    %1257 = vmatpush.msra.mxu0 0.0
    %1258 = vmatpush.msra.mxu0 %v1245
    %1259 = vmatpush.msra.mxu0 %v1244
    %1260 = vmatpush.msra.mxu0 %v1243
    %1261 = vmatpush.msra.mxu0 %v1242
    %1262 = vmatpush.msra.mxu0 %v1241
    %1263 = vmatpush.msra.mxu0 %v1240
    %1264 = vmatpush.msra.mxu0 %v1239
    %1265 = vmatpush.msra.mxu0 %v1238
    %1266 = vmatmul.f32.gmra.mxu0 %v1248
    %v1267 = vpop.f32.mrf.mxu0
    %v1268 = vadd.f32 %v1246, %v1267
    %1269 = vdwg.mxu0
    %v1270 = vsel %vm133, %v1268, -inf
    %1271 = vmax.xlane.f32.xlu0 %v1270
    %v1272 = vpop.xlane.xlu0 %1271
    %v1273 = vsub.f32 %v1268, %v1272
    %v1274 = vmul.f32 %v1273, 1.442695
    %v1275 = vpow.pop %v1274
    %v1276 = vsel %vm133, %v1275, 0.0
    %1277 = vadd.xlane.f32.xlu0 %v1276
    %v1278 = vpop.xlane.xlu0 %1277
    %v1279 = vrcp.pop %v1278
    %v1280 = vmul.f32 %v1278, %v1279
    %v1281 = vsub.f32 1.0, %v1280
    %v1282 = vmul.f32 %v1279, %v1281
    %v1283 = vadd.f32 %v1279, %v1282
    %vm1284 = vweird.f32 %v1278
    %vm1285 = vweird.f32 %v1279
    %vm1286 = vmor %vm1284, %vm1285
    %v1287 = vsel %vm1286, %v1279, %v1283
    %v1288 = vand.u32 2147483647, %v1278
    %vm1289 = vcmp.eq.f32.partialorder %v1288, 8.507059e+37
    %v1290 = vand.u32 %v1278, 2147483648
    %v1291 = vor.u32 1.1754944e-38, %v1290
    %v1292 = vsel %vm1289, %v1291, %v1287
    %v1293 = vmul.f32 %v1275, %v1292
    %1294 = vst.msk [vmem:[#allocation8 + $0x4] sm:$0x1] %vm133, %v1293
    %v1296 = vsel %vm159, %v1293, 0
    %1298 = vmatpush.msra.mxu0 0.0
    %1299 = vmatpush.msra.mxu0 0.0
    %1300 = vmatpush.msra.mxu0 0.0
    %1301 = vmatpush.msra.mxu0 0.0
    %1302 = vmatpush.msra.mxu0 0.0
    %1303 = vmatpush.msra.mxu0 0.0
    %1304 = vmatpush.msra.mxu0 0.0
    %1305 = vmatpush.msra.mxu0 0.0
    %1306 = vmatpush.msra.mxu0 0.0
    %1307 = vmatpush.msra.mxu0 0.0
    %1308 = vmatpush.msra.mxu0 0.0
    %1309 = vmatpush.msra.mxu0 0.0
    %1310 = vmatpush.msra.mxu0 0.0
    %1311 = vmatpush.msra.mxu0 0.0
    %1312 = vmatpush.msra.mxu0 0.0
    %1313 = vmatpush.msra.mxu0 %v62
    %1314 = vmatmul.f32.gmra.mxu0 %v1296
    %v1315 = vpop.f32.mrf.mxu0
    %v1316 = vadd.f32 0.0, %v1315
    %1317 = vdwg.mxu0
    %1319 = vrot.lane.b32.xlu0 %v1316, 32
    %v1320 = vpop.permute.xlu0 %1319
    %v1322 = vsel %vm98, %v1235, %v1320
    %v1323 = vld [vmem:[%s6] sm:$0xff]
    %v1324 = vld [vmem:[%s6 + $0x8] sm:$0xff]
    %v1325 = vld [vmem:[%s6 + $0x10] sm:$0xff]
    %v1326 = vld [vmem:[%s6 + $0x18] sm:$0xff]
    %v1327 = vld [vmem:[%s6 + $0x20] sm:$0xff]
    %v1328 = vld [vmem:[%s6 + $0x28] sm:$0xff]
    %v1329 = vld [vmem:[%s6 + $0x30] sm:$0xff]
    %v1330 = vld [vmem:[%s6 + $0x38] sm:$0xff]
    %v1331 = vld [vmem:[%s7] sm:$0x1]
    %v1333 = vsel %vm109, %v1322, 0
    %1335 = vmatpush.msra.mxu0 0.0
    %1336 = vmatpush.msra.mxu0 0.0
    %1337 = vmatpush.msra.mxu0 0.0
    %1338 = vmatpush.msra.mxu0 0.0
    %1339 = vmatpush.msra.mxu0 0.0
    %1340 = vmatpush.msra.mxu0 0.0
    %1341 = vmatpush.msra.mxu0 0.0
    %1342 = vmatpush.msra.mxu0 0.0
    %1343 = vmatpush.msra.mxu0 %v1330
    %1344 = vmatpush.msra.mxu0 %v1329
    %1345 = vmatpush.msra.mxu0 %v1328
    %1346 = vmatpush.msra.mxu0 %v1327
    %1347 = vmatpush.msra.mxu0 %v1326
    %1348 = vmatpush.msra.mxu0 %v1325
    %1349 = vmatpush.msra.mxu0 %v1324
    %1350 = vmatpush.msra.mxu0 %v1323
    %1351 = vmatmul.f32.gmra.mxu0 %v1333
    %v1352 = vpop.f32.mrf.mxu0
    %v1353 = vadd.f32 %v1331, %v1352
    %1354 = vdwg.mxu0
    %v1355 = vmax.f32 %v1353, 0.0
    %v1356 = vld [vmem:[%s8] sm:$0xff]
    %v1357 = vld [vmem:[%s8 + $0x8] sm:$0xff]
    %v1358 = vld [vmem:[%s8 + $0x10] sm:$0xff]
    %v1359 = vld [vmem:[%s8 + $0x18] sm:$0xff]
    %v1360 = vld [vmem:[%s10] sm:$0x1]
    %v1362 = vsel %vm98, %v1355, 0
    %1364 = vmatpush.msra.mxu0 0.0
    %1365 = vmatpush.msra.mxu0 0.0
    %1366 = vmatpush.msra.mxu0 0.0
    %1367 = vmatpush.msra.mxu0 0.0
    %1368 = vmatpush.msra.mxu0 0.0
    %1369 = vmatpush.msra.mxu0 0.0
    %1370 = vmatpush.msra.mxu0 0.0
    %1371 = vmatpush.msra.mxu0 0.0
    %1372 = vmatpush.msra.mxu0 0.0
    %1373 = vmatpush.msra.mxu0 0.0
    %1374 = vmatpush.msra.mxu0 0.0
    %1375 = vmatpush.msra.mxu0 0.0
    %1376 = vmatpush.msra.mxu0 %v1359
    %1377 = vmatpush.msra.mxu0 %v1358
    %1378 = vmatpush.msra.mxu0 %v1357
    %1379 = vmatpush.msra.mxu0 %v1356
    %1380 = vmatmul.f32.gmra.mxu0 %v1362
    %v1381 = vpop.f32.mrf.mxu0
    %v1382 = vadd.f32 %v1360, %v1381
    %1383 = vdwg.mxu0
    %v1384 = vld [vmem:[%s9] sm:$0xff]
    %v1385 = vld [vmem:[%s9 + $0x8] sm:$0xff]
    %v1386 = vld [vmem:[%s9 + $0x10] sm:$0xff]
    %v1387 = vld [vmem:[%s9 + $0x18] sm:$0xff]
    %v1388 = vld [vmem:[%s11] sm:$0x1]
    %1389 = vmatpush.msra.mxu0 0.0
    %1390 = vmatpush.msra.mxu0 0.0
    %1391 = vmatpush.msra.mxu0 0.0
    %1392 = vmatpush.msra.mxu0 0.0
    %1393 = vmatpush.msra.mxu0 0.0
    %1394 = vmatpush.msra.mxu0 0.0
    %1395 = vmatpush.msra.mxu0 0.0
    %1396 = vmatpush.msra.mxu0 0.0
    %1397 = vmatpush.msra.mxu0 0.0
    %1398 = vmatpush.msra.mxu0 0.0
    %1399 = vmatpush.msra.mxu0 0.0
    %1400 = vmatpush.msra.mxu0 0.0
    %1401 = vmatpush.msra.mxu0 %v1387
    %1402 = vmatpush.msra.mxu0 %v1386
    %1403 = vmatpush.msra.mxu0 %v1385
    %1404 = vmatpush.msra.mxu0 %v1384
    %1405 = vmatmul.f32.gmra.mxu0 %v1173
    %v1406 = vpop.f32.mrf.mxu0
    %v1407 = vadd.f32 %v1388, %v1406
    %1408 = vdwg.mxu0
    %v1409 = vadd.f32 %v1382, %v1407
    %v1410 = vxor.u32 %v1409, 2147483648
    %v1411 = vmul.f32 %v1410, 1.442695
    %v1412 = vpow.pop %v1411
    %v1413 = vadd.f32 %v1412, 1.0
    %v1414 = vrcp.pop %v1413
    %v1415 = vmul.f32 %v1413, %v1414
    %v1416 = vsub.f32 1.0, %v1415
    %v1417 = vmul.f32 %v1414, %v1416
    %v1418 = vadd.f32 %v1414, %v1417
    %vm1419 = vweird.f32 %v1413
    %vm1420 = vweird.f32 %v1414
    %vm1421 = vmor %vm1419, %vm1420
    %v1422 = vsel %vm1421, %v1414, %v1418
    %v1423 = vand.u32 2147483647, %v1413
    %vm1424 = vcmp.eq.f32.partialorder %v1423, 8.507059e+37
    %v1425 = vand.u32 %v1413, 2147483648
    %v1426 = vor.u32 1.1754944e-38, %v1425
    %v1427 = vsel %vm1424, %v1426, %v1422
    %v1428 = vmul.f32 1.0, %v1427
    %1430 = vrot.lane.b32.xlu0 %v1407, 64
    %v1431 = vpop.permute.xlu0 %1430
    %v1433 = vmul.f32 %v1428, %v1431
    %1435 = vrot.lane.b32.xlu0 %v1433, 64
    %v1436 = vpop.permute.xlu0 %1435
    %v1438 = vadd.f32 %v1382, %v1436
    %v1439 = vtanh.pop %v1438
    %v1440 = vsub.f32 1.0, %v1428
    %1442 = vrot.lane.b32.xlu0 %v1439, 96
    %v1443 = vpop.permute.xlu0 %1442
    %v1445 = vmul.f32 %v1440, %v1443
    %v1446 = vmul.f32 %v1428, %v1164
    %v1447 = vadd.f32 %v1445, %v1446
    %v1448 = vld [vmem:[%s12] sm:$0xff]
    %v1449 = vld [vmem:[%s12 + $0x8] sm:$0xff]
    %v1450 = vld [vmem:[%s12 + $0x10] sm:$0xff]
    %v1451 = vld [vmem:[%s12 + $0x18] sm:$0xff]
    %v1452 = vld [vmem:[%s13] sm:$0x1]
    %1454 = vrot.lane.b32.xlu0 %v1447, 96
    %v1455 = vpop.permute.xlu0 %1454
    %v1456 = vsel %vm98, %v1455, 0
    %1458 = vmatpush.msra.mxu0 0.0
    %1459 = vmatpush.msra.mxu0 0.0
    %1460 = vmatpush.msra.mxu0 0.0
    %1461 = vmatpush.msra.mxu0 0.0
    %1462 = vmatpush.msra.mxu0 0.0
    %1463 = vmatpush.msra.mxu0 0.0
    %1464 = vmatpush.msra.mxu0 0.0
    %1465 = vmatpush.msra.mxu0 0.0
    %1466 = vmatpush.msra.mxu0 0.0
    %1467 = vmatpush.msra.mxu0 0.0
    %1468 = vmatpush.msra.mxu0 0.0
    %1469 = vmatpush.msra.mxu0 0.0
    %1470 = vmatpush.msra.mxu0 %v1451
    %1471 = vmatpush.msra.mxu0 %v1450
    %1472 = vmatpush.msra.mxu0 %v1449
    %1473 = vmatpush.msra.mxu0 %v1448
    %1474 = vmatmul.f32.gmra.mxu0 %v1456
    %v1475 = vpop.f32.mrf.mxu0
    %v1476 = vadd.f32 %v1452, %v1475
    %1477 = vdwg.mxu0
    %v1478 = vsel %vm345, %v1476, -inf
    %1479 = vmax.xlane.f32.xlu0 %v1478
    %v1480 = vpop.xlane.xlu0 %1479
    %v1481 = vsub.f32 %v1476, %v1480
    %v1482 = vmul.f32 %v1481, 1.442695
    %v1483 = vpow.pop %v1482
    %v1484 = vsel %vm345, %v1483, 0.0
    %1485 = vadd.xlane.f32.xlu0 %v1484
    %v1486 = vpop.xlane.xlu0 %1485
    %v1487 = vlog2.pop %v1486
    %v1488 = vmul.f32 %v1487, 0.6931472
    %v1489 = vadd.f32 %v1480, %v1488
    %v1490 = vsub.f32 %v1476, %v1489
    %1491 = vst.msk [vmem:[#allocation4 + $0x4] sm:$0x1] %vm345, %v1490
    %s1492 = sld [smem:[#allocation3 + $0x5]]
    %v1493 = vstv %s1492
    %vm1494 = vcmp.eq.s32.totalorder %v59, %v1493
    %v1495 = vsel %vm1494, 1, 0
    %v1496 = vcvt.s32.f32 %v1495
    %v1498 = vsel %vm69, %v1496, 0
    %1500 = vmatpush.msra.mxu0 0.0
    %1501 = vmatpush.msra.mxu0 0.0
    %1502 = vmatpush.msra.mxu0 0.0
    %1503 = vmatpush.msra.mxu0 0.0
    %1504 = vmatpush.msra.mxu0 0.0
    %1505 = vmatpush.msra.mxu0 0.0
    %1506 = vmatpush.msra.mxu0 0.0
    %1507 = vmatpush.msra.mxu0 0.0
    %1508 = vmatpush.msra.mxu0 0.0
    %1509 = vmatpush.msra.mxu0 0.0
    %1510 = vmatpush.msra.mxu0 0.0
    %1511 = vmatpush.msra.mxu0 0.0
    %1512 = vmatpush.msra.mxu0 0.0
    %1513 = vmatpush.msra.mxu0 0.0
    %1514 = vmatpush.msra.mxu0 %v61
    %1515 = vmatpush.msra.mxu0 %v60
    %1516 = vmatmul.f32.gmra.mxu0 %v1498
    %v1517 = vpop.f32.mrf.mxu0
    %v1518 = vadd.f32 0.0, %v1517
    %1519 = vdwg.mxu0
    %v1520 = vsel %vm98, %v1518, %v1447
    %v1521 = vld [vmem:[%s4] sm:$0xff]
    %v1522 = vld [vmem:[%s4 + $0x8] sm:$0xff]
    %v1523 = vld [vmem:[%s4 + $0x10] sm:$0xff]
    %v1524 = vld [vmem:[%s4 + $0x18] sm:$0xff]
    %v1525 = vld [vmem:[%s4 + $0x20] sm:$0xff]
    %v1526 = vld [vmem:[%s4 + $0x28] sm:$0xff]
    %v1527 = vld [vmem:[%s4 + $0x30] sm:$0xff]
    %v1528 = vld [vmem:[%s4 + $0x38] sm:$0xff]
    %v1529 = vld [vmem:[%s5] sm:$0x1]
    %v1531 = vsel %vm109, %v1520, 0
    %1533 = vmatpush.msra.mxu0 0.0
    %1534 = vmatpush.msra.mxu0 0.0
    %1535 = vmatpush.msra.mxu0 0.0
    %1536 = vmatpush.msra.mxu0 0.0
    %1537 = vmatpush.msra.mxu0 0.0
    %1538 = vmatpush.msra.mxu0 0.0
    %1539 = vmatpush.msra.mxu0 0.0
    %1540 = vmatpush.msra.mxu0 0.0
    %1541 = vmatpush.msra.mxu0 %v1528
    %1542 = vmatpush.msra.mxu0 %v1527
    %1543 = vmatpush.msra.mxu0 %v1526
    %1544 = vmatpush.msra.mxu0 %v1525
    %1545 = vmatpush.msra.mxu0 %v1524
    %1546 = vmatpush.msra.mxu0 %v1523
    %1547 = vmatpush.msra.mxu0 %v1522
    %1548 = vmatpush.msra.mxu0 %v1521
    %1549 = vmatmul.f32.gmra.mxu0 %v1531
    %v1550 = vpop.f32.mrf.mxu0
    %v1551 = vadd.f32 %v1529, %v1550
    %1552 = vdwg.mxu0
    %v1553 = vsel %vm133, %v1551, -inf
    %1554 = vmax.xlane.f32.xlu0 %v1553
    %v1555 = vpop.xlane.xlu0 %1554
    %v1556 = vsub.f32 %v1551, %v1555
    %v1557 = vmul.f32 %v1556, 1.442695
    %v1558 = vpow.pop %v1557
    %v1559 = vsel %vm133, %v1558, 0.0
    %1560 = vadd.xlane.f32.xlu0 %v1559
    %v1561 = vpop.xlane.xlu0 %1560
    %v1562 = vrcp.pop %v1561
    %v1563 = vmul.f32 %v1561, %v1562
    %v1564 = vsub.f32 1.0, %v1563
    %v1565 = vmul.f32 %v1562, %v1564
    %v1566 = vadd.f32 %v1562, %v1565
    %vm1567 = vweird.f32 %v1561
    %vm1568 = vweird.f32 %v1562
    %vm1569 = vmor %vm1567, %vm1568
    %v1570 = vsel %vm1569, %v1562, %v1566
    %v1571 = vand.u32 2147483647, %v1561
    %vm1572 = vcmp.eq.f32.partialorder %v1571, 8.507059e+37
    %v1573 = vand.u32 %v1561, 2147483648
    %v1574 = vor.u32 1.1754944e-38, %v1573
    %v1575 = vsel %vm1572, %v1574, %v1570
    %v1576 = vmul.f32 %v1558, %v1575
    %1577 = vst.msk [vmem:[#allocation8 + $0x5] sm:$0x1] %vm133, %v1576
    %v1579 = vsel %vm159, %v1576, 0
    %1581 = vmatpush.msra.mxu0 0.0
    %1582 = vmatpush.msra.mxu0 0.0
    %1583 = vmatpush.msra.mxu0 0.0
    %1584 = vmatpush.msra.mxu0 0.0
    %1585 = vmatpush.msra.mxu0 0.0
    %1586 = vmatpush.msra.mxu0 0.0
    %1587 = vmatpush.msra.mxu0 0.0
    %1588 = vmatpush.msra.mxu0 0.0
    %1589 = vmatpush.msra.mxu0 0.0
    %1590 = vmatpush.msra.mxu0 0.0
    %1591 = vmatpush.msra.mxu0 0.0
    %1592 = vmatpush.msra.mxu0 0.0
    %1593 = vmatpush.msra.mxu0 0.0
    %1594 = vmatpush.msra.mxu0 0.0
    %1595 = vmatpush.msra.mxu0 0.0
    %1596 = vmatpush.msra.mxu0 %v62
    %1597 = vmatmul.f32.gmra.mxu0 %v1579
    %v1598 = vpop.f32.mrf.mxu0
    %v1599 = vadd.f32 0.0, %v1598
    %1600 = vdwg.mxu0
    %1602 = vrot.lane.b32.xlu0 %v1599, 32
    %v1603 = vpop.permute.xlu0 %1602
    %v1605 = vsel %vm98, %v1518, %v1603
    %v1606 = vld [vmem:[%s6] sm:$0xff]
    %v1607 = vld [vmem:[%s6 + $0x8] sm:$0xff]
    %v1608 = vld [vmem:[%s6 + $0x10] sm:$0xff]
    %v1609 = vld [vmem:[%s6 + $0x18] sm:$0xff]
    %v1610 = vld [vmem:[%s6 + $0x20] sm:$0xff]
    %v1611 = vld [vmem:[%s6 + $0x28] sm:$0xff]
    %v1612 = vld [vmem:[%s6 + $0x30] sm:$0xff]
    %v1613 = vld [vmem:[%s6 + $0x38] sm:$0xff]
    %v1614 = vld [vmem:[%s7] sm:$0x1]
    %v1616 = vsel %vm109, %v1605, 0
    %1618 = vmatpush.msra.mxu0 0.0
    %1619 = vmatpush.msra.mxu0 0.0
    %1620 = vmatpush.msra.mxu0 0.0
    %1621 = vmatpush.msra.mxu0 0.0
    %1622 = vmatpush.msra.mxu0 0.0
    %1623 = vmatpush.msra.mxu0 0.0
    %1624 = vmatpush.msra.mxu0 0.0
    %1625 = vmatpush.msra.mxu0 0.0
    %1626 = vmatpush.msra.mxu0 %v1613
    %1627 = vmatpush.msra.mxu0 %v1612
    %1628 = vmatpush.msra.mxu0 %v1611
    %1629 = vmatpush.msra.mxu0 %v1610
    %1630 = vmatpush.msra.mxu0 %v1609
    %1631 = vmatpush.msra.mxu0 %v1608
    %1632 = vmatpush.msra.mxu0 %v1607
    %1633 = vmatpush.msra.mxu0 %v1606
    %1634 = vmatmul.f32.gmra.mxu0 %v1616
    %v1635 = vpop.f32.mrf.mxu0
    %v1636 = vadd.f32 %v1614, %v1635
    %1637 = vdwg.mxu0
    %v1638 = vmax.f32 %v1636, 0.0
    %v1639 = vld [vmem:[%s8] sm:$0xff]
    %v1640 = vld [vmem:[%s8 + $0x8] sm:$0xff]
    %v1641 = vld [vmem:[%s8 + $0x10] sm:$0xff]
    %v1642 = vld [vmem:[%s8 + $0x18] sm:$0xff]
    %v1643 = vld [vmem:[%s10] sm:$0x1]
    %v1645 = vsel %vm98, %v1638, 0
    %1647 = vmatpush.msra.mxu0 0.0
    %1648 = vmatpush.msra.mxu0 0.0
    %1649 = vmatpush.msra.mxu0 0.0
    %1650 = vmatpush.msra.mxu0 0.0
    %1651 = vmatpush.msra.mxu0 0.0
    %1652 = vmatpush.msra.mxu0 0.0
    %1653 = vmatpush.msra.mxu0 0.0
    %1654 = vmatpush.msra.mxu0 0.0
    %1655 = vmatpush.msra.mxu0 0.0
    %1656 = vmatpush.msra.mxu0 0.0
    %1657 = vmatpush.msra.mxu0 0.0
    %1658 = vmatpush.msra.mxu0 0.0
    %1659 = vmatpush.msra.mxu0 %v1642
    %1660 = vmatpush.msra.mxu0 %v1641
    %1661 = vmatpush.msra.mxu0 %v1640
    %1662 = vmatpush.msra.mxu0 %v1639
    %1663 = vmatmul.f32.gmra.mxu0 %v1645
    %v1664 = vpop.f32.mrf.mxu0
    %v1665 = vadd.f32 %v1643, %v1664
    %1666 = vdwg.mxu0
    %v1667 = vld [vmem:[%s9] sm:$0xff]
    %v1668 = vld [vmem:[%s9 + $0x8] sm:$0xff]
    %v1669 = vld [vmem:[%s9 + $0x10] sm:$0xff]
    %v1670 = vld [vmem:[%s9 + $0x18] sm:$0xff]
    %v1671 = vld [vmem:[%s11] sm:$0x1]
    %1672 = vmatpush.msra.mxu0 0.0
    %1673 = vmatpush.msra.mxu0 0.0
    %1674 = vmatpush.msra.mxu0 0.0
    %1675 = vmatpush.msra.mxu0 0.0
    %1676 = vmatpush.msra.mxu0 0.0
    %1677 = vmatpush.msra.mxu0 0.0
    %1678 = vmatpush.msra.mxu0 0.0
    %1679 = vmatpush.msra.mxu0 0.0
    %1680 = vmatpush.msra.mxu0 0.0
    %1681 = vmatpush.msra.mxu0 0.0
    %1682 = vmatpush.msra.mxu0 0.0
    %1683 = vmatpush.msra.mxu0 0.0
    %1684 = vmatpush.msra.mxu0 %v1670
    %1685 = vmatpush.msra.mxu0 %v1669
    %1686 = vmatpush.msra.mxu0 %v1668
    %1687 = vmatpush.msra.mxu0 %v1667
    %1688 = vmatmul.f32.gmra.mxu0 %v1456
    %v1689 = vpop.f32.mrf.mxu0
    %v1690 = vadd.f32 %v1671, %v1689
    %1691 = vdwg.mxu0
    %v1692 = vadd.f32 %v1665, %v1690
    %v1693 = vxor.u32 %v1692, 2147483648
    %v1694 = vmul.f32 %v1693, 1.442695
    %v1695 = vpow.pop %v1694
    %v1696 = vadd.f32 %v1695, 1.0
    %v1697 = vrcp.pop %v1696
    %v1698 = vmul.f32 %v1696, %v1697
    %v1699 = vsub.f32 1.0, %v1698
    %v1700 = vmul.f32 %v1697, %v1699
    %v1701 = vadd.f32 %v1697, %v1700
    %vm1702 = vweird.f32 %v1696
    %vm1703 = vweird.f32 %v1697
    %vm1704 = vmor %vm1702, %vm1703
    %v1705 = vsel %vm1704, %v1697, %v1701
    %v1706 = vand.u32 2147483647, %v1696
    %vm1707 = vcmp.eq.f32.partialorder %v1706, 8.507059e+37
    %v1708 = vand.u32 %v1696, 2147483648
    %v1709 = vor.u32 1.1754944e-38, %v1708
    %v1710 = vsel %vm1707, %v1709, %v1705
    %v1711 = vmul.f32 1.0, %v1710
    %1713 = vrot.lane.b32.xlu0 %v1690, 64
    %v1714 = vpop.permute.xlu0 %1713
    %v1716 = vmul.f32 %v1711, %v1714
    %1718 = vrot.lane.b32.xlu0 %v1716, 64
    %v1719 = vpop.permute.xlu0 %1718
    %v1721 = vadd.f32 %v1665, %v1719
    %v1722 = vtanh.pop %v1721
    %v1723 = vsub.f32 1.0, %v1711
    %1725 = vrot.lane.b32.xlu0 %v1722, 96
    %v1726 = vpop.permute.xlu0 %1725
    %v1728 = vmul.f32 %v1723, %v1726
    %v1729 = vmul.f32 %v1711, %v1447
    %v1730 = vadd.f32 %v1728, %v1729
    %v1731 = vld [vmem:[%s12] sm:$0xff]
    %v1732 = vld [vmem:[%s12 + $0x8] sm:$0xff]
    %v1733 = vld [vmem:[%s12 + $0x10] sm:$0xff]
    %v1734 = vld [vmem:[%s12 + $0x18] sm:$0xff]
    %v1735 = vld [vmem:[%s13] sm:$0x1]
    %1737 = vrot.lane.b32.xlu0 %v1730, 96
    %v1738 = vpop.permute.xlu0 %1737
    %v1739 = vsel %vm98, %v1738, 0
    %1741 = vmatpush.msra.mxu0 0.0
    %1742 = vmatpush.msra.mxu0 0.0
    %1743 = vmatpush.msra.mxu0 0.0
    %1744 = vmatpush.msra.mxu0 0.0
    %1745 = vmatpush.msra.mxu0 0.0
    %1746 = vmatpush.msra.mxu0 0.0
    %1747 = vmatpush.msra.mxu0 0.0
    %1748 = vmatpush.msra.mxu0 0.0
    %1749 = vmatpush.msra.mxu0 0.0
    %1750 = vmatpush.msra.mxu0 0.0
    %1751 = vmatpush.msra.mxu0 0.0
    %1752 = vmatpush.msra.mxu0 0.0
    %1753 = vmatpush.msra.mxu0 %v1734
    %1754 = vmatpush.msra.mxu0 %v1733
    %1755 = vmatpush.msra.mxu0 %v1732
    %1756 = vmatpush.msra.mxu0 %v1731
    %1757 = vmatmul.f32.gmra.mxu0 %v1739
    %v1758 = vpop.f32.mrf.mxu0
    %v1759 = vadd.f32 %v1735, %v1758
    %1760 = vdwg.mxu0
    %v1761 = vsel %vm345, %v1759, -inf
    %1762 = vmax.xlane.f32.xlu0 %v1761
    %v1763 = vpop.xlane.xlu0 %1762
    %v1764 = vsub.f32 %v1759, %v1763
    %v1765 = vmul.f32 %v1764, 1.442695
    %v1766 = vpow.pop %v1765
    %v1767 = vsel %vm345, %v1766, 0.0
    %1768 = vadd.xlane.f32.xlu0 %v1767
    %v1769 = vpop.xlane.xlu0 %1768
    %v1770 = vlog2.pop %v1769
    %v1771 = vmul.f32 %v1770, 0.6931472
    %v1772 = vadd.f32 %v1763, %v1771
    %v1773 = vsub.f32 %v1759, %v1772
    %1774 = vst.msk [vmem:[#allocation4 + $0x5] sm:$0x1] %vm345, %v1773
    %s1775 = sld [smem:[#allocation3 + $0x6]]
    %v1776 = vstv %s1775
    %vm1777 = vcmp.eq.s32.totalorder %v59, %v1776
    %v1778 = vsel %vm1777, 1, 0
    %v1779 = vcvt.s32.f32 %v1778
    %v1781 = vsel %vm69, %v1779, 0
    %1783 = vmatpush.msra.mxu0 0.0
    %1784 = vmatpush.msra.mxu0 0.0
    %1785 = vmatpush.msra.mxu0 0.0
    %1786 = vmatpush.msra.mxu0 0.0
    %1787 = vmatpush.msra.mxu0 0.0
    %1788 = vmatpush.msra.mxu0 0.0
    %1789 = vmatpush.msra.mxu0 0.0
    %1790 = vmatpush.msra.mxu0 0.0
    %1791 = vmatpush.msra.mxu0 0.0
    %1792 = vmatpush.msra.mxu0 0.0
    %1793 = vmatpush.msra.mxu0 0.0
    %1794 = vmatpush.msra.mxu0 0.0
    %1795 = vmatpush.msra.mxu0 0.0
    %1796 = vmatpush.msra.mxu0 0.0
    %1797 = vmatpush.msra.mxu0 %v61
    %1798 = vmatpush.msra.mxu0 %v60
    %1799 = vmatmul.f32.gmra.mxu0 %v1781
    %v1800 = vpop.f32.mrf.mxu0
    %v1801 = vadd.f32 0.0, %v1800
    %1802 = vdwg.mxu0
    %v1803 = vsel %vm98, %v1801, %v1730
    %v1804 = vld [vmem:[%s4] sm:$0xff]
    %v1805 = vld [vmem:[%s4 + $0x8] sm:$0xff]
    %v1806 = vld [vmem:[%s4 + $0x10] sm:$0xff]
    %v1807 = vld [vmem:[%s4 + $0x18] sm:$0xff]
    %v1808 = vld [vmem:[%s4 + $0x20] sm:$0xff]
    %v1809 = vld [vmem:[%s4 + $0x28] sm:$0xff]
    %v1810 = vld [vmem:[%s4 + $0x30] sm:$0xff]
    %v1811 = vld [vmem:[%s4 + $0x38] sm:$0xff]
    %v1812 = vld [vmem:[%s5] sm:$0x1]
    %v1814 = vsel %vm109, %v1803, 0
    %1816 = vmatpush.msra.mxu0 0.0
    %1817 = vmatpush.msra.mxu0 0.0
    %1818 = vmatpush.msra.mxu0 0.0
    %1819 = vmatpush.msra.mxu0 0.0
    %1820 = vmatpush.msra.mxu0 0.0
    %1821 = vmatpush.msra.mxu0 0.0
    %1822 = vmatpush.msra.mxu0 0.0
    %1823 = vmatpush.msra.mxu0 0.0
    %1824 = vmatpush.msra.mxu0 %v1811
    %1825 = vmatpush.msra.mxu0 %v1810
    %1826 = vmatpush.msra.mxu0 %v1809
    %1827 = vmatpush.msra.mxu0 %v1808
    %1828 = vmatpush.msra.mxu0 %v1807
    %1829 = vmatpush.msra.mxu0 %v1806
    %1830 = vmatpush.msra.mxu0 %v1805
    %1831 = vmatpush.msra.mxu0 %v1804
    %1832 = vmatmul.f32.gmra.mxu0 %v1814
    %v1833 = vpop.f32.mrf.mxu0
    %v1834 = vadd.f32 %v1812, %v1833
    %1835 = vdwg.mxu0
    %v1836 = vsel %vm133, %v1834, -inf
    %1837 = vmax.xlane.f32.xlu0 %v1836
    %v1838 = vpop.xlane.xlu0 %1837
    %v1839 = vsub.f32 %v1834, %v1838
    %v1840 = vmul.f32 %v1839, 1.442695
    %v1841 = vpow.pop %v1840
    %v1842 = vsel %vm133, %v1841, 0.0
    %1843 = vadd.xlane.f32.xlu0 %v1842
    %v1844 = vpop.xlane.xlu0 %1843
    %v1845 = vrcp.pop %v1844
    %v1846 = vmul.f32 %v1844, %v1845
    %v1847 = vsub.f32 1.0, %v1846
    %v1848 = vmul.f32 %v1845, %v1847
    %v1849 = vadd.f32 %v1845, %v1848
    %vm1850 = vweird.f32 %v1844
    %vm1851 = vweird.f32 %v1845
    %vm1852 = vmor %vm1850, %vm1851
    %v1853 = vsel %vm1852, %v1845, %v1849
    %v1854 = vand.u32 2147483647, %v1844
    %vm1855 = vcmp.eq.f32.partialorder %v1854, 8.507059e+37
    %v1856 = vand.u32 %v1844, 2147483648
    %v1857 = vor.u32 1.1754944e-38, %v1856
    %v1858 = vsel %vm1855, %v1857, %v1853
    %v1859 = vmul.f32 %v1841, %v1858
    %1860 = vst.msk [vmem:[#allocation8 + $0x6] sm:$0x1] %vm133, %v1859
    %v1862 = vsel %vm159, %v1859, 0
    %1864 = vmatpush.msra.mxu0 0.0
    %1865 = vmatpush.msra.mxu0 0.0
    %1866 = vmatpush.msra.mxu0 0.0
    %1867 = vmatpush.msra.mxu0 0.0
    %1868 = vmatpush.msra.mxu0 0.0
    %1869 = vmatpush.msra.mxu0 0.0
    %1870 = vmatpush.msra.mxu0 0.0
    %1871 = vmatpush.msra.mxu0 0.0
    %1872 = vmatpush.msra.mxu0 0.0
    %1873 = vmatpush.msra.mxu0 0.0
    %1874 = vmatpush.msra.mxu0 0.0
    %1875 = vmatpush.msra.mxu0 0.0
    %1876 = vmatpush.msra.mxu0 0.0
    %1877 = vmatpush.msra.mxu0 0.0
    %1878 = vmatpush.msra.mxu0 0.0
    %1879 = vmatpush.msra.mxu0 %v62
    %1880 = vmatmul.f32.gmra.mxu0 %v1862
    %v1881 = vpop.f32.mrf.mxu0
    %v1882 = vadd.f32 0.0, %v1881
    %1883 = vdwg.mxu0
    %1885 = vrot.lane.b32.xlu0 %v1882, 32
    %v1886 = vpop.permute.xlu0 %1885
    %v1888 = vsel %vm98, %v1801, %v1886
    %v1889 = vld [vmem:[%s6] sm:$0xff]
    %v1890 = vld [vmem:[%s6 + $0x8] sm:$0xff]
    %v1891 = vld [vmem:[%s6 + $0x10] sm:$0xff]
    %v1892 = vld [vmem:[%s6 + $0x18] sm:$0xff]
    %v1893 = vld [vmem:[%s6 + $0x20] sm:$0xff]
    %v1894 = vld [vmem:[%s6 + $0x28] sm:$0xff]
    %v1895 = vld [vmem:[%s6 + $0x30] sm:$0xff]
    %v1896 = vld [vmem:[%s6 + $0x38] sm:$0xff]
    %v1897 = vld [vmem:[%s7] sm:$0x1]
    %v1899 = vsel %vm109, %v1888, 0
    %1901 = vmatpush.msra.mxu0 0.0
    %1902 = vmatpush.msra.mxu0 0.0
    %1903 = vmatpush.msra.mxu0 0.0
    %1904 = vmatpush.msra.mxu0 0.0
    %1905 = vmatpush.msra.mxu0 0.0
    %1906 = vmatpush.msra.mxu0 0.0
    %1907 = vmatpush.msra.mxu0 0.0
    %1908 = vmatpush.msra.mxu0 0.0
    %1909 = vmatpush.msra.mxu0 %v1896
    %1910 = vmatpush.msra.mxu0 %v1895
    %1911 = vmatpush.msra.mxu0 %v1894
    %1912 = vmatpush.msra.mxu0 %v1893
    %1913 = vmatpush.msra.mxu0 %v1892
    %1914 = vmatpush.msra.mxu0 %v1891
    %1915 = vmatpush.msra.mxu0 %v1890
    %1916 = vmatpush.msra.mxu0 %v1889
    %1917 = vmatmul.f32.gmra.mxu0 %v1899
    %v1918 = vpop.f32.mrf.mxu0
    %v1919 = vadd.f32 %v1897, %v1918
    %1920 = vdwg.mxu0
    %v1921 = vmax.f32 %v1919, 0.0
    %v1922 = vld [vmem:[%s8] sm:$0xff]
    %v1923 = vld [vmem:[%s8 + $0x8] sm:$0xff]
    %v1924 = vld [vmem:[%s8 + $0x10] sm:$0xff]
    %v1925 = vld [vmem:[%s8 + $0x18] sm:$0xff]
    %v1926 = vld [vmem:[%s10] sm:$0x1]
    %v1928 = vsel %vm98, %v1921, 0
    %1930 = vmatpush.msra.mxu0 0.0
    %1931 = vmatpush.msra.mxu0 0.0
    %1932 = vmatpush.msra.mxu0 0.0
    %1933 = vmatpush.msra.mxu0 0.0
    %1934 = vmatpush.msra.mxu0 0.0
    %1935 = vmatpush.msra.mxu0 0.0
    %1936 = vmatpush.msra.mxu0 0.0
    %1937 = vmatpush.msra.mxu0 0.0
    %1938 = vmatpush.msra.mxu0 0.0
    %1939 = vmatpush.msra.mxu0 0.0
    %1940 = vmatpush.msra.mxu0 0.0
    %1941 = vmatpush.msra.mxu0 0.0
    %1942 = vmatpush.msra.mxu0 %v1925
    %1943 = vmatpush.msra.mxu0 %v1924
    %1944 = vmatpush.msra.mxu0 %v1923
    %1945 = vmatpush.msra.mxu0 %v1922
    %1946 = vmatmul.f32.gmra.mxu0 %v1928
    %v1947 = vpop.f32.mrf.mxu0
    %v1948 = vadd.f32 %v1926, %v1947
    %1949 = vdwg.mxu0
    %v1950 = vld [vmem:[%s9] sm:$0xff]
    %v1951 = vld [vmem:[%s9 + $0x8] sm:$0xff]
    %v1952 = vld [vmem:[%s9 + $0x10] sm:$0xff]
    %v1953 = vld [vmem:[%s9 + $0x18] sm:$0xff]
    %v1954 = vld [vmem:[%s11] sm:$0x1]
    %1955 = vmatpush.msra.mxu0 0.0
    %1956 = vmatpush.msra.mxu0 0.0
    %1957 = vmatpush.msra.mxu0 0.0
    %1958 = vmatpush.msra.mxu0 0.0
    %1959 = vmatpush.msra.mxu0 0.0
    %1960 = vmatpush.msra.mxu0 0.0
    %1961 = vmatpush.msra.mxu0 0.0
    %1962 = vmatpush.msra.mxu0 0.0
    %1963 = vmatpush.msra.mxu0 0.0
    %1964 = vmatpush.msra.mxu0 0.0
    %1965 = vmatpush.msra.mxu0 0.0
    %1966 = vmatpush.msra.mxu0 0.0
    %1967 = vmatpush.msra.mxu0 %v1953
    %1968 = vmatpush.msra.mxu0 %v1952
    %1969 = vmatpush.msra.mxu0 %v1951
    %1970 = vmatpush.msra.mxu0 %v1950
    %1971 = vmatmul.f32.gmra.mxu0 %v1739
    %v1972 = vpop.f32.mrf.mxu0
    %v1973 = vadd.f32 %v1954, %v1972
    %1974 = vdwg.mxu0
    %v1975 = vadd.f32 %v1948, %v1973
    %v1976 = vxor.u32 %v1975, 2147483648
    %v1977 = vmul.f32 %v1976, 1.442695
    %v1978 = vpow.pop %v1977
    %v1979 = vadd.f32 %v1978, 1.0
    %v1980 = vrcp.pop %v1979
    %v1981 = vmul.f32 %v1979, %v1980
    %v1982 = vsub.f32 1.0, %v1981
    %v1983 = vmul.f32 %v1980, %v1982
    %v1984 = vadd.f32 %v1980, %v1983
    %vm1985 = vweird.f32 %v1979
    %vm1986 = vweird.f32 %v1980
    %vm1987 = vmor %vm1985, %vm1986
    %v1988 = vsel %vm1987, %v1980, %v1984
    %v1989 = vand.u32 2147483647, %v1979
    %vm1990 = vcmp.eq.f32.partialorder %v1989, 8.507059e+37
    %v1991 = vand.u32 %v1979, 2147483648
    %v1992 = vor.u32 1.1754944e-38, %v1991
    %v1993 = vsel %vm1990, %v1992, %v1988
    %v1994 = vmul.f32 1.0, %v1993
    %1996 = vrot.lane.b32.xlu0 %v1973, 64
    %v1997 = vpop.permute.xlu0 %1996
    %v1999 = vmul.f32 %v1994, %v1997
    %2001 = vrot.lane.b32.xlu0 %v1999, 64
    %v2002 = vpop.permute.xlu0 %2001
    %v2004 = vadd.f32 %v1948, %v2002
    %v2005 = vtanh.pop %v2004
    %v2006 = vsub.f32 1.0, %v1994
    %2008 = vrot.lane.b32.xlu0 %v2005, 96
    %v2009 = vpop.permute.xlu0 %2008
    %v2011 = vmul.f32 %v2006, %v2009
    %v2012 = vmul.f32 %v1994, %v1730
    %v2013 = vadd.f32 %v2011, %v2012
    %v2014 = vld [vmem:[%s12] sm:$0xff]
    %v2015 = vld [vmem:[%s12 + $0x8] sm:$0xff]
    %v2016 = vld [vmem:[%s12 + $0x10] sm:$0xff]
    %v2017 = vld [vmem:[%s12 + $0x18] sm:$0xff]
    %v2018 = vld [vmem:[%s13] sm:$0x1]
    %2020 = vrot.lane.b32.xlu0 %v2013, 96
    %v2021 = vpop.permute.xlu0 %2020
    %v2022 = vsel %vm98, %v2021, 0
    %2024 = vmatpush.msra.mxu0 0.0
    %2025 = vmatpush.msra.mxu0 0.0
    %2026 = vmatpush.msra.mxu0 0.0
    %2027 = vmatpush.msra.mxu0 0.0
    %2028 = vmatpush.msra.mxu0 0.0
    %2029 = vmatpush.msra.mxu0 0.0
    %2030 = vmatpush.msra.mxu0 0.0
    %2031 = vmatpush.msra.mxu0 0.0
    %2032 = vmatpush.msra.mxu0 0.0
    %2033 = vmatpush.msra.mxu0 0.0
    %2034 = vmatpush.msra.mxu0 0.0
    %2035 = vmatpush.msra.mxu0 0.0
    %2036 = vmatpush.msra.mxu0 %v2017
    %2037 = vmatpush.msra.mxu0 %v2016
    %2038 = vmatpush.msra.mxu0 %v2015
    %2039 = vmatpush.msra.mxu0 %v2014
    %2040 = vmatmul.f32.gmra.mxu0 %v2022
    %v2041 = vpop.f32.mrf.mxu0
    %v2042 = vadd.f32 %v2018, %v2041
    %2043 = vdwg.mxu0
    %v2044 = vsel %vm345, %v2042, -inf
    %2045 = vmax.xlane.f32.xlu0 %v2044
    %v2046 = vpop.xlane.xlu0 %2045
    %v2047 = vsub.f32 %v2042, %v2046
    %v2048 = vmul.f32 %v2047, 1.442695
    %v2049 = vpow.pop %v2048
    %v2050 = vsel %vm345, %v2049, 0.0
    %2051 = vadd.xlane.f32.xlu0 %v2050
    %v2052 = vpop.xlane.xlu0 %2051
    %v2053 = vlog2.pop %v2052
    %v2054 = vmul.f32 %v2053, 0.6931472
    %v2055 = vadd.f32 %v2046, %v2054
    %v2056 = vsub.f32 %v2042, %v2055
    %2057 = vst.msk [vmem:[#allocation4 + $0x6] sm:$0x1] %vm345, %v2056
    %s2058 = sld [smem:[#allocation3 + $0x7]]
    %v2059 = vstv %s2058
    %vm2060 = vcmp.eq.s32.totalorder %v59, %v2059
    %v2061 = vsel %vm2060, 1, 0
    %v2062 = vcvt.s32.f32 %v2061
    %v2064 = vsel %vm69, %v2062, 0
    %2066 = vmatpush.msra.mxu0 0.0
    %2067 = vmatpush.msra.mxu0 0.0
    %2068 = vmatpush.msra.mxu0 0.0
    %2069 = vmatpush.msra.mxu0 0.0
    %2070 = vmatpush.msra.mxu0 0.0
    %2071 = vmatpush.msra.mxu0 0.0
    %2072 = vmatpush.msra.mxu0 0.0
    %2073 = vmatpush.msra.mxu0 0.0
    %2074 = vmatpush.msra.mxu0 0.0
    %2075 = vmatpush.msra.mxu0 0.0
    %2076 = vmatpush.msra.mxu0 0.0
    %2077 = vmatpush.msra.mxu0 0.0
    %2078 = vmatpush.msra.mxu0 0.0
    %2079 = vmatpush.msra.mxu0 0.0
    %2080 = vmatpush.msra.mxu0 %v61
    %2081 = vmatpush.msra.mxu0 %v60
    %2082 = vmatmul.f32.gmra.mxu0 %v2064
    %v2083 = vpop.f32.mrf.mxu0
    %v2084 = vadd.f32 0.0, %v2083
    %2085 = vdwg.mxu0
    %v2086 = vsel %vm98, %v2084, %v2013
    %v2087 = vld [vmem:[%s4] sm:$0xff]
    %v2088 = vld [vmem:[%s4 + $0x8] sm:$0xff]
    %v2089 = vld [vmem:[%s4 + $0x10] sm:$0xff]
    %v2090 = vld [vmem:[%s4 + $0x18] sm:$0xff]
    %v2091 = vld [vmem:[%s4 + $0x20] sm:$0xff]
    %v2092 = vld [vmem:[%s4 + $0x28] sm:$0xff]
    %v2093 = vld [vmem:[%s4 + $0x30] sm:$0xff]
    %v2094 = vld [vmem:[%s4 + $0x38] sm:$0xff]
    %v2095 = vld [vmem:[%s5] sm:$0x1]
    %v2097 = vsel %vm109, %v2086, 0
    %2099 = vmatpush.msra.mxu0 0.0
    %2100 = vmatpush.msra.mxu0 0.0
    %2101 = vmatpush.msra.mxu0 0.0
    %2102 = vmatpush.msra.mxu0 0.0
    %2103 = vmatpush.msra.mxu0 0.0
    %2104 = vmatpush.msra.mxu0 0.0
    %2105 = vmatpush.msra.mxu0 0.0
    %2106 = vmatpush.msra.mxu0 0.0
    %2107 = vmatpush.msra.mxu0 %v2094
    %2108 = vmatpush.msra.mxu0 %v2093
    %2109 = vmatpush.msra.mxu0 %v2092
    %2110 = vmatpush.msra.mxu0 %v2091
    %2111 = vmatpush.msra.mxu0 %v2090
    %2112 = vmatpush.msra.mxu0 %v2089
    %2113 = vmatpush.msra.mxu0 %v2088
    %2114 = vmatpush.msra.mxu0 %v2087
    %2115 = vmatmul.f32.gmra.mxu0 %v2097
    %v2116 = vpop.f32.mrf.mxu0
    %v2117 = vadd.f32 %v2095, %v2116
    %2118 = vdwg.mxu0
    %v2119 = vsel %vm133, %v2117, -inf
    %2120 = vmax.xlane.f32.xlu0 %v2119
    %v2121 = vpop.xlane.xlu0 %2120
    %v2122 = vsub.f32 %v2117, %v2121
    %v2123 = vmul.f32 %v2122, 1.442695
    %v2124 = vpow.pop %v2123
    %v2125 = vsel %vm133, %v2124, 0.0
    %2126 = vadd.xlane.f32.xlu0 %v2125
    %v2127 = vpop.xlane.xlu0 %2126
    %v2128 = vrcp.pop %v2127
    %v2129 = vmul.f32 %v2127, %v2128
    %v2130 = vsub.f32 1.0, %v2129
    %v2131 = vmul.f32 %v2128, %v2130
    %v2132 = vadd.f32 %v2128, %v2131
    %vm2133 = vweird.f32 %v2127
    %vm2134 = vweird.f32 %v2128
    %vm2135 = vmor %vm2133, %vm2134
    %v2136 = vsel %vm2135, %v2128, %v2132
    %v2137 = vand.u32 2147483647, %v2127
    %vm2138 = vcmp.eq.f32.partialorder %v2137, 8.507059e+37
    %v2139 = vand.u32 %v2127, 2147483648
    %v2140 = vor.u32 1.1754944e-38, %v2139
    %v2141 = vsel %vm2138, %v2140, %v2136
    %v2142 = vmul.f32 %v2124, %v2141
    %2143 = vst.msk [vmem:[#allocation8 + $0x7] sm:$0x1] %vm133, %v2142
    %v2145 = vsel %vm159, %v2142, 0
    %2147 = vmatpush.msra.mxu0 0.0
    %2148 = vmatpush.msra.mxu0 0.0
    %2149 = vmatpush.msra.mxu0 0.0
    %2150 = vmatpush.msra.mxu0 0.0
    %2151 = vmatpush.msra.mxu0 0.0
    %2152 = vmatpush.msra.mxu0 0.0
    %2153 = vmatpush.msra.mxu0 0.0
    %2154 = vmatpush.msra.mxu0 0.0
    %2155 = vmatpush.msra.mxu0 0.0
    %2156 = vmatpush.msra.mxu0 0.0
    %2157 = vmatpush.msra.mxu0 0.0
    %2158 = vmatpush.msra.mxu0 0.0
    %2159 = vmatpush.msra.mxu0 0.0
    %2160 = vmatpush.msra.mxu0 0.0
    %2161 = vmatpush.msra.mxu0 0.0
    %2162 = vmatpush.msra.mxu0 %v62
    %2163 = vmatmul.f32.gmra.mxu0 %v2145
    %v2164 = vpop.f32.mrf.mxu0
    %v2165 = vadd.f32 0.0, %v2164
    %2166 = vdwg.mxu0
    %2168 = vrot.lane.b32.xlu0 %v2165, 32
    %v2169 = vpop.permute.xlu0 %2168
    %v2171 = vsel %vm98, %v2084, %v2169
    %v2172 = vld [vmem:[%s6] sm:$0xff]
    %v2173 = vld [vmem:[%s6 + $0x8] sm:$0xff]
    %v2174 = vld [vmem:[%s6 + $0x10] sm:$0xff]
    %v2175 = vld [vmem:[%s6 + $0x18] sm:$0xff]
    %v2176 = vld [vmem:[%s6 + $0x20] sm:$0xff]
    %v2177 = vld [vmem:[%s6 + $0x28] sm:$0xff]
    %v2178 = vld [vmem:[%s6 + $0x30] sm:$0xff]
    %v2179 = vld [vmem:[%s6 + $0x38] sm:$0xff]
    %v2180 = vld [vmem:[%s7] sm:$0x1]
    %v2182 = vsel %vm109, %v2171, 0
    %2184 = vmatpush.msra.mxu0 0.0
    %2185 = vmatpush.msra.mxu0 0.0
    %2186 = vmatpush.msra.mxu0 0.0
    %2187 = vmatpush.msra.mxu0 0.0
    %2188 = vmatpush.msra.mxu0 0.0
    %2189 = vmatpush.msra.mxu0 0.0
    %2190 = vmatpush.msra.mxu0 0.0
    %2191 = vmatpush.msra.mxu0 0.0
    %2192 = vmatpush.msra.mxu0 %v2179
    %2193 = vmatpush.msra.mxu0 %v2178
    %2194 = vmatpush.msra.mxu0 %v2177
    %2195 = vmatpush.msra.mxu0 %v2176
    %2196 = vmatpush.msra.mxu0 %v2175
    %2197 = vmatpush.msra.mxu0 %v2174
    %2198 = vmatpush.msra.mxu0 %v2173
    %2199 = vmatpush.msra.mxu0 %v2172
    %2200 = vmatmul.f32.gmra.mxu0 %v2182
    %v2201 = vpop.f32.mrf.mxu0
    %v2202 = vadd.f32 %v2180, %v2201
    %2203 = vdwg.mxu0
    %v2204 = vmax.f32 %v2202, 0.0
    %v2205 = vld [vmem:[%s8] sm:$0xff]
    %v2206 = vld [vmem:[%s8 + $0x8] sm:$0xff]
    %v2207 = vld [vmem:[%s8 + $0x10] sm:$0xff]
    %v2208 = vld [vmem:[%s8 + $0x18] sm:$0xff]
    %v2209 = vld [vmem:[%s10] sm:$0x1]
    %v2211 = vsel %vm98, %v2204, 0
    %2213 = vmatpush.msra.mxu0 0.0
    %2214 = vmatpush.msra.mxu0 0.0
    %2215 = vmatpush.msra.mxu0 0.0
    %2216 = vmatpush.msra.mxu0 0.0
    %2217 = vmatpush.msra.mxu0 0.0
    %2218 = vmatpush.msra.mxu0 0.0
    %2219 = vmatpush.msra.mxu0 0.0
    %2220 = vmatpush.msra.mxu0 0.0
    %2221 = vmatpush.msra.mxu0 0.0
    %2222 = vmatpush.msra.mxu0 0.0
    %2223 = vmatpush.msra.mxu0 0.0
    %2224 = vmatpush.msra.mxu0 0.0
    %2225 = vmatpush.msra.mxu0 %v2208
    %2226 = vmatpush.msra.mxu0 %v2207
    %2227 = vmatpush.msra.mxu0 %v2206
    %2228 = vmatpush.msra.mxu0 %v2205
    %2229 = vmatmul.f32.gmra.mxu0 %v2211
    %v2230 = vpop.f32.mrf.mxu0
    %v2231 = vadd.f32 %v2209, %v2230
    %2232 = vdwg.mxu0
    %v2233 = vld [vmem:[%s9] sm:$0xff]
    %v2234 = vld [vmem:[%s9 + $0x8] sm:$0xff]
    %v2235 = vld [vmem:[%s9 + $0x10] sm:$0xff]
    %v2236 = vld [vmem:[%s9 + $0x18] sm:$0xff]
    %v2237 = vld [vmem:[%s11] sm:$0x1]
    %2238 = vmatpush.msra.mxu0 0.0
    %2239 = vmatpush.msra.mxu0 0.0
    %2240 = vmatpush.msra.mxu0 0.0
    %2241 = vmatpush.msra.mxu0 0.0
    %2242 = vmatpush.msra.mxu0 0.0
    %2243 = vmatpush.msra.mxu0 0.0
    %2244 = vmatpush.msra.mxu0 0.0
    %2245 = vmatpush.msra.mxu0 0.0
    %2246 = vmatpush.msra.mxu0 0.0
    %2247 = vmatpush.msra.mxu0 0.0
    %2248 = vmatpush.msra.mxu0 0.0
    %2249 = vmatpush.msra.mxu0 0.0
    %2250 = vmatpush.msra.mxu0 %v2236
    %2251 = vmatpush.msra.mxu0 %v2235
    %2252 = vmatpush.msra.mxu0 %v2234
    %2253 = vmatpush.msra.mxu0 %v2233
    %2254 = vmatmul.f32.gmra.mxu0 %v2022
    %v2255 = vpop.f32.mrf.mxu0
    %v2256 = vadd.f32 %v2237, %v2255
    %2257 = vdwg.mxu0
    %v2258 = vadd.f32 %v2231, %v2256
    %v2259 = vxor.u32 %v2258, 2147483648
    %v2260 = vmul.f32 %v2259, 1.442695
    %v2261 = vpow.pop %v2260
    %v2262 = vadd.f32 %v2261, 1.0
    %v2263 = vrcp.pop %v2262
    %v2264 = vmul.f32 %v2262, %v2263
    %v2265 = vsub.f32 1.0, %v2264
    %v2266 = vmul.f32 %v2263, %v2265
    %v2267 = vadd.f32 %v2263, %v2266
    %vm2268 = vweird.f32 %v2262
    %vm2269 = vweird.f32 %v2263
    %vm2270 = vmor %vm2268, %vm2269
    %v2271 = vsel %vm2270, %v2263, %v2267
    %v2272 = vand.u32 2147483647, %v2262
    %vm2273 = vcmp.eq.f32.partialorder %v2272, 8.507059e+37
    %v2274 = vand.u32 %v2262, 2147483648
    %v2275 = vor.u32 1.1754944e-38, %v2274
    %v2276 = vsel %vm2273, %v2275, %v2271
    %v2277 = vmul.f32 1.0, %v2276
    %2279 = vrot.lane.b32.xlu0 %v2256, 64
    %v2280 = vpop.permute.xlu0 %2279
    %v2282 = vmul.f32 %v2277, %v2280
    %2284 = vrot.lane.b32.xlu0 %v2282, 64
    %v2285 = vpop.permute.xlu0 %2284
    %v2287 = vadd.f32 %v2231, %v2285
    %v2288 = vtanh.pop %v2287
    %v2289 = vsub.f32 1.0, %v2277
    %2291 = vrot.lane.b32.xlu0 %v2288, 96
    %v2292 = vpop.permute.xlu0 %2291
    %v2294 = vmul.f32 %v2289, %v2292
    %v2295 = vmul.f32 %v2277, %v2013
    %v2296 = vadd.f32 %v2294, %v2295
    %v2297 = vld [vmem:[%s12] sm:$0xff]
    %v2298 = vld [vmem:[%s12 + $0x8] sm:$0xff]
    %v2299 = vld [vmem:[%s12 + $0x10] sm:$0xff]
    %v2300 = vld [vmem:[%s12 + $0x18] sm:$0xff]
    %v2301 = vld [vmem:[%s13] sm:$0x1]
    %2303 = vrot.lane.b32.xlu0 %v2296, 96
    %v2304 = vpop.permute.xlu0 %2303
    %v2305 = vsel %vm98, %v2304, 0
    %2307 = vmatpush.msra.mxu0 0.0
    %2308 = vmatpush.msra.mxu0 0.0
    %2309 = vmatpush.msra.mxu0 0.0
    %2310 = vmatpush.msra.mxu0 0.0
    %2311 = vmatpush.msra.mxu0 0.0
    %2312 = vmatpush.msra.mxu0 0.0
    %2313 = vmatpush.msra.mxu0 0.0
    %2314 = vmatpush.msra.mxu0 0.0
    %2315 = vmatpush.msra.mxu0 0.0
    %2316 = vmatpush.msra.mxu0 0.0
    %2317 = vmatpush.msra.mxu0 0.0
    %2318 = vmatpush.msra.mxu0 0.0
    %2319 = vmatpush.msra.mxu0 %v2300
    %2320 = vmatpush.msra.mxu0 %v2299
    %2321 = vmatpush.msra.mxu0 %v2298
    %2322 = vmatpush.msra.mxu0 %v2297
    %2323 = vmatmul.f32.gmra.mxu0 %v2305
    %v2324 = vpop.f32.mrf.mxu0
    %v2325 = vadd.f32 %v2301, %v2324
    %2326 = vdwg.mxu0
    %v2327 = vsel %vm345, %v2325, -inf
    %2328 = vmax.xlane.f32.xlu0 %v2327
    %v2329 = vpop.xlane.xlu0 %2328
    %v2330 = vsub.f32 %v2325, %v2329
    %v2331 = vmul.f32 %v2330, 1.442695
    %v2332 = vpow.pop %v2331
    %v2333 = vsel %vm345, %v2332, 0.0
    %2334 = vadd.xlane.f32.xlu0 %v2333
    %v2335 = vpop.xlane.xlu0 %2334
    %v2336 = vlog2.pop %v2335
    %v2337 = vmul.f32 %v2336, 0.6931472
    %v2338 = vadd.f32 %v2329, %v2337
    %v2339 = vsub.f32 %v2325, %v2338
    %2340 = vst.msk [vmem:[#allocation4 + $0x7] sm:$0x1] %vm345, %v2339
    %vm2342 = vcmask 253952
    %2343 = vst.msk [vmem:[#allocation6] sm:$0x1] %vm2342, %v2304
    // Predicated region
    $region54: #{attn_decoder_forward.1} parent=1 // pred_check
      _
    $region55: #{attn_decoder_forward.1} parent=1 // pred_check_branch
      %2345 = sbr.rel (0) target = $region57
    $region56: #{attn_decoder_forward.1} parent=1 // pred_region
      %2347 = vsyncadd [#allocation5], 0
      %s2349 = sshll.u32 [#allocation4], 4
      %s2350 = int_to_ptr.vmem [resolvable:$true] %s2349
      %s2351 = sshll.u32 %s14, 4
      %s2352 = int_to_ptr.hbm [resolvable:$true] %s2351
      %2354 = dma.vmem_to_hbm [thread:$0]  %s2350, 128, %s2352, [#allocation5]
    $region57: #{attn_decoder_forward.1} parent=1 // pred_fallthru
      _
    // Predicated region
    $region58: #{attn_decoder_forward.1} parent=1 // pred_check
      _
    $region59: #{attn_decoder_forward.1} parent=1 // pred_check_branch
      %2356 = sbr.rel (0) target = $region61
    $region60: #{attn_decoder_forward.1} parent=1 // pred_region
      %2358 = vsyncadd [#allocation7], 0
      %s2360 = sshll.u32 [#allocation6], 4
      %s2361 = int_to_ptr.vmem [resolvable:$true] %s2360
      %s2362 = sshll.u32 %s15, 4
      %s2363 = int_to_ptr.hbm [resolvable:$true] %s2362
      %2365 = dma.vmem_to_hbm [thread:$0]  %s2361, 16, %s2363, [#allocation7]
    $region61: #{attn_decoder_forward.1} parent=1 // pred_fallthru
      _
    // Predicated region
    $region62: #{attn_decoder_forward.1} parent=1 // pred_check
      _
    $region63: #{attn_decoder_forward.1} parent=1 // pred_check_branch
      %2367 = sbr.rel (0) target = $region65
    $region64: #{attn_decoder_forward.1} parent=1 // pred_region
      %2369 = vsyncadd [#allocation7], 0
      %s2371 = sshll.u32 [#allocation8], 4
      %s2372 = int_to_ptr.vmem [resolvable:$true] %s2371
      %s2373 = sshll.u32 %s16, 4
      %s2374 = int_to_ptr.hbm [resolvable:$true] %s2373
      %2376 = dma.vmem_to_hbm [thread:$0]  %s2372, 128, %s2374, [#allocation7]
    $region65: #{attn_decoder_forward.1} parent=1 // pred_fallthru
      _
    // Predicated region
    $region66: #{attn_decoder_forward.1} parent=1 // pred_check
      _
    $region67: #{attn_decoder_forward.1} parent=1 // pred_check_branch
      %2378 = sbr.rel (0) target = $region69
    $region68: #{attn_decoder_forward.1} parent=1 // pred_region
      %2380 = dma.done [#allocation5], 128
    $region69: #{attn_decoder_forward.1} parent=1 // pred_fallthru
      _
    // Predicated region
    $region70: #{attn_decoder_forward.1} parent=1 // pred_check
      _
    $region71: #{attn_decoder_forward.1} parent=1 // pred_check_branch
      %2382 = sbr.rel (0) target = $region73
    $region72: #{attn_decoder_forward.1} parent=1 // pred_region
      %2384 = dma.done [#allocation7], 16
    $region73: #{attn_decoder_forward.1} parent=1 // pred_fallthru
      _
    // Predicated region
    $region74: #{attn_decoder_forward.1} parent=1 // pred_check
      _
    $region75: #{attn_decoder_forward.1} parent=1 // pred_check_branch
      %2386 = sbr.rel (0) target = $region77
    $region76: #{attn_decoder_forward.1} parent=1 // pred_region
      %2388 = dma.done [#allocation7], 128
    $region77: #{attn_decoder_forward.1} parent=1 // pred_fallthru
      _
    %2389 = vsyncpa [#allocation5], 1
    %2390 = vsyncpa [#allocation7], 1

</llo_original>
